<compile_context>
chip_gen: v5e
topology: v5e:2x2
jax: 0.10.0
libtpu: 0.0.40
codegen_flags: <defaults>
</compile_context>

<pallas_src>
import jax
import jax.numpy as jnp
from jax.experimental import pallas as pl
from jax.experimental.pallas import tpu as pltpu

HIDDEN_DIM = 500
OUTPUT_DIM = 1
_MIB = 1024 * 1024


def _round_up(n, m):
    return ((n + m - 1) // m) * m


def _sigmoid_eup(z):
    # exp on the EUP, approx reciprocal on the EUP: leaves the VPU slot free.
    return pl.reciprocal(1.0 + jnp.exp(-z), approx=True)


def _mlp_kernel(x_ref, w1_ref, b1_ref, w2t_ref, b2_ref, out_ref, a1_ref):
    # x_ref:   [TILE_B, D]     f32 (streamed; cast to bf16 here, not in the wrapper)
    # w1_ref:  [D, HID]        bf16 (resident, single-buffered)
    # b1_ref:  [1, HID]        f32  (resident)
    # w2t_ref: [OUT, HID]      f32  (resident, transposed)
    # b2_ref:  [OUT]           f32  (SMEM scalars)
    # out_ref: [TILE_B, OUT]   f32
    # a1_ref:  [TILE_B, HID]   f32 (or bf16 if requested)

    # Layer 1: bf16 MXU matmul with f32 accumulation; bias + sigmoid in f32.
    x_bf16 = x_ref[...].astype(jnp.bfloat16)
    z1 = jnp.dot(x_bf16, w1_ref[...], preferred_element_type=jnp.float32)
    a1 = _sigmoid_eup(z1 + b1_ref[...])
    a1_ref[...] = a1.astype(a1_ref.dtype)

    # Layer 2: OUT is tiny (1) -> VPU multiply + row-reduce per output column.
    cols = []
    for o in range(out_ref.shape[-1]):  # static trip count
        z2 = jnp.sum(a1 * w2t_ref[o:o + 1, :], axis=-1, keepdims=True) + b2_ref[o]
        cols.append(_sigmoid_eup(z2))
    out_ref[...] = cols[0] if len(cols) == 1 else jnp.concatenate(cols, axis=-1)


def prepare_params(w1, b1, w2, b2):
    """One-time weight prep (cache the result across calls).

    w1: [D, HID], b1: [HID], w2: [HID, OUT], b2: [OUT]
    (weights stored transposed relative to torch.nn.Linear).
    """
    hid = w1.shape[1]
    out_dim = w2.shape[1]
    w1_k = w1.astype(jnp.bfloat16)                    # [D, HID]   MXU RHS
    b1_k = b1.astype(jnp.float32).reshape(1, hid)     # [1, HID]
    w2t_k = jnp.transpose(w2).astype(jnp.float32)     # [OUT, HID]
    b2_k = b2.astype(jnp.float32).reshape(out_dim)    # [OUT]      SMEM
    return w1_k, b1_k, w2t_k, b2_k


def _plan_tiles(b, d, hid, out_dim, tile_b):
    """Pick a batch tile + VMEM limit that fit comfortably on v5e/v6e/v7x."""
    # Resident (single-buffered) weights.
    resident = d * hid * 2 + hid * 4 + out_dim * hid * 4

    def stream(tb):  # double-buffered x / a1 / out blocks
        return 2 * tb * (d * 4 + hid * 4 + out_dim * 4)

    tb = b if b <= tile_b else _round_up(tile_b, 8)
    # v7x megacore + pipelining: want >=2 grid steps when the batch is big enough.
    if b >= 128 and pl.cdiv(b, tb) < 2:
        tb = max(8, _round_up(pl.cdiv(b, 2), 8))
    # Shrink the tile until everything fits well below v7x's 64 MiB physical VMEM.
    budget = 48 * _MIB
    headroom = 4 * _MIB
    while tb > 8 and resident + stream(tb) + headroom > budget:
        tb = max(8, _round_up(tb // 2, 8))
    vmem_limit = int(min(budget,
                         max(32 * _MIB, 1.2 * (resident + stream(tb)) + headroom)))
    return tb, vmem_limit


def deep_logistic_regression(x, prepared_params, *, tile_b=512,
                             a1_dtype=jnp.float32):
    """x: [B, ...] (flattened from dim 1). Returns (out [B, OUT], a1 [B, HID]).

    Pass a1_dtype=jnp.bfloat16 to halve the a1 writeback traffic (layer-2 math
    stays f32 from the register value); default keeps torch's f32 semantics.
    """
    w1_k, b1_k, w2t_k, b2_k = prepared_params
    b = x.shape[0]
    x2d = x.reshape(b, -1)  # no dtype cast here: cast to bf16 happens in-kernel
    d = x2d.shape[1]
    hid = w1_k.shape[1]
    out_dim = w2t_k.shape[0]
    assert d == w1_k.shape[0], "input_dim mismatch with prepared w1"

    tb, vmem_limit = _plan_tiles(b, d, hid, out_dim, tile_b)
    b_pad = _round_up(b, tb)
    if b_pad != b:
        x2d = jnp.zeros((b_pad, d), x2d.dtype).at[:b].set(x2d)

    grid = (b_pad // tb,)

    def _call(single_buffer_weights):
        w_kw = ({"pipeline_mode": pl.Buffered(1)}
                if single_buffer_weights else {})
        return pl.pallas_call(
            _mlp_kernel,
            out_shape=(
                jax.ShapeDtypeStruct((b_pad, out_dim), jnp.float32),
                jax.ShapeDtypeStruct((b_pad, hid), a1_dtype),
            ),
            grid=grid,
            in_specs=[
                pl.BlockSpec((tb, d), lambda i: (i, 0)),                 # x streamed
                pl.BlockSpec((d, hid), lambda i: (0, 0), **w_kw),        # w1 resident
                pl.BlockSpec((1, hid), lambda i: (0, 0), **w_kw),        # b1 resident
                pl.BlockSpec((out_dim, hid), lambda i: (0, 0), **w_kw),  # w2^T resident
                pl.BlockSpec(memory_space=pltpu.MemorySpace.SMEM),       # b2 scalars
            ],
            out_specs=(
                pl.BlockSpec((tb, out_dim), lambda i: (i, 0)),
                pl.BlockSpec((tb, hid), lambda i: (i, 0)),
            ),
            compiler_params=pltpu.CompilerParams(
                dimension_semantics=("parallel",),   # megacore split on v7x
                vmem_limit_bytes=vmem_limit,         # computed, never full physical
            ),
        )(x2d, w1_k, b1_k, w2t_k, b2_k)

    try:
        out_p, a1_p = _call(True)
    except Exception:
        # Fallback if single-buffered resident specs are rejected by this jax build.
        out_p, a1_p = _call(False)

    if b_pad != b:
        out_p = out_p[:b]
        a1_p = a1_p[:b]
    return out_p, a1_p


def init_params(key, input_dim, hidden_dim=HIDDEN_DIM, output_dim=OUTPUT_DIM,
                dtype=jnp.float32):
    """torch.nn.Linear-style U(-1/sqrt(fan_in), 1/sqrt(fan_in)); weights pre-transposed."""
    k1, k2, k3, k4 = jax.random.split(key, 4)
    bound1 = 1.0 / (input_dim ** 0.5)
    bound2 = 1.0 / (hidden_dim ** 0.5)
    w1 = jax.random.uniform(k1, (input_dim, hidden_dim), dtype, -bound1, bound1)
    b1 = jax.random.uniform(k2, (hidden_dim,), dtype, -bound1, bound1)
    w2 = jax.random.uniform(k3, (hidden_dim, output_dim), dtype, -bound2, bound2)
    b2 = jax.random.uniform(k4, (output_dim,), dtype, -bound2, bound2)
    return w1, b1, w2, b2


if __name__ == "__main__":
    key = jax.random.PRNGKey(0)
    k_x, k_p = jax.random.split(key)

    # Small example input: NCHW [2, 4, 16, 16] -> flattened input_dim = 1024.
    B, C, H, W = 2, 4, 16, 16
    input_dim = C * H * W
    x = jax.random.normal(k_x, (B, C, H, W), dtype=jnp.float32)

    w1, b1, w2, b2 = init_params(k_p, input_dim)
    prepared = prepare_params(w1, b1, w2, b2)   # one-time weight prep (cacheable)

    out, a1 = deep_logistic_regression(x, prepared)
    out = jax.block_until_ready(out)
    a1 = jax.block_until_ready(a1)

    # Pure-JAX reference with the same bf16 rounding of x/w1 as the kernel's MXU
    # path (f32 accumulate).  Tolerance covers the EUP approx-reciprocal sigmoid.
    x2d = x.reshape(B, -1)
    xb = x2d.astype(jnp.bfloat16).astype(jnp.float32)
    w1b = w1.astype(jnp.bfloat16).astype(jnp.float32)
    a1_ref = jax.nn.sigmoid(
        jnp.dot(xb, w1b, precision=jax.lax.Precision.HIGHEST) + b1)
    out_ref = jax.nn.sigmoid(
        jnp.dot(a1_ref, w2, precision=jax.lax.Precision.HIGHEST) + b2)

    assert out.shape == (B, OUTPUT_DIM) and a1.shape == (B, HIDDEN_DIM)
    assert out.dtype == jnp.float32 and a1.dtype == jnp.float32
    assert jnp.allclose(a1, a1_ref, atol=2e-3, rtol=2e-3)
    assert jnp.allclose(out, out_ref, atol=2e-3, rtol=2e-3)

    print("KERNEL_OK")
</pallas_src>

<mosaic_0001>
module attributes {stable_mosaic.version = 11 : i64} {
  func.func @_mlp_kernel(%arg0: i32, %arg1: memref<2x1024xf32, #tpu.memory_space<vmem>>, %arg2: memref<1024x500xbf16, #tpu.memory_space<vmem>>, %arg3: memref<1x500xf32, #tpu.memory_space<vmem>>, %arg4: memref<1x500xf32, #tpu.memory_space<vmem>>, %arg5: memref<1xf32, #tpu.memory_space<smem>>, %arg6: memref<2x1xf32, #tpu.memory_space<vmem>>, %arg7: memref<2x500xf32, #tpu.memory_space<vmem>>) attributes {dimension_semantics = [#tpu.dimension_semantics<parallel>], iteration_bounds = array<i64: 1>, scalar_prefetch = 0 : i64, scratch_operands = 0 : i64, tpu.core_type = #tpu.core_type<tc>, window_params = [{transform_indices = @transform_0, window_bounds = array<i64: 2, 1024>}, {pipeline_mode = #tpu.pipeline_mode<synchronous>, transform_indices = @transform_1, window_bounds = array<i64: 1024, 500>}, {pipeline_mode = #tpu.pipeline_mode<synchronous>, transform_indices = @transform_2, window_bounds = array<i64: 1, 500>}, {pipeline_mode = #tpu.pipeline_mode<synchronous>, transform_indices = @transform_3, window_bounds = array<i64: 1, 500>}, {transform_indices = @transform_4, window_bounds = array<i64: 1>}, {transform_indices = @transform_5, window_bounds = array<i64: 2, 1>}, {transform_indices = @transform_6, window_bounds = array<i64: 2, 500>}]} {
    %c0 = arith.constant 0 : index
    %c0_0 = arith.constant 0 : index
    %0 = vector.load %arg1[%c0, %c0_0] : memref<2x1024xf32, #tpu.memory_space<vmem>>, vector<2x1024xf32>
    %1 = arith.truncf %0 : vector<2x1024xf32> to vector<2x1024xbf16>
    %c0_1 = arith.constant 0 : index
    %c0_2 = arith.constant 0 : index
    %2 = vector.load %arg2[%c0_1, %c0_2] : memref<1024x500xbf16, #tpu.memory_space<vmem>>, vector<1024x500xbf16>
    %cst = arith.constant dense<0.000000e+00> : vector<2x500xf32>
    %3 = tpu.matmul %1, %2, %cst {dimension_numbers = #tpu.dot_dimension_numbers<[1], [0], [0], [1], [0, 0, 1, 1], [], []>} : vector<2x1024xbf16>, vector<1024x500xbf16>, vector<2x500xf32> -> vector<2x500xf32>
    %c0_3 = arith.constant 0 : index
    %c0_4 = arith.constant 0 : index
    %4 = vector.load %arg3[%c0_3, %c0_4] : memref<1x500xf32, #tpu.memory_space<vmem>>, vector<1x500xf32>
    %5 = vector.broadcast %4 : vector<1x500xf32> to vector<2x500xf32>
    %6 = arith.addf %3, %5 : vector<2x500xf32>
    %cst_5 = arith.constant 0.000000e+00 : f32
    %7 = vector.broadcast %cst_5 : f32 to vector<2x500xf32>
    %8 = arith.subf %7, %6 : vector<2x500xf32>
    %9 = math.exp %8 : vector<2x500xf32>
    %cst_6 = arith.constant 1.000000e+00 : f32
    %10 = vector.broadcast %cst_6 : f32 to vector<2x500xf32>
    %11 = arith.addf %10, %9 : vector<2x500xf32>
    %12 = tpu.reciprocal %11 {approx = true} : vector<2x500xf32> -> vector<2x500xf32>
    %c0_7 = arith.constant 0 : index
    %c0_8 = arith.constant 0 : index
    %13 = vector.load %arg7[%c0_7, %c0_8] : memref<2x500xf32, #tpu.memory_space<vmem>>, vector<2x500xf32>
    tpu.vector_store %arg7[%c0_7, %c0_8], %12 {strides = array<i32>} : memref<2x500xf32, #tpu.memory_space<vmem>>, vector<2x500xf32>,
    %c0_9 = arith.constant 0 : index
    %c0_10 = arith.constant 0 : index
    %14 = vector.load %arg4[%c0_9, %c0_10] : memref<1x500xf32, #tpu.memory_space<vmem>>, vector<1x500xf32>
    %15 = vector.broadcast %14 : vector<1x500xf32> to vector<2x500xf32>
    %16 = arith.mulf %12, %15 : vector<2x500xf32>
    %cst_11 = arith.constant dense<0.000000e+00> : vector<2xf32>
    %17 = vector.multi_reduction <add>, %16, %cst_11 [1] : vector<2x500xf32> to vector<2xf32>
    %18 = vector.shape_cast %17 : vector<2xf32> to vector<2x1xf32>
    %c0_12 = arith.constant 0 : index
    %19 = memref.load %arg5[%c0_12] : memref<1xf32, #tpu.memory_space<smem>>
    %20 = vector.broadcast %19 : f32 to vector<2x1xf32>
    %21 = arith.addf %18, %20 : vector<2x1xf32>
    %cst_13 = arith.constant 0.000000e+00 : f32
    %22 = vector.broadcast %cst_13 : f32 to vector<2x1xf32>
    %23 = arith.subf %22, %21 : vector<2x1xf32>
    %24 = math.exp %23 : vector<2x1xf32>
    %cst_14 = arith.constant 1.000000e+00 : f32
    %25 = vector.broadcast %cst_14 : f32 to vector<2x1xf32>
    %26 = arith.addf %25, %24 : vector<2x1xf32>
    %27 = tpu.reciprocal %26 {approx = true} : vector<2x1xf32> -> vector<2x1xf32>
    %c0_15 = arith.constant 0 : index
    %c0_16 = arith.constant 0 : index
    %28 = vector.load %arg6[%c0_15, %c0_16] : memref<2x1xf32, #tpu.memory_space<vmem>>, vector<2x1xf32>
    tpu.vector_store %arg6[%c0_15, %c0_16], %27 {strides = array<i32>} : memref<2x1xf32, #tpu.memory_space<vmem>>, vector<2x1xf32>,
    return
  }
  func.func @transform_0(%arg0: i32) -> (i32, i32) {
    %c0_i32 = arith.constant 0 : i32
    %c0_i32_0 = arith.constant 0 : i32
    return %arg0, %c0_i32 : i32, i32
  }
  func.func @transform_1(%arg0: i32) -> (i32, i32) {
    %c0_i32 = arith.constant 0 : i32
    %c0_i32_0 = arith.constant 0 : i32
    %c0_i32_1 = arith.constant 0 : i32
    return %c0_i32, %c0_i32_0 : i32, i32
  }
  func.func @transform_2(%arg0: i32) -> (i32, i32) {
    %c0_i32 = arith.constant 0 : i32
    %c0_i32_0 = arith.constant 0 : i32
    %c0_i32_1 = arith.constant 0 : i32
    return %c0_i32, %c0_i32_0 : i32, i32
  }
  func.func @transform_3(%arg0: i32) -> (i32, i32) {
    %c0_i32 = arith.constant 0 : i32
    %c0_i32_0 = arith.constant 0 : i32
    %c0_i32_1 = arith.constant 0 : i32
    return %c0_i32, %c0_i32_0 : i32, i32
  }
  func.func @transform_4(%arg0: i32) -> i32 {
    %c0_i32 = arith.constant 0 : i32
    %c0_i32_0 = arith.constant 0 : i32
    return %c0_i32 : i32
  }
  func.func @transform_5(%arg0: i32) -> (i32, i32) {
    %c0_i32 = arith.constant 0 : i32
    %c0_i32_0 = arith.constant 0 : i32
    return %arg0, %c0_i32 : i32, i32
  }
  func.func @transform_6(%arg0: i32) -> (i32, i32) {
    %c0_i32 = arith.constant 0 : i32
    %c0_i32_0 = arith.constant 0 : i32
    return %arg0, %c0_i32 : i32, i32
  }
}

module attributes {stable_mosaic.version = 11 : i64} {
  func.func @_mlp_kernel(%arg0: i32, %arg1: memref<2x1024xf32, #tpu.memory_space<vmem>>, %arg2: memref<1024x500xbf16, #tpu.memory_space<vmem>>, %arg3: memref<1x500xf32, #tpu.memory_space<vmem>>, %arg4: memref<1x500xf32, #tpu.memory_space<vmem>>, %arg5: memref<1xf32, #tpu.memory_space<smem>>, %arg6: memref<2x1xf32, #tpu.memory_space<vmem>>, %arg7: memref<2x500xf32, #tpu.memory_space<vmem>>) attributes {dimension_semantics = [#tpu.dimension_semantics<parallel>], iteration_bounds = array<i64: 1>, scalar_prefetch = 0 : i64, scratch_operands = 0 : i64, tpu.core_type = #tpu.core_type<tc>, window_params = [{transform_indices = @transform_0, window_bounds = array<i64: 2, 1024>}, {pipeline_mode = #tpu.pipeline_mode<synchronous>, transform_indices = @transform_1, window_bounds = array<i64: 1024, 500>}, {pipeline_mode = #tpu.pipeline_mode<synchronous>, transform_indices = @transform_2, window_bounds = array<i64: 1, 500>}, {pipeline_mode = #tpu.pipeline_mode<synchronous>, transform_indices = @transform_3, window_bounds = array<i64: 1, 500>}, {transform_indices = @transform_4, window_bounds = array<i64: 1>}, {transform_indices = @transform_5, window_bounds = array<i64: 2, 1>}, {transform_indices = @transform_6, window_bounds = array<i64: 2, 500>}]} {
    %c0 = arith.constant 0 : index
    %c0_0 = arith.constant 0 : index
    %0 = vector.load %arg1[%c0, %c0_0] : memref<2x1024xf32, #tpu.memory_space<vmem>>, vector<2x1024xf32>
    %1 = arith.truncf %0 : vector<2x1024xf32> to vector<2x1024xbf16>
    %c0_1 = arith.constant 0 : index
    %c0_2 = arith.constant 0 : index
    %2 = vector.load %arg2[%c0_1, %c0_2] : memref<1024x500xbf16, #tpu.memory_space<vmem>>, vector<1024x500xbf16>
    %cst = arith.constant dense<0.000000e+00> : vector<2x500xf32>
    %3 = tpu.matmul %1, %2, %cst {dimension_numbers = #tpu.dot_dimension_numbers<[1], [0], [0], [1], [0, 0, 1, 1], [], []>} : vector<2x1024xbf16>, vector<1024x500xbf16>, vector<2x500xf32> -> vector<2x500xf32>
    %c0_3 = arith.constant 0 : index
    %c0_4 = arith.constant 0 : index
    %4 = vector.load %arg3[%c0_3, %c0_4] : memref<1x500xf32, #tpu.memory_space<vmem>>, vector<1x500xf32>
    %5 = vector.broadcast %4 : vector<1x500xf32> to vector<2x500xf32>
    %6 = arith.addf %3, %5 : vector<2x500xf32>
    %cst_5 = arith.constant 0.000000e+00 : f32
    %7 = vector.broadcast %cst_5 : f32 to vector<2x500xf32>
    %8 = arith.subf %7, %6 : vector<2x500xf32>
    %9 = math.exp %8 : vector<2x500xf32>
    %cst_6 = arith.constant 1.000000e+00 : f32
    %10 = vector.broadcast %cst_6 : f32 to vector<2x500xf32>
    %11 = arith.addf %10, %9 : vector<2x500xf32>
    %12 = tpu.reciprocal %11 {approx = true} : vector<2x500xf32> -> vector<2x500xf32>
    %c0_7 = arith.constant 0 : index
    %c0_8 = arith.constant 0 : index
    %13 = vector.load %arg7[%c0_7, %c0_8] : memref<2x500xf32, #tpu.memory_space<vmem>>, vector<2x500xf32>
    tpu.vector_store %arg7[%c0_7, %c0_8], %12 {strides = array<i32>} : memref<2x500xf32, #tpu.memory_space<vmem>>, vector<2x500xf32>,
    %c0_9 = arith.constant 0 : index
    %c0_10 = arith.constant 0 : index
    %14 = vector.load %arg4[%c0_9, %c0_10] : memref<1x500xf32, #tpu.memory_space<vmem>>, vector<1x500xf32>
    %15 = vector.broadcast %14 : vector<1x500xf32> to vector<2x500xf32>
    %16 = arith.mulf %12, %15 : vector<2x500xf32>
    %cst_11 = arith.constant dense<0.000000e+00> : vector<2xf32>
    %17 = vector.multi_reduction <add>, %16, %cst_11 [1] : vector<2x500xf32> to vector<2xf32>
    %18 = vector.shape_cast %17 : vector<2xf32> to vector<2x1xf32>
    %c0_12 = arith.constant 0 : index
    %19 = memref.load %arg5[%c0_12] : memref<1xf32, #tpu.memory_space<smem>>
    %20 = vector.broadcast %19 : f32 to vector<2x1xf32>
    %21 = arith.addf %18, %20 : vector<2x1xf32>
    %cst_13 = arith.constant 0.000000e+00 : f32
    %22 = vector.broadcast %cst_13 : f32 to vector<2x1xf32>
    %23 = arith.subf %22, %21 : vector<2x1xf32>
    %24 = math.exp %23 : vector<2x1xf32>
    %cst_14 = arith.constant 1.000000e+00 : f32
    %25 = vector.broadcast %cst_14 : f32 to vector<2x1xf32>
    %26 = arith.addf %25, %24 : vector<2x1xf32>
    %27 = tpu.reciprocal %26 {approx = true} : vector<2x1xf32> -> vector<2x1xf32>
    %c0_15 = arith.constant 0 : index
    %c0_16 = arith.constant 0 : index
    %28 = vector.load %arg6[%c0_15, %c0_16] : memref<2x1xf32, #tpu.memory_space<vmem>>, vector<2x1xf32>
    tpu.vector_store %arg6[%c0_15, %c0_16], %27 {strides = array<i32>} : memref<2x1xf32, #tpu.memory_space<vmem>>, vector<2x1xf32>,
    return
  }
  func.func @transform_0(%arg0: i32) -> (i32, i32) {
    %c0_i32 = arith.constant 0 : i32
    %c0_i32_0 = arith.constant 0 : i32
    return %arg0, %c0_i32 : i32, i32
  }
  func.func @transform_1(%arg0: i32) -> (i32, i32) {
    %c0_i32 = arith.constant 0 : i32
    %c0_i32_0 = arith.constant 0 : i32
    %c0_i32_1 = arith.constant 0 : i32
    return %c0_i32, %c0_i32_0 : i32, i32
  }
  func.func @transform_2(%arg0: i32) -> (i32, i32) {
    %c0_i32 = arith.constant 0 : i32
    %c0_i32_0 = arith.constant 0 : i32
    %c0_i32_1 = arith.constant 0 : i32
    return %c0_i32, %c0_i32_0 : i32, i32
  }
  func.func @transform_3(%arg0: i32) -> (i32, i32) {
    %c0_i32 = arith.constant 0 : i32
    %c0_i32_0 = arith.constant 0 : i32
    %c0_i32_1 = arith.constant 0 : i32
    return %c0_i32, %c0_i32_0 : i32, i32
  }
  func.func @transform_4(%arg0: i32) -> i32 {
    %c0_i32 = arith.constant 0 : i32
    %c0_i32_0 = arith.constant 0 : i32
    return %c0_i32 : i32
  }
  func.func @transform_5(%arg0: i32) -> (i32, i32) {
    %c0_i32 = arith.constant 0 : i32
    %c0_i32_0 = arith.constant 0 : i32
    return %arg0, %c0_i32 : i32, i32
  }
  func.func @transform_6(%arg0: i32) -> (i32, i32) {
    %c0_i32 = arith.constant 0 : i32
    %c0_i32_0 = arith.constant 0 : i32
    return %arg0, %c0_i32 : i32, i32
  }
}

</mosaic_0001>

<llo_original>
// kernel: tpu_custom_call.1
$region0: #{tpu_custom_call.1}
  #allocation0 [shape = 'u32[]', space=smem, size = 0x4, offset = 0x4, fixed_abs, tag = 'smem constant byte address 0x4 - core index']
  #allocation1 [shape = 'u32[72,128]{1,0:T(1,128)}', space=vmem, size = 0x9000, scoped, tag = 'internal scratch']
  #allocation2 [shape = 'f32[1]{0:T(128)S(6)}', space=smem, size = 0x200, scoped, tag = 'scoped memory for tpu_custom_call.1']
  %s0 = inlined_call_operand.vmem [shape: f32[2,1024], index: 0, kind: input, shape index: {}]
  %s1 = inlined_call_operand.vmem [shape: bf16[1024,500], index: 1, kind: input, shape index: {}]
  %s2 = inlined_call_operand.vmem [shape: f32[1,500], index: 2, kind: input, shape index: {}]
  %s3 = inlined_call_operand.vmem [shape: f32[1,500], index: 3, kind: input, shape index: {}]
  %s4 = inlined_call_operand.<no memory space> [shape: f32[1], index: 4, kind: input, shape index: {}]
  %s5 = inlined_call_operand.vmem [shape: f32[2,1], index: 5, kind: output, shape index: {0}]
  %s6 = inlined_call_operand.hbm [shape: f32[2,500], index: 6, kind: output, shape index: {1}]
  %7 = xla_tuple %s5, %s6
  %s8 = sld [smem:[#allocation0]]
  $region38: #{tpu_custom_call.1} parent=0
    _
  %s10 = ssub.s32 1, %s8
  %s11 = scalar_select 0, %s10, %s8
  %12 = sst [smem:[#allocation2]] %s4
  $region1: #{tpu_custom_call.1} parent=0
    #allocation3 [shape = 'u8[4096]{0}', space=vmem, size = 0x1000, scoped, tag = 'output window, operand 1, single buffered']
    #allocation4 [shape = 's32[1]{0}', space=sflag, size = 0x4, scoped, tag = 'scoped memory for tpu_custom_call.1']
    %13 = vsyncpa [#allocation4], 0
    // Predicated region
    $region2: #{tpu_custom_call.1} parent=1 // pred_check
      _
    $region3: #{tpu_custom_call.1} parent=1 // pred_check_branch
      %15 = sbr.rel (0) target = $region5
    $region4: #{tpu_custom_call.1} parent=1 // pred_region
      _
    $region5: #{tpu_custom_call.1} parent=1 // pred_fallthru
      _
    // Predicated region
    $region6: #{tpu_custom_call.1} parent=1 // pred_check
      _
    $region7: #{tpu_custom_call.1} parent=1 // pred_check_branch
      %17 = sbr.rel (0) target = $region9
    $region8: #{tpu_custom_call.1} parent=1 // pred_region
      _
    $region9: #{tpu_custom_call.1} parent=1 // pred_fallthru
      _
    // Predicated region
    $region10: #{tpu_custom_call.1} parent=1 // pred_check
      _
    $region11: #{tpu_custom_call.1} parent=1 // pred_check_branch
      %19 = sbr.rel (0) target = $region13
    $region12: #{tpu_custom_call.1} parent=1 // pred_region
      _
    $region13: #{tpu_custom_call.1} parent=1 // pred_fallthru
      _
    // Predicated region
    $region14: #{tpu_custom_call.1} parent=1 // pred_check
      _
    $region15: #{tpu_custom_call.1} parent=1 // pred_check_branch
      %21 = sbr.rel (0) target = $region17
    $region16: #{tpu_custom_call.1} parent=1 // pred_region
      _
    $region17: #{tpu_custom_call.1} parent=1 // pred_fallthru
      _
    // Predicated region
    $region18: #{tpu_custom_call.1} parent=1 // pred_check
      _
    $region19: #{tpu_custom_call.1} parent=1 // pred_check_branch
      %23 = sbr.rel (0) target = $region21
    $region20: #{tpu_custom_call.1} parent=1 // pred_region
      _
    $region21: #{tpu_custom_call.1} parent=1 // pred_fallthru
      _
    %v24 = vld [vmem:[%s0] sm:$0xff]
    %v25 = vld [vmem:[%s0 + $0x8] sm:$0xff]
    %28 = vst [vmem:[#allocation1] ss:$4 sm:$0xff] %v24
    %s29 = scalar_lea.vmem [#allocation1], 32
    %30 = vst [vmem:[%s29] ss:$4 sm:$0xff] %v25
    %v31 = vld.sshfl [vmem:[#allocation1] sm:$0xff pattern:$0x73625140]
    %v32 = vld.sshfl [vmem:[#allocation1 + $0x8] sm:$0xff pattern:$0x73625140]
    %v33 = vld.sshfl [vmem:[#allocation1 + $0x10] sm:$0xff pattern:$0x73625140]
    %v34 = vld.sshfl [vmem:[#allocation1 + $0x18] sm:$0xff pattern:$0x73625140]
    %v35 = vld.sshfl [vmem:[#allocation1 + $0x20] sm:$0xff pattern:$0x73625140]
    %v36 = vld.sshfl [vmem:[#allocation1 + $0x28] sm:$0xff pattern:$0x73625140]
    %v37 = vld.sshfl [vmem:[#allocation1 + $0x30] sm:$0xff pattern:$0x73625140]
    %v38 = vld.sshfl [vmem:[#allocation1 + $0x38] sm:$0xff pattern:$0x73625140]
    %v47 = vpack.c.bf16 %v31, %v31
    %v48 = vpack.c.bf16 %v32, %v32
    %v49 = vpack.c.bf16 %v33, %v33
    %v50 = vpack.c.bf16 %v34, %v34
    %v51 = vpack.c.bf16 %v35, %v35
    %v52 = vpack.c.bf16 %v36, %v36
    %v53 = vpack.c.bf16 %v37, %v37
    %v54 = vpack.c.bf16 %v38, %v38
    %v55 = vld [vmem:[%s1] sm:$0xff]
    %v56 = vld [vmem:[%s1 + $0x8] sm:$0xff]
    %v57 = vld [vmem:[%s1 + $0x10] sm:$0xff]
    %v58 = vld [vmem:[%s1 + $0x18] sm:$0xff]
    %v59 = vld [vmem:[%s1 + $0x20] sm:$0xff]
    %v60 = vld [vmem:[%s1 + $0x28] sm:$0xff]
    %v61 = vld [vmem:[%s1 + $0x30] sm:$0xff]
    %v62 = vld [vmem:[%s1 + $0x38] sm:$0xff]
    %v63 = vld [vmem:[%s1 + $0x40] sm:$0xff]
    %v64 = vld [vmem:[%s1 + $0x48] sm:$0xff]
    %v65 = vld [vmem:[%s1 + $0x50] sm:$0xff]
    %v66 = vld [vmem:[%s1 + $0x58] sm:$0xff]
    %v67 = vld [vmem:[%s1 + $0x60] sm:$0xff]
    %v68 = vld [vmem:[%s1 + $0x68] sm:$0xff]
    %v69 = vld [vmem:[%s1 + $0x70] sm:$0xff]
    %v70 = vld [vmem:[%s1 + $0x78] sm:$0xff]
    %v71 = vld [vmem:[%s1 + $0x80] sm:$0xff]
    %v72 = vld [vmem:[%s1 + $0x88] sm:$0xff]
    %v73 = vld [vmem:[%s1 + $0x90] sm:$0xff]
    %v74 = vld [vmem:[%s1 + $0x98] sm:$0xff]
    %v75 = vld [vmem:[%s1 + $0xa0] sm:$0xff]
    %v76 = vld [vmem:[%s1 + $0xa8] sm:$0xff]
    %v77 = vld [vmem:[%s1 + $0xb0] sm:$0xff]
    %v78 = vld [vmem:[%s1 + $0xb8] sm:$0xff]
    %v79 = vld [vmem:[%s1 + $0xc0] sm:$0xff]
    %v80 = vld [vmem:[%s1 + $0xc8] sm:$0xff]
    %v81 = vld [vmem:[%s1 + $0xd0] sm:$0xff]
    %v82 = vld [vmem:[%s1 + $0xd8] sm:$0xff]
    %v83 = vld [vmem:[%s1 + $0xe0] sm:$0xff]
    %v84 = vld [vmem:[%s1 + $0xe8] sm:$0xff]
    %v85 = vld [vmem:[%s1 + $0xf0] sm:$0xff]
    %v86 = vld [vmem:[%s1 + $0xf8] sm:$0xff]
    %v87 = vld [vmem:[%s1 + $0x100] sm:$0xff]
    %v88 = vld [vmem:[%s1 + $0x108] sm:$0xff]
    %v89 = vld [vmem:[%s1 + $0x110] sm:$0xff]
    %v90 = vld [vmem:[%s1 + $0x118] sm:$0xff]
    %v91 = vld [vmem:[%s1 + $0x120] sm:$0xff]
    %v92 = vld [vmem:[%s1 + $0x128] sm:$0xff]
    %v93 = vld [vmem:[%s1 + $0x130] sm:$0xff]
    %v94 = vld [vmem:[%s1 + $0x138] sm:$0xff]
    %v95 = vld [vmem:[%s1 + $0x140] sm:$0xff]
    %v96 = vld [vmem:[%s1 + $0x148] sm:$0xff]
    %v97 = vld [vmem:[%s1 + $0x150] sm:$0xff]
    %v98 = vld [vmem:[%s1 + $0x158] sm:$0xff]
    %v99 = vld [vmem:[%s1 + $0x160] sm:$0xff]
    %v100 = vld [vmem:[%s1 + $0x168] sm:$0xff]
    %v101 = vld [vmem:[%s1 + $0x170] sm:$0xff]
    %v102 = vld [vmem:[%s1 + $0x178] sm:$0xff]
    %v103 = vld [vmem:[%s1 + $0x180] sm:$0xff]
    %v104 = vld [vmem:[%s1 + $0x188] sm:$0xff]
    %v105 = vld [vmem:[%s1 + $0x190] sm:$0xff]
    %v106 = vld [vmem:[%s1 + $0x198] sm:$0xff]
    %v107 = vld [vmem:[%s1 + $0x1a0] sm:$0xff]
    %v108 = vld [vmem:[%s1 + $0x1a8] sm:$0xff]
    %v109 = vld [vmem:[%s1 + $0x1b0] sm:$0xff]
    %v110 = vld [vmem:[%s1 + $0x1b8] sm:$0xff]
    %v111 = vld [vmem:[%s1 + $0x1c0] sm:$0xff]
    %v112 = vld [vmem:[%s1 + $0x1c8] sm:$0xff]
    %v113 = vld [vmem:[%s1 + $0x1d0] sm:$0xff]
    %v114 = vld [vmem:[%s1 + $0x1d8] sm:$0xff]
    %v115 = vld [vmem:[%s1 + $0x1e0] sm:$0xff]
    %v116 = vld [vmem:[%s1 + $0x1e8] sm:$0xff]
    %v117 = vld [vmem:[%s1 + $0x1f0] sm:$0xff]
    %v118 = vld [vmem:[%s1 + $0x1f8] sm:$0xff]
    %v119 = vld [vmem:[%s1 + $0x200] sm:$0xff]
    %v120 = vld [vmem:[%s1 + $0x208] sm:$0xff]
    %v121 = vld [vmem:[%s1 + $0x210] sm:$0xff]
    %v122 = vld [vmem:[%s1 + $0x218] sm:$0xff]
    %v123 = vld [vmem:[%s1 + $0x220] sm:$0xff]
    %v124 = vld [vmem:[%s1 + $0x228] sm:$0xff]
    %v125 = vld [vmem:[%s1 + $0x230] sm:$0xff]
    %v126 = vld [vmem:[%s1 + $0x238] sm:$0xff]
    %v127 = vld [vmem:[%s1 + $0x240] sm:$0xff]
    %v128 = vld [vmem:[%s1 + $0x248] sm:$0xff]
    %v129 = vld [vmem:[%s1 + $0x250] sm:$0xff]
    %v130 = vld [vmem:[%s1 + $0x258] sm:$0xff]
    %v131 = vld [vmem:[%s1 + $0x260] sm:$0xff]
    %v132 = vld [vmem:[%s1 + $0x268] sm:$0xff]
    %v133 = vld [vmem:[%s1 + $0x270] sm:$0xff]
    %v134 = vld [vmem:[%s1 + $0x278] sm:$0xff]
    %v135 = vld [vmem:[%s1 + $0x280] sm:$0xff]
    %v136 = vld [vmem:[%s1 + $0x288] sm:$0xff]
    %v137 = vld [vmem:[%s1 + $0x290] sm:$0xff]
    %v138 = vld [vmem:[%s1 + $0x298] sm:$0xff]
    %v139 = vld [vmem:[%s1 + $0x2a0] sm:$0xff]
    %v140 = vld [vmem:[%s1 + $0x2a8] sm:$0xff]
    %v141 = vld [vmem:[%s1 + $0x2b0] sm:$0xff]
    %v142 = vld [vmem:[%s1 + $0x2b8] sm:$0xff]
    %v143 = vld [vmem:[%s1 + $0x2c0] sm:$0xff]
    %v144 = vld [vmem:[%s1 + $0x2c8] sm:$0xff]
    %v145 = vld [vmem:[%s1 + $0x2d0] sm:$0xff]
    %v146 = vld [vmem:[%s1 + $0x2d8] sm:$0xff]
    %v147 = vld [vmem:[%s1 + $0x2e0] sm:$0xff]
    %v148 = vld [vmem:[%s1 + $0x2e8] sm:$0xff]
    %v149 = vld [vmem:[%s1 + $0x2f0] sm:$0xff]
    %v150 = vld [vmem:[%s1 + $0x2f8] sm:$0xff]
    %v151 = vld [vmem:[%s1 + $0x300] sm:$0xff]
    %v152 = vld [vmem:[%s1 + $0x308] sm:$0xff]
    %v153 = vld [vmem:[%s1 + $0x310] sm:$0xff]
    %v154 = vld [vmem:[%s1 + $0x318] sm:$0xff]
    %v155 = vld [vmem:[%s1 + $0x320] sm:$0xff]
    %v156 = vld [vmem:[%s1 + $0x328] sm:$0xff]
    %v157 = vld [vmem:[%s1 + $0x330] sm:$0xff]
    %v158 = vld [vmem:[%s1 + $0x338] sm:$0xff]
    %v159 = vld [vmem:[%s1 + $0x340] sm:$0xff]
    %v160 = vld [vmem:[%s1 + $0x348] sm:$0xff]
    %v161 = vld [vmem:[%s1 + $0x350] sm:$0xff]
    %v162 = vld [vmem:[%s1 + $0x358] sm:$0xff]
    %v163 = vld [vmem:[%s1 + $0x360] sm:$0xff]
    %v164 = vld [vmem:[%s1 + $0x368] sm:$0xff]
    %v165 = vld [vmem:[%s1 + $0x370] sm:$0xff]
    %v166 = vld [vmem:[%s1 + $0x378] sm:$0xff]
    %v167 = vld [vmem:[%s1 + $0x380] sm:$0xff]
    %v168 = vld [vmem:[%s1 + $0x388] sm:$0xff]
    %v169 = vld [vmem:[%s1 + $0x390] sm:$0xff]
    %v170 = vld [vmem:[%s1 + $0x398] sm:$0xff]
    %v171 = vld [vmem:[%s1 + $0x3a0] sm:$0xff]
    %v172 = vld [vmem:[%s1 + $0x3a8] sm:$0xff]
    %v173 = vld [vmem:[%s1 + $0x3b0] sm:$0xff]
    %v174 = vld [vmem:[%s1 + $0x3b8] sm:$0xff]
    %v175 = vld [vmem:[%s1 + $0x3c0] sm:$0xff]
    %v176 = vld [vmem:[%s1 + $0x3c8] sm:$0xff]
    %v177 = vld [vmem:[%s1 + $0x3d0] sm:$0xff]
    %v178 = vld [vmem:[%s1 + $0x3d8] sm:$0xff]
    %v179 = vld [vmem:[%s1 + $0x3e0] sm:$0xff]
    %v180 = vld [vmem:[%s1 + $0x3e8] sm:$0xff]
    %v181 = vld [vmem:[%s1 + $0x3f0] sm:$0xff]
    %v182 = vld [vmem:[%s1 + $0x3f8] sm:$0xff]
    %v183 = vld [vmem:[%s1 + $0x400] sm:$0xff]
    %v184 = vld [vmem:[%s1 + $0x408] sm:$0xff]
    %v185 = vld [vmem:[%s1 + $0x410] sm:$0xff]
    %v186 = vld [vmem:[%s1 + $0x418] sm:$0xff]
    %v187 = vld [vmem:[%s1 + $0x420] sm:$0xff]
    %v188 = vld [vmem:[%s1 + $0x428] sm:$0xff]
    %v189 = vld [vmem:[%s1 + $0x430] sm:$0xff]
    %v190 = vld [vmem:[%s1 + $0x438] sm:$0xff]
    %v191 = vld [vmem:[%s1 + $0x440] sm:$0xff]
    %v192 = vld [vmem:[%s1 + $0x448] sm:$0xff]
    %v193 = vld [vmem:[%s1 + $0x450] sm:$0xff]
    %v194 = vld [vmem:[%s1 + $0x458] sm:$0xff]
    %v195 = vld [vmem:[%s1 + $0x460] sm:$0xff]
    %v196 = vld [vmem:[%s1 + $0x468] sm:$0xff]
    %v197 = vld [vmem:[%s1 + $0x470] sm:$0xff]
    %v198 = vld [vmem:[%s1 + $0x478] sm:$0xff]
    %v199 = vld [vmem:[%s1 + $0x480] sm:$0xff]
    %v200 = vld [vmem:[%s1 + $0x488] sm:$0xff]
    %v201 = vld [vmem:[%s1 + $0x490] sm:$0xff]
    %v202 = vld [vmem:[%s1 + $0x498] sm:$0xff]
    %v203 = vld [vmem:[%s1 + $0x4a0] sm:$0xff]
    %v204 = vld [vmem:[%s1 + $0x4a8] sm:$0xff]
    %v205 = vld [vmem:[%s1 + $0x4b0] sm:$0xff]
    %v206 = vld [vmem:[%s1 + $0x4b8] sm:$0xff]
    %v207 = vld [vmem:[%s1 + $0x4c0] sm:$0xff]
    %v208 = vld [vmem:[%s1 + $0x4c8] sm:$0xff]
    %v209 = vld [vmem:[%s1 + $0x4d0] sm:$0xff]
    %v210 = vld [vmem:[%s1 + $0x4d8] sm:$0xff]
    %v211 = vld [vmem:[%s1 + $0x4e0] sm:$0xff]
    %v212 = vld [vmem:[%s1 + $0x4e8] sm:$0xff]
    %v213 = vld [vmem:[%s1 + $0x4f0] sm:$0xff]
    %v214 = vld [vmem:[%s1 + $0x4f8] sm:$0xff]
    %v215 = vld [vmem:[%s1 + $0x500] sm:$0xff]
    %v216 = vld [vmem:[%s1 + $0x508] sm:$0xff]
    %v217 = vld [vmem:[%s1 + $0x510] sm:$0xff]
    %v218 = vld [vmem:[%s1 + $0x518] sm:$0xff]
    %v219 = vld [vmem:[%s1 + $0x520] sm:$0xff]
    %v220 = vld [vmem:[%s1 + $0x528] sm:$0xff]
    %v221 = vld [vmem:[%s1 + $0x530] sm:$0xff]
    %v222 = vld [vmem:[%s1 + $0x538] sm:$0xff]
    %v223 = vld [vmem:[%s1 + $0x540] sm:$0xff]
    %v224 = vld [vmem:[%s1 + $0x548] sm:$0xff]
    %v225 = vld [vmem:[%s1 + $0x550] sm:$0xff]
    %v226 = vld [vmem:[%s1 + $0x558] sm:$0xff]
    %v227 = vld [vmem:[%s1 + $0x560] sm:$0xff]
    %v228 = vld [vmem:[%s1 + $0x568] sm:$0xff]
    %v229 = vld [vmem:[%s1 + $0x570] sm:$0xff]
    %v230 = vld [vmem:[%s1 + $0x578] sm:$0xff]
    %v231 = vld [vmem:[%s1 + $0x580] sm:$0xff]
    %v232 = vld [vmem:[%s1 + $0x588] sm:$0xff]
    %v233 = vld [vmem:[%s1 + $0x590] sm:$0xff]
    %v234 = vld [vmem:[%s1 + $0x598] sm:$0xff]
    %v235 = vld [vmem:[%s1 + $0x5a0] sm:$0xff]
    %v236 = vld [vmem:[%s1 + $0x5a8] sm:$0xff]
    %v237 = vld [vmem:[%s1 + $0x5b0] sm:$0xff]
    %v238 = vld [vmem:[%s1 + $0x5b8] sm:$0xff]
    %v239 = vld [vmem:[%s1 + $0x5c0] sm:$0xff]
    %v240 = vld [vmem:[%s1 + $0x5c8] sm:$0xff]
    %v241 = vld [vmem:[%s1 + $0x5d0] sm:$0xff]
    %v242 = vld [vmem:[%s1 + $0x5d8] sm:$0xff]
    %v243 = vld [vmem:[%s1 + $0x5e0] sm:$0xff]
    %v244 = vld [vmem:[%s1 + $0x5e8] sm:$0xff]
    %v245 = vld [vmem:[%s1 + $0x5f0] sm:$0xff]
    %v246 = vld [vmem:[%s1 + $0x5f8] sm:$0xff]
    %v247 = vld [vmem:[%s1 + $0x600] sm:$0xff]
    %v248 = vld [vmem:[%s1 + $0x608] sm:$0xff]
    %v249 = vld [vmem:[%s1 + $0x610] sm:$0xff]
    %v250 = vld [vmem:[%s1 + $0x618] sm:$0xff]
    %v251 = vld [vmem:[%s1 + $0x620] sm:$0xff]
    %v252 = vld [vmem:[%s1 + $0x628] sm:$0xff]
    %v253 = vld [vmem:[%s1 + $0x630] sm:$0xff]
    %v254 = vld [vmem:[%s1 + $0x638] sm:$0xff]
    %v255 = vld [vmem:[%s1 + $0x640] sm:$0xff]
    %v256 = vld [vmem:[%s1 + $0x648] sm:$0xff]
    %v257 = vld [vmem:[%s1 + $0x650] sm:$0xff]
    %v258 = vld [vmem:[%s1 + $0x658] sm:$0xff]
    %v259 = vld [vmem:[%s1 + $0x660] sm:$0xff]
    %v260 = vld [vmem:[%s1 + $0x668] sm:$0xff]
    %v261 = vld [vmem:[%s1 + $0x670] sm:$0xff]
    %v262 = vld [vmem:[%s1 + $0x678] sm:$0xff]
    %v263 = vld [vmem:[%s1 + $0x680] sm:$0xff]
    %v264 = vld [vmem:[%s1 + $0x688] sm:$0xff]
    %v265 = vld [vmem:[%s1 + $0x690] sm:$0xff]
    %v266 = vld [vmem:[%s1 + $0x698] sm:$0xff]
    %v267 = vld [vmem:[%s1 + $0x6a0] sm:$0xff]
    %v268 = vld [vmem:[%s1 + $0x6a8] sm:$0xff]
    %v269 = vld [vmem:[%s1 + $0x6b0] sm:$0xff]
    %v270 = vld [vmem:[%s1 + $0x6b8] sm:$0xff]
    %v271 = vld [vmem:[%s1 + $0x6c0] sm:$0xff]
    %v272 = vld [vmem:[%s1 + $0x6c8] sm:$0xff]
    %v273 = vld [vmem:[%s1 + $0x6d0] sm:$0xff]
    %v274 = vld [vmem:[%s1 + $0x6d8] sm:$0xff]
    %v275 = vld [vmem:[%s1 + $0x6e0] sm:$0xff]
    %v276 = vld [vmem:[%s1 + $0x6e8] sm:$0xff]
    %v277 = vld [vmem:[%s1 + $0x6f0] sm:$0xff]
    %v278 = vld [vmem:[%s1 + $0x6f8] sm:$0xff]
    %v279 = vld [vmem:[%s1 + $0x700] sm:$0xff]
    %v280 = vld [vmem:[%s1 + $0x708] sm:$0xff]
    %v281 = vld [vmem:[%s1 + $0x710] sm:$0xff]
    %v282 = vld [vmem:[%s1 + $0x718] sm:$0xff]
    %v283 = vld [vmem:[%s1 + $0x720] sm:$0xff]
    %v284 = vld [vmem:[%s1 + $0x728] sm:$0xff]
    %v285 = vld [vmem:[%s1 + $0x730] sm:$0xff]
    %v286 = vld [vmem:[%s1 + $0x738] sm:$0xff]
    %v287 = vld [vmem:[%s1 + $0x740] sm:$0xff]
    %v288 = vld [vmem:[%s1 + $0x748] sm:$0xff]
    %v289 = vld [vmem:[%s1 + $0x750] sm:$0xff]
    %v290 = vld [vmem:[%s1 + $0x758] sm:$0xff]
    %v291 = vld [vmem:[%s1 + $0x760] sm:$0xff]
    %v292 = vld [vmem:[%s1 + $0x768] sm:$0xff]
    %v293 = vld [vmem:[%s1 + $0x770] sm:$0xff]
    %v294 = vld [vmem:[%s1 + $0x778] sm:$0xff]
    %v295 = vld [vmem:[%s1 + $0x780] sm:$0xff]
    %v296 = vld [vmem:[%s1 + $0x788] sm:$0xff]
    %v297 = vld [vmem:[%s1 + $0x790] sm:$0xff]
    %v298 = vld [vmem:[%s1 + $0x798] sm:$0xff]
    %v299 = vld [vmem:[%s1 + $0x7a0] sm:$0xff]
    %v300 = vld [vmem:[%s1 + $0x7a8] sm:$0xff]
    %v301 = vld [vmem:[%s1 + $0x7b0] sm:$0xff]
    %v302 = vld [vmem:[%s1 + $0x7b8] sm:$0xff]
    %v303 = vld [vmem:[%s1 + $0x7c0] sm:$0xff]
    %v304 = vld [vmem:[%s1 + $0x7c8] sm:$0xff]
    %v305 = vld [vmem:[%s1 + $0x7d0] sm:$0xff]
    %v306 = vld [vmem:[%s1 + $0x7d8] sm:$0xff]
    %v307 = vld [vmem:[%s1 + $0x7e0] sm:$0xff]
    %v308 = vld [vmem:[%s1 + $0x7e8] sm:$0xff]
    %v309 = vld [vmem:[%s1 + $0x7f0] sm:$0xff]
    %v310 = vld [vmem:[%s1 + $0x7f8] sm:$0xff]
    %v311 = vld [vmem:[%s2] sm:$0xf]
    %v313 = vperm.slane %v311, 0
    %v314 = vperm.slane %v311, 1
    %v315 = vperm.slane %v311, 2
    %v316 = vperm.slane %v311, 3
    %v577 = vunpack.c.l.b16 %v55
    %v578 = vunpack.c.h.b16 %v55
    %v579 = vunpack.c.l.b16 %v56
    %v580 = vunpack.c.h.b16 %v56
    %v581 = vunpack.c.l.b16 %v57
    %v582 = vunpack.c.h.b16 %v57
    %v583 = vunpack.c.l.b16 %v58
    %v584 = vunpack.c.h.b16 %v58
    %v585 = vunpack.c.l.b16 %v59
    %v586 = vunpack.c.h.b16 %v59
    %v587 = vunpack.c.l.b16 %v60
    %v588 = vunpack.c.h.b16 %v60
    %v589 = vunpack.c.l.b16 %v61
    %v590 = vunpack.c.h.b16 %v61
    %v591 = vunpack.c.l.b16 %v62
    %v592 = vunpack.c.h.b16 %v62
    %v593 = vunpack.c.l.b16 %v63
    %v594 = vunpack.c.h.b16 %v63
    %v595 = vunpack.c.l.b16 %v64
    %v596 = vunpack.c.h.b16 %v64
    %v597 = vunpack.c.l.b16 %v65
    %v598 = vunpack.c.h.b16 %v65
    %v599 = vunpack.c.l.b16 %v66
    %v600 = vunpack.c.h.b16 %v66
    %v601 = vunpack.c.l.b16 %v67
    %v602 = vunpack.c.h.b16 %v67
    %v603 = vunpack.c.l.b16 %v68
    %v604 = vunpack.c.h.b16 %v68
    %v605 = vunpack.c.l.b16 %v69
    %v606 = vunpack.c.h.b16 %v69
    %v607 = vunpack.c.l.b16 %v70
    %v608 = vunpack.c.h.b16 %v70
    %v609 = vunpack.c.l.b16 %v71
    %v610 = vunpack.c.h.b16 %v71
    %v611 = vunpack.c.l.b16 %v72
    %v612 = vunpack.c.h.b16 %v72
    %v613 = vunpack.c.l.b16 %v73
    %v614 = vunpack.c.h.b16 %v73
    %v615 = vunpack.c.l.b16 %v74
    %v616 = vunpack.c.h.b16 %v74
    %v617 = vunpack.c.l.b16 %v75
    %v618 = vunpack.c.h.b16 %v75
    %v619 = vunpack.c.l.b16 %v76
    %v620 = vunpack.c.h.b16 %v76
    %v621 = vunpack.c.l.b16 %v77
    %v622 = vunpack.c.h.b16 %v77
    %v623 = vunpack.c.l.b16 %v78
    %v624 = vunpack.c.h.b16 %v78
    %v625 = vunpack.c.l.b16 %v79
    %v626 = vunpack.c.h.b16 %v79
    %v627 = vunpack.c.l.b16 %v80
    %v628 = vunpack.c.h.b16 %v80
    %v629 = vunpack.c.l.b16 %v81
    %v630 = vunpack.c.h.b16 %v81
    %v631 = vunpack.c.l.b16 %v82
    %v632 = vunpack.c.h.b16 %v82
    %v633 = vunpack.c.l.b16 %v83
    %v634 = vunpack.c.h.b16 %v83
    %v635 = vunpack.c.l.b16 %v84
    %v636 = vunpack.c.h.b16 %v84
    %v637 = vunpack.c.l.b16 %v85
    %v638 = vunpack.c.h.b16 %v85
    %v639 = vunpack.c.l.b16 %v86
    %v640 = vunpack.c.h.b16 %v86
    %v641 = vunpack.c.l.b16 %v87
    %v642 = vunpack.c.h.b16 %v87
    %v643 = vunpack.c.l.b16 %v88
    %v644 = vunpack.c.h.b16 %v88
    %v645 = vunpack.c.l.b16 %v89
    %v646 = vunpack.c.h.b16 %v89
    %v647 = vunpack.c.l.b16 %v90
    %v648 = vunpack.c.h.b16 %v90
    %v649 = vunpack.c.l.b16 %v91
    %v650 = vunpack.c.h.b16 %v91
    %v651 = vunpack.c.l.b16 %v92
    %v652 = vunpack.c.h.b16 %v92
    %v653 = vunpack.c.l.b16 %v93
    %v654 = vunpack.c.h.b16 %v93
    %v655 = vunpack.c.l.b16 %v94
    %v656 = vunpack.c.h.b16 %v94
    %v657 = vunpack.c.l.b16 %v95
    %v658 = vunpack.c.h.b16 %v95
    %v659 = vunpack.c.l.b16 %v96
    %v660 = vunpack.c.h.b16 %v96
    %v661 = vunpack.c.l.b16 %v97
    %v662 = vunpack.c.h.b16 %v97
    %v663 = vunpack.c.l.b16 %v98
    %v664 = vunpack.c.h.b16 %v98
    %v665 = vunpack.c.l.b16 %v99
    %v666 = vunpack.c.h.b16 %v99
    %v667 = vunpack.c.l.b16 %v100
    %v668 = vunpack.c.h.b16 %v100
    %v669 = vunpack.c.l.b16 %v101
    %v670 = vunpack.c.h.b16 %v101
    %v671 = vunpack.c.l.b16 %v102
    %v672 = vunpack.c.h.b16 %v102
    %v673 = vunpack.c.l.b16 %v103
    %v674 = vunpack.c.h.b16 %v103
    %v675 = vunpack.c.l.b16 %v104
    %v676 = vunpack.c.h.b16 %v104
    %v677 = vunpack.c.l.b16 %v105
    %v678 = vunpack.c.h.b16 %v105
    %v679 = vunpack.c.l.b16 %v106
    %v680 = vunpack.c.h.b16 %v106
    %v681 = vunpack.c.l.b16 %v107
    %v682 = vunpack.c.h.b16 %v107
    %v683 = vunpack.c.l.b16 %v108
    %v684 = vunpack.c.h.b16 %v108
    %v685 = vunpack.c.l.b16 %v109
    %v686 = vunpack.c.h.b16 %v109
    %v687 = vunpack.c.l.b16 %v110
    %v688 = vunpack.c.h.b16 %v110
    %v689 = vunpack.c.l.b16 %v111
    %v690 = vunpack.c.h.b16 %v111
    %v691 = vunpack.c.l.b16 %v112
    %v692 = vunpack.c.h.b16 %v112
    %v693 = vunpack.c.l.b16 %v113
    %v694 = vunpack.c.h.b16 %v113
    %v695 = vunpack.c.l.b16 %v114
    %v696 = vunpack.c.h.b16 %v114
    %v697 = vunpack.c.l.b16 %v115
    %v698 = vunpack.c.h.b16 %v115
    %v699 = vunpack.c.l.b16 %v116
    %v700 = vunpack.c.h.b16 %v116
    %v701 = vunpack.c.l.b16 %v117
    %v702 = vunpack.c.h.b16 %v117
    %v703 = vunpack.c.l.b16 %v118
    %v704 = vunpack.c.h.b16 %v118
    %v705 = vunpack.c.l.b16 %v119
    %v706 = vunpack.c.h.b16 %v119
    %v707 = vunpack.c.l.b16 %v120
    %v708 = vunpack.c.h.b16 %v120
    %v709 = vunpack.c.l.b16 %v121
    %v710 = vunpack.c.h.b16 %v121
    %v711 = vunpack.c.l.b16 %v122
    %v712 = vunpack.c.h.b16 %v122
    %v713 = vunpack.c.l.b16 %v123
    %v714 = vunpack.c.h.b16 %v123
    %v715 = vunpack.c.l.b16 %v124
    %v716 = vunpack.c.h.b16 %v124
    %v717 = vunpack.c.l.b16 %v125
    %v718 = vunpack.c.h.b16 %v125
    %v719 = vunpack.c.l.b16 %v126
    %v720 = vunpack.c.h.b16 %v126
    %v721 = vunpack.c.l.b16 %v127
    %v722 = vunpack.c.h.b16 %v127
    %v723 = vunpack.c.l.b16 %v128
    %v724 = vunpack.c.h.b16 %v128
    %v725 = vunpack.c.l.b16 %v129
    %v726 = vunpack.c.h.b16 %v129
    %v727 = vunpack.c.l.b16 %v130
    %v728 = vunpack.c.h.b16 %v130
    %v729 = vunpack.c.l.b16 %v131
    %v730 = vunpack.c.h.b16 %v131
    %v731 = vunpack.c.l.b16 %v132
    %v732 = vunpack.c.h.b16 %v132
    %v733 = vunpack.c.l.b16 %v133
    %v734 = vunpack.c.h.b16 %v133
    %v735 = vunpack.c.l.b16 %v134
    %v736 = vunpack.c.h.b16 %v134
    %v737 = vunpack.c.l.b16 %v135
    %v738 = vunpack.c.h.b16 %v135
    %v739 = vunpack.c.l.b16 %v136
    %v740 = vunpack.c.h.b16 %v136
    %v741 = vunpack.c.l.b16 %v137
    %v742 = vunpack.c.h.b16 %v137
    %v743 = vunpack.c.l.b16 %v138
    %v744 = vunpack.c.h.b16 %v138
    %v745 = vunpack.c.l.b16 %v139
    %v746 = vunpack.c.h.b16 %v139
    %v747 = vunpack.c.l.b16 %v140
    %v748 = vunpack.c.h.b16 %v140
    %v749 = vunpack.c.l.b16 %v141
    %v750 = vunpack.c.h.b16 %v141
    %v751 = vunpack.c.l.b16 %v142
    %v752 = vunpack.c.h.b16 %v142
    %v753 = vunpack.c.l.b16 %v143
    %v754 = vunpack.c.h.b16 %v143
    %v755 = vunpack.c.l.b16 %v144
    %v756 = vunpack.c.h.b16 %v144
    %v757 = vunpack.c.l.b16 %v145
    %v758 = vunpack.c.h.b16 %v145
    %v759 = vunpack.c.l.b16 %v146
    %v760 = vunpack.c.h.b16 %v146
    %v761 = vunpack.c.l.b16 %v147
    %v762 = vunpack.c.h.b16 %v147
    %v763 = vunpack.c.l.b16 %v148
    %v764 = vunpack.c.h.b16 %v148
    %v765 = vunpack.c.l.b16 %v149
    %v766 = vunpack.c.h.b16 %v149
    %v767 = vunpack.c.l.b16 %v150
    %v768 = vunpack.c.h.b16 %v150
    %v769 = vunpack.c.l.b16 %v151
    %v770 = vunpack.c.h.b16 %v151
    %v771 = vunpack.c.l.b16 %v152
    %v772 = vunpack.c.h.b16 %v152
    %v773 = vunpack.c.l.b16 %v153
    %v774 = vunpack.c.h.b16 %v153
    %v775 = vunpack.c.l.b16 %v154
    %v776 = vunpack.c.h.b16 %v154
    %v777 = vunpack.c.l.b16 %v155
    %v778 = vunpack.c.h.b16 %v155
    %v779 = vunpack.c.l.b16 %v156
    %v780 = vunpack.c.h.b16 %v156
    %v781 = vunpack.c.l.b16 %v157
    %v782 = vunpack.c.h.b16 %v157
    %v783 = vunpack.c.l.b16 %v158
    %v784 = vunpack.c.h.b16 %v158
    %v785 = vunpack.c.l.b16 %v159
    %v786 = vunpack.c.h.b16 %v159
    %v787 = vunpack.c.l.b16 %v160
    %v788 = vunpack.c.h.b16 %v160
    %v789 = vunpack.c.l.b16 %v161
    %v790 = vunpack.c.h.b16 %v161
    %v791 = vunpack.c.l.b16 %v162
    %v792 = vunpack.c.h.b16 %v162
    %v793 = vunpack.c.l.b16 %v163
    %v794 = vunpack.c.h.b16 %v163
    %v795 = vunpack.c.l.b16 %v164
    %v796 = vunpack.c.h.b16 %v164
    %v797 = vunpack.c.l.b16 %v165
    %v798 = vunpack.c.h.b16 %v165
    %v799 = vunpack.c.l.b16 %v166
    %v800 = vunpack.c.h.b16 %v166
    %v801 = vunpack.c.l.b16 %v167
    %v802 = vunpack.c.h.b16 %v167
    %v803 = vunpack.c.l.b16 %v168
    %v804 = vunpack.c.h.b16 %v168
    %v805 = vunpack.c.l.b16 %v169
    %v806 = vunpack.c.h.b16 %v169
    %v807 = vunpack.c.l.b16 %v170
    %v808 = vunpack.c.h.b16 %v170
    %v809 = vunpack.c.l.b16 %v171
    %v810 = vunpack.c.h.b16 %v171
    %v811 = vunpack.c.l.b16 %v172
    %v812 = vunpack.c.h.b16 %v172
    %v813 = vunpack.c.l.b16 %v173
    %v814 = vunpack.c.h.b16 %v173
    %v815 = vunpack.c.l.b16 %v174
    %v816 = vunpack.c.h.b16 %v174
    %v817 = vunpack.c.l.b16 %v175
    %v818 = vunpack.c.h.b16 %v175
    %v819 = vunpack.c.l.b16 %v176
    %v820 = vunpack.c.h.b16 %v176
    %v821 = vunpack.c.l.b16 %v177
    %v822 = vunpack.c.h.b16 %v177
    %v823 = vunpack.c.l.b16 %v178
    %v824 = vunpack.c.h.b16 %v178
    %v825 = vunpack.c.l.b16 %v179
    %v826 = vunpack.c.h.b16 %v179
    %v827 = vunpack.c.l.b16 %v180
    %v828 = vunpack.c.h.b16 %v180
    %v829 = vunpack.c.l.b16 %v181
    %v830 = vunpack.c.h.b16 %v181
    %v831 = vunpack.c.l.b16 %v182
    %v832 = vunpack.c.h.b16 %v182
    %v833 = vunpack.c.l.b16 %v183
    %v834 = vunpack.c.h.b16 %v183
    %v835 = vunpack.c.l.b16 %v184
    %v836 = vunpack.c.h.b16 %v184
    %v837 = vunpack.c.l.b16 %v185
    %v838 = vunpack.c.h.b16 %v185
    %v839 = vunpack.c.l.b16 %v186
    %v840 = vunpack.c.h.b16 %v186
    %v841 = vunpack.c.l.b16 %v187
    %v842 = vunpack.c.h.b16 %v187
    %v843 = vunpack.c.l.b16 %v188
    %v844 = vunpack.c.h.b16 %v188
    %v845 = vunpack.c.l.b16 %v189
    %v846 = vunpack.c.h.b16 %v189
    %v847 = vunpack.c.l.b16 %v190
    %v848 = vunpack.c.h.b16 %v190
    %v849 = vunpack.c.l.b16 %v191
    %v850 = vunpack.c.h.b16 %v191
    %v851 = vunpack.c.l.b16 %v192
    %v852 = vunpack.c.h.b16 %v192
    %v853 = vunpack.c.l.b16 %v193
    %v854 = vunpack.c.h.b16 %v193
    %v855 = vunpack.c.l.b16 %v194
    %v856 = vunpack.c.h.b16 %v194
    %v857 = vunpack.c.l.b16 %v195
    %v858 = vunpack.c.h.b16 %v195
    %v859 = vunpack.c.l.b16 %v196
    %v860 = vunpack.c.h.b16 %v196
    %v861 = vunpack.c.l.b16 %v197
    %v862 = vunpack.c.h.b16 %v197
    %v863 = vunpack.c.l.b16 %v198
    %v864 = vunpack.c.h.b16 %v198
    %v865 = vunpack.c.l.b16 %v199
    %v866 = vunpack.c.h.b16 %v199
    %v867 = vunpack.c.l.b16 %v200
    %v868 = vunpack.c.h.b16 %v200
    %v869 = vunpack.c.l.b16 %v201
    %v870 = vunpack.c.h.b16 %v201
    %v871 = vunpack.c.l.b16 %v202
    %v872 = vunpack.c.h.b16 %v202
    %v873 = vunpack.c.l.b16 %v203
    %v874 = vunpack.c.h.b16 %v203
    %v875 = vunpack.c.l.b16 %v204
    %v876 = vunpack.c.h.b16 %v204
    %v877 = vunpack.c.l.b16 %v205
    %v878 = vunpack.c.h.b16 %v205
    %v879 = vunpack.c.l.b16 %v206
    %v880 = vunpack.c.h.b16 %v206
    %v881 = vunpack.c.l.b16 %v207
    %v882 = vunpack.c.h.b16 %v207
    %v883 = vunpack.c.l.b16 %v208
    %v884 = vunpack.c.h.b16 %v208
    %v885 = vunpack.c.l.b16 %v209
    %v886 = vunpack.c.h.b16 %v209
    %v887 = vunpack.c.l.b16 %v210
    %v888 = vunpack.c.h.b16 %v210
    %v889 = vunpack.c.l.b16 %v211
    %v890 = vunpack.c.h.b16 %v211
    %v891 = vunpack.c.l.b16 %v212
    %v892 = vunpack.c.h.b16 %v212
    %v893 = vunpack.c.l.b16 %v213
    %v894 = vunpack.c.h.b16 %v213
    %v895 = vunpack.c.l.b16 %v214
    %v896 = vunpack.c.h.b16 %v214
    %v897 = vunpack.c.l.b16 %v215
    %v898 = vunpack.c.h.b16 %v215
    %v899 = vunpack.c.l.b16 %v216
    %v900 = vunpack.c.h.b16 %v216
    %v901 = vunpack.c.l.b16 %v217
    %v902 = vunpack.c.h.b16 %v217
    %v903 = vunpack.c.l.b16 %v218
    %v904 = vunpack.c.h.b16 %v218
    %v905 = vunpack.c.l.b16 %v219
    %v906 = vunpack.c.h.b16 %v219
    %v907 = vunpack.c.l.b16 %v220
    %v908 = vunpack.c.h.b16 %v220
    %v909 = vunpack.c.l.b16 %v221
    %v910 = vunpack.c.h.b16 %v221
    %v911 = vunpack.c.l.b16 %v222
    %v912 = vunpack.c.h.b16 %v222
    %v913 = vunpack.c.l.b16 %v223
    %v914 = vunpack.c.h.b16 %v223
    %v915 = vunpack.c.l.b16 %v224
    %v916 = vunpack.c.h.b16 %v224
    %v917 = vunpack.c.l.b16 %v225
    %v918 = vunpack.c.h.b16 %v225
    %v919 = vunpack.c.l.b16 %v226
    %v920 = vunpack.c.h.b16 %v226
    %v921 = vunpack.c.l.b16 %v227
    %v922 = vunpack.c.h.b16 %v227
    %v923 = vunpack.c.l.b16 %v228
    %v924 = vunpack.c.h.b16 %v228
    %v925 = vunpack.c.l.b16 %v229
    %v926 = vunpack.c.h.b16 %v229
    %v927 = vunpack.c.l.b16 %v230
    %v928 = vunpack.c.h.b16 %v230
    %v929 = vunpack.c.l.b16 %v231
    %v930 = vunpack.c.h.b16 %v231
    %v931 = vunpack.c.l.b16 %v232
    %v932 = vunpack.c.h.b16 %v232
    %v933 = vunpack.c.l.b16 %v233
    %v934 = vunpack.c.h.b16 %v233
    %v935 = vunpack.c.l.b16 %v234
    %v936 = vunpack.c.h.b16 %v234
    %v937 = vunpack.c.l.b16 %v235
    %v938 = vunpack.c.h.b16 %v235
    %v939 = vunpack.c.l.b16 %v236
    %v940 = vunpack.c.h.b16 %v236
    %v941 = vunpack.c.l.b16 %v237
    %v942 = vunpack.c.h.b16 %v237
    %v943 = vunpack.c.l.b16 %v238
    %v944 = vunpack.c.h.b16 %v238
    %v945 = vunpack.c.l.b16 %v239
    %v946 = vunpack.c.h.b16 %v239
    %v947 = vunpack.c.l.b16 %v240
    %v948 = vunpack.c.h.b16 %v240
    %v949 = vunpack.c.l.b16 %v241
    %v950 = vunpack.c.h.b16 %v241
    %v951 = vunpack.c.l.b16 %v242
    %v952 = vunpack.c.h.b16 %v242
    %v953 = vunpack.c.l.b16 %v243
    %v954 = vunpack.c.h.b16 %v243
    %v955 = vunpack.c.l.b16 %v244
    %v956 = vunpack.c.h.b16 %v244
    %v957 = vunpack.c.l.b16 %v245
    %v958 = vunpack.c.h.b16 %v245
    %v959 = vunpack.c.l.b16 %v246
    %v960 = vunpack.c.h.b16 %v246
    %v961 = vunpack.c.l.b16 %v247
    %v962 = vunpack.c.h.b16 %v247
    %v963 = vunpack.c.l.b16 %v248
    %v964 = vunpack.c.h.b16 %v248
    %v965 = vunpack.c.l.b16 %v249
    %v966 = vunpack.c.h.b16 %v249
    %v967 = vunpack.c.l.b16 %v250
    %v968 = vunpack.c.h.b16 %v250
    %v969 = vunpack.c.l.b16 %v251
    %v970 = vunpack.c.h.b16 %v251
    %v971 = vunpack.c.l.b16 %v252
    %v972 = vunpack.c.h.b16 %v252
    %v973 = vunpack.c.l.b16 %v253
    %v974 = vunpack.c.h.b16 %v253
    %v975 = vunpack.c.l.b16 %v254
    %v976 = vunpack.c.h.b16 %v254
    %v977 = vunpack.c.l.b16 %v255
    %v978 = vunpack.c.h.b16 %v255
    %v979 = vunpack.c.l.b16 %v256
    %v980 = vunpack.c.h.b16 %v256
    %v981 = vunpack.c.l.b16 %v257
    %v982 = vunpack.c.h.b16 %v257
    %v983 = vunpack.c.l.b16 %v258
    %v984 = vunpack.c.h.b16 %v258
    %v985 = vunpack.c.l.b16 %v259
    %v986 = vunpack.c.h.b16 %v259
    %v987 = vunpack.c.l.b16 %v260
    %v988 = vunpack.c.h.b16 %v260
    %v989 = vunpack.c.l.b16 %v261
    %v990 = vunpack.c.h.b16 %v261
    %v991 = vunpack.c.l.b16 %v262
    %v992 = vunpack.c.h.b16 %v262
    %v993 = vunpack.c.l.b16 %v263
    %v994 = vunpack.c.h.b16 %v263
    %v995 = vunpack.c.l.b16 %v264
    %v996 = vunpack.c.h.b16 %v264
    %v997 = vunpack.c.l.b16 %v265
    %v998 = vunpack.c.h.b16 %v265
    %v999 = vunpack.c.l.b16 %v266
    %v1000 = vunpack.c.h.b16 %v266
    %v1001 = vunpack.c.l.b16 %v267
    %v1002 = vunpack.c.h.b16 %v267
    %v1003 = vunpack.c.l.b16 %v268
    %v1004 = vunpack.c.h.b16 %v268
    %v1005 = vunpack.c.l.b16 %v269
    %v1006 = vunpack.c.h.b16 %v269
    %v1007 = vunpack.c.l.b16 %v270
    %v1008 = vunpack.c.h.b16 %v270
    %v1009 = vunpack.c.l.b16 %v271
    %v1010 = vunpack.c.h.b16 %v271
    %v1011 = vunpack.c.l.b16 %v272
    %v1012 = vunpack.c.h.b16 %v272
    %v1013 = vunpack.c.l.b16 %v273
    %v1014 = vunpack.c.h.b16 %v273
    %v1015 = vunpack.c.l.b16 %v274
    %v1016 = vunpack.c.h.b16 %v274
    %v1017 = vunpack.c.l.b16 %v275
    %v1018 = vunpack.c.h.b16 %v275
    %v1019 = vunpack.c.l.b16 %v276
    %v1020 = vunpack.c.h.b16 %v276
    %v1021 = vunpack.c.l.b16 %v277
    %v1022 = vunpack.c.h.b16 %v277
    %v1023 = vunpack.c.l.b16 %v278
    %v1024 = vunpack.c.h.b16 %v278
    %v1025 = vunpack.c.l.b16 %v279
    %v1026 = vunpack.c.h.b16 %v279
    %v1027 = vunpack.c.l.b16 %v280
    %v1028 = vunpack.c.h.b16 %v280
    %v1029 = vunpack.c.l.b16 %v281
    %v1030 = vunpack.c.h.b16 %v281
    %v1031 = vunpack.c.l.b16 %v282
    %v1032 = vunpack.c.h.b16 %v282
    %v1033 = vunpack.c.l.b16 %v283
    %v1034 = vunpack.c.h.b16 %v283
    %v1035 = vunpack.c.l.b16 %v284
    %v1036 = vunpack.c.h.b16 %v284
    %v1037 = vunpack.c.l.b16 %v285
    %v1038 = vunpack.c.h.b16 %v285
    %v1039 = vunpack.c.l.b16 %v286
    %v1040 = vunpack.c.h.b16 %v286
    %v1041 = vunpack.c.l.b16 %v287
    %v1042 = vunpack.c.h.b16 %v287
    %v1043 = vunpack.c.l.b16 %v288
    %v1044 = vunpack.c.h.b16 %v288
    %v1045 = vunpack.c.l.b16 %v289
    %v1046 = vunpack.c.h.b16 %v289
    %v1047 = vunpack.c.l.b16 %v290
    %v1048 = vunpack.c.h.b16 %v290
    %v1049 = vunpack.c.l.b16 %v291
    %v1050 = vunpack.c.h.b16 %v291
    %v1051 = vunpack.c.l.b16 %v292
    %v1052 = vunpack.c.h.b16 %v292
    %v1053 = vunpack.c.l.b16 %v293
    %v1054 = vunpack.c.h.b16 %v293
    %v1055 = vunpack.c.l.b16 %v294
    %v1056 = vunpack.c.h.b16 %v294
    %v1057 = vunpack.c.l.b16 %v295
    %v1058 = vunpack.c.h.b16 %v295
    %v1059 = vunpack.c.l.b16 %v296
    %v1060 = vunpack.c.h.b16 %v296
    %v1061 = vunpack.c.l.b16 %v297
    %v1062 = vunpack.c.h.b16 %v297
    %v1063 = vunpack.c.l.b16 %v298
    %v1064 = vunpack.c.h.b16 %v298
    %v1065 = vunpack.c.l.b16 %v299
    %v1066 = vunpack.c.h.b16 %v299
    %v1067 = vunpack.c.l.b16 %v300
    %v1068 = vunpack.c.h.b16 %v300
    %v1069 = vunpack.c.l.b16 %v301
    %v1070 = vunpack.c.h.b16 %v301
    %v1071 = vunpack.c.l.b16 %v302
    %v1072 = vunpack.c.h.b16 %v302
    %v1073 = vunpack.c.l.b16 %v303
    %v1074 = vunpack.c.h.b16 %v303
    %v1075 = vunpack.c.l.b16 %v304
    %v1076 = vunpack.c.h.b16 %v304
    %v1077 = vunpack.c.l.b16 %v305
    %v1078 = vunpack.c.h.b16 %v305
    %v1079 = vunpack.c.l.b16 %v306
    %v1080 = vunpack.c.h.b16 %v306
    %v1081 = vunpack.c.l.b16 %v307
    %v1082 = vunpack.c.h.b16 %v307
    %v1083 = vunpack.c.l.b16 %v308
    %v1084 = vunpack.c.h.b16 %v308
    %v1085 = vunpack.c.l.b16 %v309
    %v1086 = vunpack.c.h.b16 %v309
    %v1087 = vunpack.c.l.b16 %v310
    %v1088 = vunpack.c.h.b16 %v310
    %v1089 = vpack.c.b16 %v581, %v577
    %v1090 = vpack.c.b16 %v582, %v578
    %v1091 = vpack.c.b16 %v583, %v579
    %v1092 = vpack.c.b16 %v584, %v580
    %v1093 = vpack.c.b16 %v589, %v585
    %v1094 = vpack.c.b16 %v590, %v586
    %v1095 = vpack.c.b16 %v591, %v587
    %v1096 = vpack.c.b16 %v592, %v588
    %v1097 = vpack.c.b16 %v597, %v593
    %v1098 = vpack.c.b16 %v598, %v594
    %v1099 = vpack.c.b16 %v599, %v595
    %v1100 = vpack.c.b16 %v600, %v596
    %v1101 = vpack.c.b16 %v605, %v601
    %v1102 = vpack.c.b16 %v606, %v602
    %v1103 = vpack.c.b16 %v607, %v603
    %v1104 = vpack.c.b16 %v608, %v604
    %v1105 = vpack.c.b16 %v613, %v609
    %v1106 = vpack.c.b16 %v614, %v610
    %v1107 = vpack.c.b16 %v615, %v611
    %v1108 = vpack.c.b16 %v616, %v612
    %v1109 = vpack.c.b16 %v621, %v617
    %v1110 = vpack.c.b16 %v622, %v618
    %v1111 = vpack.c.b16 %v623, %v619
    %v1112 = vpack.c.b16 %v624, %v620
    %v1113 = vpack.c.b16 %v629, %v625
    %v1114 = vpack.c.b16 %v630, %v626
    %v1115 = vpack.c.b16 %v631, %v627
    %v1116 = vpack.c.b16 %v632, %v628
    %v1117 = vpack.c.b16 %v637, %v633
    %v1118 = vpack.c.b16 %v638, %v634
    %v1119 = vpack.c.b16 %v639, %v635
    %v1120 = vpack.c.b16 %v640, %v636
    %v1121 = vpack.c.b16 %v645, %v641
    %v1122 = vpack.c.b16 %v646, %v642
    %v1123 = vpack.c.b16 %v647, %v643
    %v1124 = vpack.c.b16 %v648, %v644
    %v1125 = vpack.c.b16 %v653, %v649
    %v1126 = vpack.c.b16 %v654, %v650
    %v1127 = vpack.c.b16 %v655, %v651
    %v1128 = vpack.c.b16 %v656, %v652
    %v1129 = vpack.c.b16 %v661, %v657
    %v1130 = vpack.c.b16 %v662, %v658
    %v1131 = vpack.c.b16 %v663, %v659
    %v1132 = vpack.c.b16 %v664, %v660
    %v1133 = vpack.c.b16 %v669, %v665
    %v1134 = vpack.c.b16 %v670, %v666
    %v1135 = vpack.c.b16 %v671, %v667
    %v1136 = vpack.c.b16 %v672, %v668
    %v1137 = vpack.c.b16 %v677, %v673
    %v1138 = vpack.c.b16 %v678, %v674
    %v1139 = vpack.c.b16 %v679, %v675
    %v1140 = vpack.c.b16 %v680, %v676
    %v1141 = vpack.c.b16 %v685, %v681
    %v1142 = vpack.c.b16 %v686, %v682
    %v1143 = vpack.c.b16 %v687, %v683
    %v1144 = vpack.c.b16 %v688, %v684
    %v1145 = vpack.c.b16 %v693, %v689
    %v1146 = vpack.c.b16 %v694, %v690
    %v1147 = vpack.c.b16 %v695, %v691
    %v1148 = vpack.c.b16 %v696, %v692
    %v1149 = vpack.c.b16 %v701, %v697
    %v1150 = vpack.c.b16 %v702, %v698
    %v1151 = vpack.c.b16 %v703, %v699
    %v1152 = vpack.c.b16 %v704, %v700
    %v1153 = vpack.c.b16 %v709, %v705
    %v1154 = vpack.c.b16 %v710, %v706
    %v1155 = vpack.c.b16 %v711, %v707
    %v1156 = vpack.c.b16 %v712, %v708
    %v1157 = vpack.c.b16 %v717, %v713
    %v1158 = vpack.c.b16 %v718, %v714
    %v1159 = vpack.c.b16 %v719, %v715
    %v1160 = vpack.c.b16 %v720, %v716
    %v1161 = vpack.c.b16 %v725, %v721
    %v1162 = vpack.c.b16 %v726, %v722
    %v1163 = vpack.c.b16 %v727, %v723
    %v1164 = vpack.c.b16 %v728, %v724
    %v1165 = vpack.c.b16 %v733, %v729
    %v1166 = vpack.c.b16 %v734, %v730
    %v1167 = vpack.c.b16 %v735, %v731
    %v1168 = vpack.c.b16 %v736, %v732
    %v1169 = vpack.c.b16 %v741, %v737
    %v1170 = vpack.c.b16 %v742, %v738
    %v1171 = vpack.c.b16 %v743, %v739
    %v1172 = vpack.c.b16 %v744, %v740
    %v1173 = vpack.c.b16 %v749, %v745
    %v1174 = vpack.c.b16 %v750, %v746
    %v1175 = vpack.c.b16 %v751, %v747
    %v1176 = vpack.c.b16 %v752, %v748
    %v1177 = vpack.c.b16 %v757, %v753
    %v1178 = vpack.c.b16 %v758, %v754
    %v1179 = vpack.c.b16 %v759, %v755
    %v1180 = vpack.c.b16 %v760, %v756
    %v1181 = vpack.c.b16 %v765, %v761
    %v1182 = vpack.c.b16 %v766, %v762
    %v1183 = vpack.c.b16 %v767, %v763
    %v1184 = vpack.c.b16 %v768, %v764
    %v1185 = vpack.c.b16 %v773, %v769
    %v1186 = vpack.c.b16 %v774, %v770
    %v1187 = vpack.c.b16 %v775, %v771
    %v1188 = vpack.c.b16 %v776, %v772
    %v1189 = vpack.c.b16 %v781, %v777
    %v1190 = vpack.c.b16 %v782, %v778
    %v1191 = vpack.c.b16 %v783, %v779
    %v1192 = vpack.c.b16 %v784, %v780
    %v1193 = vpack.c.b16 %v789, %v785
    %v1194 = vpack.c.b16 %v790, %v786
    %v1195 = vpack.c.b16 %v791, %v787
    %v1196 = vpack.c.b16 %v792, %v788
    %v1197 = vpack.c.b16 %v797, %v793
    %v1198 = vpack.c.b16 %v798, %v794
    %v1199 = vpack.c.b16 %v799, %v795
    %v1200 = vpack.c.b16 %v800, %v796
    %v1201 = vpack.c.b16 %v805, %v801
    %v1202 = vpack.c.b16 %v806, %v802
    %v1203 = vpack.c.b16 %v807, %v803
    %v1204 = vpack.c.b16 %v808, %v804
    %v1205 = vpack.c.b16 %v813, %v809
    %v1206 = vpack.c.b16 %v814, %v810
    %v1207 = vpack.c.b16 %v815, %v811
    %v1208 = vpack.c.b16 %v816, %v812
    %v1209 = vpack.c.b16 %v821, %v817
    %v1210 = vpack.c.b16 %v822, %v818
    %v1211 = vpack.c.b16 %v823, %v819
    %v1212 = vpack.c.b16 %v824, %v820
    %v1213 = vpack.c.b16 %v829, %v825
    %v1214 = vpack.c.b16 %v830, %v826
    %v1215 = vpack.c.b16 %v831, %v827
    %v1216 = vpack.c.b16 %v832, %v828
    %v1217 = vpack.c.b16 %v837, %v833
    %v1218 = vpack.c.b16 %v838, %v834
    %v1219 = vpack.c.b16 %v839, %v835
    %v1220 = vpack.c.b16 %v840, %v836
    %v1221 = vpack.c.b16 %v845, %v841
    %v1222 = vpack.c.b16 %v846, %v842
    %v1223 = vpack.c.b16 %v847, %v843
    %v1224 = vpack.c.b16 %v848, %v844
    %v1225 = vpack.c.b16 %v853, %v849
    %v1226 = vpack.c.b16 %v854, %v850
    %v1227 = vpack.c.b16 %v855, %v851
    %v1228 = vpack.c.b16 %v856, %v852
    %v1229 = vpack.c.b16 %v861, %v857
    %v1230 = vpack.c.b16 %v862, %v858
    %v1231 = vpack.c.b16 %v863, %v859
    %v1232 = vpack.c.b16 %v864, %v860
    %v1233 = vpack.c.b16 %v869, %v865
    %v1234 = vpack.c.b16 %v870, %v866
    %v1235 = vpack.c.b16 %v871, %v867
    %v1236 = vpack.c.b16 %v872, %v868
    %v1237 = vpack.c.b16 %v877, %v873
    %v1238 = vpack.c.b16 %v878, %v874
    %v1239 = vpack.c.b16 %v879, %v875
    %v1240 = vpack.c.b16 %v880, %v876
    %v1241 = vpack.c.b16 %v885, %v881
    %v1242 = vpack.c.b16 %v886, %v882
    %v1243 = vpack.c.b16 %v887, %v883
    %v1244 = vpack.c.b16 %v888, %v884
    %v1245 = vpack.c.b16 %v893, %v889
    %v1246 = vpack.c.b16 %v894, %v890
    %v1247 = vpack.c.b16 %v895, %v891
    %v1248 = vpack.c.b16 %v896, %v892
    %v1249 = vpack.c.b16 %v901, %v897
    %v1250 = vpack.c.b16 %v902, %v898
    %v1251 = vpack.c.b16 %v903, %v899
    %v1252 = vpack.c.b16 %v904, %v900
    %v1253 = vpack.c.b16 %v909, %v905
    %v1254 = vpack.c.b16 %v910, %v906
    %v1255 = vpack.c.b16 %v911, %v907
    %v1256 = vpack.c.b16 %v912, %v908
    %v1257 = vpack.c.b16 %v917, %v913
    %v1258 = vpack.c.b16 %v918, %v914
    %v1259 = vpack.c.b16 %v919, %v915
    %v1260 = vpack.c.b16 %v920, %v916
    %v1261 = vpack.c.b16 %v925, %v921
    %v1262 = vpack.c.b16 %v926, %v922
    %v1263 = vpack.c.b16 %v927, %v923
    %v1264 = vpack.c.b16 %v928, %v924
    %v1265 = vpack.c.b16 %v933, %v929
    %v1266 = vpack.c.b16 %v934, %v930
    %v1267 = vpack.c.b16 %v935, %v931
    %v1268 = vpack.c.b16 %v936, %v932
    %v1269 = vpack.c.b16 %v941, %v937
    %v1270 = vpack.c.b16 %v942, %v938
    %v1271 = vpack.c.b16 %v943, %v939
    %v1272 = vpack.c.b16 %v944, %v940
    %v1273 = vpack.c.b16 %v949, %v945
    %v1274 = vpack.c.b16 %v950, %v946
    %v1275 = vpack.c.b16 %v951, %v947
    %v1276 = vpack.c.b16 %v952, %v948
    %v1277 = vpack.c.b16 %v957, %v953
    %v1278 = vpack.c.b16 %v958, %v954
    %v1279 = vpack.c.b16 %v959, %v955
    %v1280 = vpack.c.b16 %v960, %v956
    %v1281 = vpack.c.b16 %v965, %v961
    %v1282 = vpack.c.b16 %v966, %v962
    %v1283 = vpack.c.b16 %v967, %v963
    %v1284 = vpack.c.b16 %v968, %v964
    %v1285 = vpack.c.b16 %v973, %v969
    %v1286 = vpack.c.b16 %v974, %v970
    %v1287 = vpack.c.b16 %v975, %v971
    %v1288 = vpack.c.b16 %v976, %v972
    %v1289 = vpack.c.b16 %v981, %v977
    %v1290 = vpack.c.b16 %v982, %v978
    %v1291 = vpack.c.b16 %v983, %v979
    %v1292 = vpack.c.b16 %v984, %v980
    %v1293 = vpack.c.b16 %v989, %v985
    %v1294 = vpack.c.b16 %v990, %v986
    %v1295 = vpack.c.b16 %v991, %v987
    %v1296 = vpack.c.b16 %v992, %v988
    %v1297 = vpack.c.b16 %v997, %v993
    %v1298 = vpack.c.b16 %v998, %v994
    %v1299 = vpack.c.b16 %v999, %v995
    %v1300 = vpack.c.b16 %v1000, %v996
    %v1301 = vpack.c.b16 %v1005, %v1001
    %v1302 = vpack.c.b16 %v1006, %v1002
    %v1303 = vpack.c.b16 %v1007, %v1003
    %v1304 = vpack.c.b16 %v1008, %v1004
    %v1305 = vpack.c.b16 %v1013, %v1009
    %v1306 = vpack.c.b16 %v1014, %v1010
    %v1307 = vpack.c.b16 %v1015, %v1011
    %v1308 = vpack.c.b16 %v1016, %v1012
    %v1309 = vpack.c.b16 %v1021, %v1017
    %v1310 = vpack.c.b16 %v1022, %v1018
    %v1311 = vpack.c.b16 %v1023, %v1019
    %v1312 = vpack.c.b16 %v1024, %v1020
    %v1313 = vpack.c.b16 %v1029, %v1025
    %v1314 = vpack.c.b16 %v1030, %v1026
    %v1315 = vpack.c.b16 %v1031, %v1027
    %v1316 = vpack.c.b16 %v1032, %v1028
    %v1317 = vpack.c.b16 %v1037, %v1033
    %v1318 = vpack.c.b16 %v1038, %v1034
    %v1319 = vpack.c.b16 %v1039, %v1035
    %v1320 = vpack.c.b16 %v1040, %v1036
    %v1321 = vpack.c.b16 %v1045, %v1041
    %v1322 = vpack.c.b16 %v1046, %v1042
    %v1323 = vpack.c.b16 %v1047, %v1043
    %v1324 = vpack.c.b16 %v1048, %v1044
    %v1325 = vpack.c.b16 %v1053, %v1049
    %v1326 = vpack.c.b16 %v1054, %v1050
    %v1327 = vpack.c.b16 %v1055, %v1051
    %v1328 = vpack.c.b16 %v1056, %v1052
    %v1329 = vpack.c.b16 %v1061, %v1057
    %v1330 = vpack.c.b16 %v1062, %v1058
    %v1331 = vpack.c.b16 %v1063, %v1059
    %v1332 = vpack.c.b16 %v1064, %v1060
    %v1333 = vpack.c.b16 %v1069, %v1065
    %v1334 = vpack.c.b16 %v1070, %v1066
    %v1335 = vpack.c.b16 %v1071, %v1067
    %v1336 = vpack.c.b16 %v1072, %v1068
    %v1337 = vpack.c.b16 %v1077, %v1073
    %v1338 = vpack.c.b16 %v1078, %v1074
    %v1339 = vpack.c.b16 %v1079, %v1075
    %v1340 = vpack.c.b16 %v1080, %v1076
    %v1341 = vpack.c.b16 %v1085, %v1081
    %v1342 = vpack.c.b16 %v1086, %v1082
    %v1343 = vpack.c.b16 %v1087, %v1083
    %v1344 = vpack.c.b16 %v1088, %v1084
    %1601 = vmatpush.bf16.msra.mxu0 %v1117
    %1602 = vmatpush.bf16.msra.mxu0 %v1113
    %1603 = vmatpush.bf16.msra.mxu0 %v1109
    %1604 = vmatpush.bf16.msra.mxu0 %v1105
    %1605 = vmatpush.bf16.msra.mxu0 %v1101
    %1606 = vmatpush.bf16.msra.mxu0 %v1097
    %1607 = vmatpush.bf16.msra.mxu0 %v1093
    %1608 = vmatpush.bf16.msra.mxu0 %v1089
    %1609 = vmatmul.bf16.gmra.mxu0 %v47
    %v1610 = vpop.f32.mrf.mxu0
    %v1611 = vadd.f32 %v313, %v1610
    %v1612 = vpop.f32.mrf.mxu0
    %1613 = vdwg.mxu0
    %1614 = vmatpush.bf16.msra.mxu0 %v1149
    %1615 = vmatpush.bf16.msra.mxu0 %v1145
    %1616 = vmatpush.bf16.msra.mxu0 %v1141
    %1617 = vmatpush.bf16.msra.mxu0 %v1137
    %1618 = vmatpush.bf16.msra.mxu0 %v1133
    %1619 = vmatpush.bf16.msra.mxu0 %v1129
    %1620 = vmatpush.bf16.msra.mxu0 %v1125
    %1621 = vmatpush.bf16.msra.mxu0 %v1121
    %1622 = vmatmul.bf16.gmra.mxu0 %v48
    %v1623 = vpop.f32.mrf.mxu0
    %v1624 = vadd.f32 %v1611, %v1623
    %v1625 = vpop.f32.mrf.mxu0
    %1626 = vdwg.mxu0
    %1627 = vmatpush.bf16.msra.mxu0 %v1181
    %1628 = vmatpush.bf16.msra.mxu0 %v1177
    %1629 = vmatpush.bf16.msra.mxu0 %v1173
    %1630 = vmatpush.bf16.msra.mxu0 %v1169
    %1631 = vmatpush.bf16.msra.mxu0 %v1165
    %1632 = vmatpush.bf16.msra.mxu0 %v1161
    %1633 = vmatpush.bf16.msra.mxu0 %v1157
    %1634 = vmatpush.bf16.msra.mxu0 %v1153
    %1635 = vmatmul.bf16.gmra.mxu0 %v49
    %v1636 = vpop.f32.mrf.mxu0
    %v1637 = vadd.f32 %v1624, %v1636
    %v1638 = vpop.f32.mrf.mxu0
    %1639 = vdwg.mxu0
    %1640 = vmatpush.bf16.msra.mxu0 %v1213
    %1641 = vmatpush.bf16.msra.mxu0 %v1209
    %1642 = vmatpush.bf16.msra.mxu0 %v1205
    %1643 = vmatpush.bf16.msra.mxu0 %v1201
    %1644 = vmatpush.bf16.msra.mxu0 %v1197
    %1645 = vmatpush.bf16.msra.mxu0 %v1193
    %1646 = vmatpush.bf16.msra.mxu0 %v1189
    %1647 = vmatpush.bf16.msra.mxu0 %v1185
    %1648 = vmatmul.bf16.gmra.mxu0 %v50
    %v1649 = vpop.f32.mrf.mxu0
    %v1650 = vadd.f32 %v1637, %v1649
    %v1651 = vpop.f32.mrf.mxu0
    %1652 = vdwg.mxu0
    %1653 = vmatpush.bf16.msra.mxu0 %v1245
    %1654 = vmatpush.bf16.msra.mxu0 %v1241
    %1655 = vmatpush.bf16.msra.mxu0 %v1237
    %1656 = vmatpush.bf16.msra.mxu0 %v1233
    %1657 = vmatpush.bf16.msra.mxu0 %v1229
    %1658 = vmatpush.bf16.msra.mxu0 %v1225
    %1659 = vmatpush.bf16.msra.mxu0 %v1221
    %1660 = vmatpush.bf16.msra.mxu0 %v1217
    %1661 = vmatmul.bf16.gmra.mxu0 %v51
    %v1662 = vpop.f32.mrf.mxu0
    %v1663 = vadd.f32 %v1650, %v1662
    %v1664 = vpop.f32.mrf.mxu0
    %1665 = vdwg.mxu0
    %1666 = vmatpush.bf16.msra.mxu0 %v1277
    %1667 = vmatpush.bf16.msra.mxu0 %v1273
    %1668 = vmatpush.bf16.msra.mxu0 %v1269
    %1669 = vmatpush.bf16.msra.mxu0 %v1265
    %1670 = vmatpush.bf16.msra.mxu0 %v1261
    %1671 = vmatpush.bf16.msra.mxu0 %v1257
    %1672 = vmatpush.bf16.msra.mxu0 %v1253
    %1673 = vmatpush.bf16.msra.mxu0 %v1249
    %1674 = vmatmul.bf16.gmra.mxu0 %v52
    %v1675 = vpop.f32.mrf.mxu0
    %v1676 = vadd.f32 %v1663, %v1675
    %v1677 = vpop.f32.mrf.mxu0
    %1678 = vdwg.mxu0
    %1679 = vmatpush.bf16.msra.mxu0 %v1309
    %1680 = vmatpush.bf16.msra.mxu0 %v1305
    %1681 = vmatpush.bf16.msra.mxu0 %v1301
    %1682 = vmatpush.bf16.msra.mxu0 %v1297
    %1683 = vmatpush.bf16.msra.mxu0 %v1293
    %1684 = vmatpush.bf16.msra.mxu0 %v1289
    %1685 = vmatpush.bf16.msra.mxu0 %v1285
    %1686 = vmatpush.bf16.msra.mxu0 %v1281
    %1687 = vmatmul.bf16.gmra.mxu0 %v53
    %v1688 = vpop.f32.mrf.mxu0
    %v1689 = vadd.f32 %v1676, %v1688
    %v1690 = vpop.f32.mrf.mxu0
    %1691 = vdwg.mxu0
    %1692 = vmatpush.bf16.msra.mxu0 %v1341
    %1693 = vmatpush.bf16.msra.mxu0 %v1337
    %1694 = vmatpush.bf16.msra.mxu0 %v1333
    %1695 = vmatpush.bf16.msra.mxu0 %v1329
    %1696 = vmatpush.bf16.msra.mxu0 %v1325
    %1697 = vmatpush.bf16.msra.mxu0 %v1321
    %1698 = vmatpush.bf16.msra.mxu0 %v1317
    %1699 = vmatpush.bf16.msra.mxu0 %v1313
    %1700 = vmatmul.bf16.gmra.mxu0 %v54
    %v1701 = vpop.f32.mrf.mxu0
    %v1702 = vadd.f32 %v1689, %v1701
    %v1703 = vpop.f32.mrf.mxu0
    %1704 = vdwg.mxu0
    %1705 = vmatpush.bf16.msra.mxu0 %v1118
    %1706 = vmatpush.bf16.msra.mxu0 %v1114
    %1707 = vmatpush.bf16.msra.mxu0 %v1110
    %1708 = vmatpush.bf16.msra.mxu0 %v1106
    %1709 = vmatpush.bf16.msra.mxu0 %v1102
    %1710 = vmatpush.bf16.msra.mxu0 %v1098
    %1711 = vmatpush.bf16.msra.mxu0 %v1094
    %1712 = vmatpush.bf16.msra.mxu0 %v1090
    %1713 = vmatmul.bf16.gmra.mxu0 %v47
    %v1714 = vpop.f32.mrf.mxu0
    %v1715 = vadd.f32 %v314, %v1714
    %v1716 = vpop.f32.mrf.mxu0
    %1717 = vdwg.mxu0
    %1718 = vmatpush.bf16.msra.mxu0 %v1150
    %1719 = vmatpush.bf16.msra.mxu0 %v1146
    %1720 = vmatpush.bf16.msra.mxu0 %v1142
    %1721 = vmatpush.bf16.msra.mxu0 %v1138
    %1722 = vmatpush.bf16.msra.mxu0 %v1134
    %1723 = vmatpush.bf16.msra.mxu0 %v1130
    %1724 = vmatpush.bf16.msra.mxu0 %v1126
    %1725 = vmatpush.bf16.msra.mxu0 %v1122
    %1726 = vmatmul.bf16.gmra.mxu0 %v48
    %v1727 = vpop.f32.mrf.mxu0
    %v1728 = vadd.f32 %v1715, %v1727
    %v1729 = vpop.f32.mrf.mxu0
    %1730 = vdwg.mxu0
    %1731 = vmatpush.bf16.msra.mxu0 %v1182
    %1732 = vmatpush.bf16.msra.mxu0 %v1178
    %1733 = vmatpush.bf16.msra.mxu0 %v1174
    %1734 = vmatpush.bf16.msra.mxu0 %v1170
    %1735 = vmatpush.bf16.msra.mxu0 %v1166
    %1736 = vmatpush.bf16.msra.mxu0 %v1162
    %1737 = vmatpush.bf16.msra.mxu0 %v1158
    %1738 = vmatpush.bf16.msra.mxu0 %v1154
    %1739 = vmatmul.bf16.gmra.mxu0 %v49
    %v1740 = vpop.f32.mrf.mxu0
    %v1741 = vadd.f32 %v1728, %v1740
    %v1742 = vpop.f32.mrf.mxu0
    %1743 = vdwg.mxu0
    %1744 = vmatpush.bf16.msra.mxu0 %v1214
    %1745 = vmatpush.bf16.msra.mxu0 %v1210
    %1746 = vmatpush.bf16.msra.mxu0 %v1206
    %1747 = vmatpush.bf16.msra.mxu0 %v1202
    %1748 = vmatpush.bf16.msra.mxu0 %v1198
    %1749 = vmatpush.bf16.msra.mxu0 %v1194
    %1750 = vmatpush.bf16.msra.mxu0 %v1190
    %1751 = vmatpush.bf16.msra.mxu0 %v1186
    %1752 = vmatmul.bf16.gmra.mxu0 %v50
    %v1753 = vpop.f32.mrf.mxu0
    %v1754 = vadd.f32 %v1741, %v1753
    %v1755 = vpop.f32.mrf.mxu0
    %1756 = vdwg.mxu0
    %1757 = vmatpush.bf16.msra.mxu0 %v1246
    %1758 = vmatpush.bf16.msra.mxu0 %v1242
    %1759 = vmatpush.bf16.msra.mxu0 %v1238
    %1760 = vmatpush.bf16.msra.mxu0 %v1234
    %1761 = vmatpush.bf16.msra.mxu0 %v1230
    %1762 = vmatpush.bf16.msra.mxu0 %v1226
    %1763 = vmatpush.bf16.msra.mxu0 %v1222
    %1764 = vmatpush.bf16.msra.mxu0 %v1218
    %1765 = vmatmul.bf16.gmra.mxu0 %v51
    %v1766 = vpop.f32.mrf.mxu0
    %v1767 = vadd.f32 %v1754, %v1766
    %v1768 = vpop.f32.mrf.mxu0
    %1769 = vdwg.mxu0
    %1770 = vmatpush.bf16.msra.mxu0 %v1278
    %1771 = vmatpush.bf16.msra.mxu0 %v1274
    %1772 = vmatpush.bf16.msra.mxu0 %v1270
    %1773 = vmatpush.bf16.msra.mxu0 %v1266
    %1774 = vmatpush.bf16.msra.mxu0 %v1262
    %1775 = vmatpush.bf16.msra.mxu0 %v1258
    %1776 = vmatpush.bf16.msra.mxu0 %v1254
    %1777 = vmatpush.bf16.msra.mxu0 %v1250
    %1778 = vmatmul.bf16.gmra.mxu0 %v52
    %v1779 = vpop.f32.mrf.mxu0
    %v1780 = vadd.f32 %v1767, %v1779
    %v1781 = vpop.f32.mrf.mxu0
    %1782 = vdwg.mxu0
    %1783 = vmatpush.bf16.msra.mxu0 %v1310
    %1784 = vmatpush.bf16.msra.mxu0 %v1306
    %1785 = vmatpush.bf16.msra.mxu0 %v1302
    %1786 = vmatpush.bf16.msra.mxu0 %v1298
    %1787 = vmatpush.bf16.msra.mxu0 %v1294
    %1788 = vmatpush.bf16.msra.mxu0 %v1290
    %1789 = vmatpush.bf16.msra.mxu0 %v1286
    %1790 = vmatpush.bf16.msra.mxu0 %v1282
    %1791 = vmatmul.bf16.gmra.mxu0 %v53
    %v1792 = vpop.f32.mrf.mxu0
    %v1793 = vadd.f32 %v1780, %v1792
    %v1794 = vpop.f32.mrf.mxu0
    %1795 = vdwg.mxu0
    %1796 = vmatpush.bf16.msra.mxu0 %v1342
    %1797 = vmatpush.bf16.msra.mxu0 %v1338
    %1798 = vmatpush.bf16.msra.mxu0 %v1334
    %1799 = vmatpush.bf16.msra.mxu0 %v1330
    %1800 = vmatpush.bf16.msra.mxu0 %v1326
    %1801 = vmatpush.bf16.msra.mxu0 %v1322
    %1802 = vmatpush.bf16.msra.mxu0 %v1318
    %1803 = vmatpush.bf16.msra.mxu0 %v1314
    %1804 = vmatmul.bf16.gmra.mxu0 %v54
    %v1805 = vpop.f32.mrf.mxu0
    %v1806 = vadd.f32 %v1793, %v1805
    %v1807 = vpop.f32.mrf.mxu0
    %1808 = vdwg.mxu0
    %1809 = vmatpush.bf16.msra.mxu0 %v1119
    %1810 = vmatpush.bf16.msra.mxu0 %v1115
    %1811 = vmatpush.bf16.msra.mxu0 %v1111
    %1812 = vmatpush.bf16.msra.mxu0 %v1107
    %1813 = vmatpush.bf16.msra.mxu0 %v1103
    %1814 = vmatpush.bf16.msra.mxu0 %v1099
    %1815 = vmatpush.bf16.msra.mxu0 %v1095
    %1816 = vmatpush.bf16.msra.mxu0 %v1091
    %1817 = vmatmul.bf16.gmra.mxu0 %v47
    %v1818 = vpop.f32.mrf.mxu0
    %v1819 = vadd.f32 %v315, %v1818
    %v1820 = vpop.f32.mrf.mxu0
    %1821 = vdwg.mxu0
    %1822 = vmatpush.bf16.msra.mxu0 %v1151
    %1823 = vmatpush.bf16.msra.mxu0 %v1147
    %1824 = vmatpush.bf16.msra.mxu0 %v1143
    %1825 = vmatpush.bf16.msra.mxu0 %v1139
    %1826 = vmatpush.bf16.msra.mxu0 %v1135
    %1827 = vmatpush.bf16.msra.mxu0 %v1131
    %1828 = vmatpush.bf16.msra.mxu0 %v1127
    %1829 = vmatpush.bf16.msra.mxu0 %v1123
    %1830 = vmatmul.bf16.gmra.mxu0 %v48
    %v1831 = vpop.f32.mrf.mxu0
    %v1832 = vadd.f32 %v1819, %v1831
    %v1833 = vpop.f32.mrf.mxu0
    %1834 = vdwg.mxu0
    %1835 = vmatpush.bf16.msra.mxu0 %v1183
    %1836 = vmatpush.bf16.msra.mxu0 %v1179
    %1837 = vmatpush.bf16.msra.mxu0 %v1175
    %1838 = vmatpush.bf16.msra.mxu0 %v1171
    %1839 = vmatpush.bf16.msra.mxu0 %v1167
    %1840 = vmatpush.bf16.msra.mxu0 %v1163
    %1841 = vmatpush.bf16.msra.mxu0 %v1159
    %1842 = vmatpush.bf16.msra.mxu0 %v1155
    %1843 = vmatmul.bf16.gmra.mxu0 %v49
    %v1844 = vpop.f32.mrf.mxu0
    %v1845 = vadd.f32 %v1832, %v1844
    %v1846 = vpop.f32.mrf.mxu0
    %1847 = vdwg.mxu0
    %1848 = vmatpush.bf16.msra.mxu0 %v1215
    %1849 = vmatpush.bf16.msra.mxu0 %v1211
    %1850 = vmatpush.bf16.msra.mxu0 %v1207
    %1851 = vmatpush.bf16.msra.mxu0 %v1203
    %1852 = vmatpush.bf16.msra.mxu0 %v1199
    %1853 = vmatpush.bf16.msra.mxu0 %v1195
    %1854 = vmatpush.bf16.msra.mxu0 %v1191
    %1855 = vmatpush.bf16.msra.mxu0 %v1187
    %1856 = vmatmul.bf16.gmra.mxu0 %v50
    %v1857 = vpop.f32.mrf.mxu0
    %v1858 = vadd.f32 %v1845, %v1857
    %v1859 = vpop.f32.mrf.mxu0
    %1860 = vdwg.mxu0
    %1861 = vmatpush.bf16.msra.mxu0 %v1247
    %1862 = vmatpush.bf16.msra.mxu0 %v1243
    %1863 = vmatpush.bf16.msra.mxu0 %v1239
    %1864 = vmatpush.bf16.msra.mxu0 %v1235
    %1865 = vmatpush.bf16.msra.mxu0 %v1231
    %1866 = vmatpush.bf16.msra.mxu0 %v1227
    %1867 = vmatpush.bf16.msra.mxu0 %v1223
    %1868 = vmatpush.bf16.msra.mxu0 %v1219
    %1869 = vmatmul.bf16.gmra.mxu0 %v51
    %v1870 = vpop.f32.mrf.mxu0
    %v1871 = vadd.f32 %v1858, %v1870
    %v1872 = vpop.f32.mrf.mxu0
    %1873 = vdwg.mxu0
    %1874 = vmatpush.bf16.msra.mxu0 %v1279
    %1875 = vmatpush.bf16.msra.mxu0 %v1275
    %1876 = vmatpush.bf16.msra.mxu0 %v1271
    %1877 = vmatpush.bf16.msra.mxu0 %v1267
    %1878 = vmatpush.bf16.msra.mxu0 %v1263
    %1879 = vmatpush.bf16.msra.mxu0 %v1259
    %1880 = vmatpush.bf16.msra.mxu0 %v1255
    %1881 = vmatpush.bf16.msra.mxu0 %v1251
    %1882 = vmatmul.bf16.gmra.mxu0 %v52
    %v1883 = vpop.f32.mrf.mxu0
    %v1884 = vadd.f32 %v1871, %v1883
    %v1885 = vpop.f32.mrf.mxu0
    %1886 = vdwg.mxu0
    %1887 = vmatpush.bf16.msra.mxu0 %v1311
    %1888 = vmatpush.bf16.msra.mxu0 %v1307
    %1889 = vmatpush.bf16.msra.mxu0 %v1303
    %1890 = vmatpush.bf16.msra.mxu0 %v1299
    %1891 = vmatpush.bf16.msra.mxu0 %v1295
    %1892 = vmatpush.bf16.msra.mxu0 %v1291
    %1893 = vmatpush.bf16.msra.mxu0 %v1287
    %1894 = vmatpush.bf16.msra.mxu0 %v1283
    %1895 = vmatmul.bf16.gmra.mxu0 %v53
    %v1896 = vpop.f32.mrf.mxu0
    %v1897 = vadd.f32 %v1884, %v1896
    %v1898 = vpop.f32.mrf.mxu0
    %1899 = vdwg.mxu0
    %1900 = vmatpush.bf16.msra.mxu0 %v1343
    %1901 = vmatpush.bf16.msra.mxu0 %v1339
    %1902 = vmatpush.bf16.msra.mxu0 %v1335
    %1903 = vmatpush.bf16.msra.mxu0 %v1331
    %1904 = vmatpush.bf16.msra.mxu0 %v1327
    %1905 = vmatpush.bf16.msra.mxu0 %v1323
    %1906 = vmatpush.bf16.msra.mxu0 %v1319
    %1907 = vmatpush.bf16.msra.mxu0 %v1315
    %1908 = vmatmul.bf16.gmra.mxu0 %v54
    %v1909 = vpop.f32.mrf.mxu0
    %v1910 = vadd.f32 %v1897, %v1909
    %v1911 = vpop.f32.mrf.mxu0
    %1912 = vdwg.mxu0
    %1913 = vmatpush.bf16.msra.mxu0 %v1120
    %1914 = vmatpush.bf16.msra.mxu0 %v1116
    %1915 = vmatpush.bf16.msra.mxu0 %v1112
    %1916 = vmatpush.bf16.msra.mxu0 %v1108
    %1917 = vmatpush.bf16.msra.mxu0 %v1104
    %1918 = vmatpush.bf16.msra.mxu0 %v1100
    %1919 = vmatpush.bf16.msra.mxu0 %v1096
    %1920 = vmatpush.bf16.msra.mxu0 %v1092
    %1921 = vmatmul.bf16.gmra.mxu0 %v47
    %v1922 = vpop.f32.mrf.mxu0
    %v1923 = vadd.f32 %v316, %v1922
    %v1924 = vpop.f32.mrf.mxu0
    %1925 = vdwg.mxu0
    %1926 = vmatpush.bf16.msra.mxu0 %v1152
    %1927 = vmatpush.bf16.msra.mxu0 %v1148
    %1928 = vmatpush.bf16.msra.mxu0 %v1144
    %1929 = vmatpush.bf16.msra.mxu0 %v1140
    %1930 = vmatpush.bf16.msra.mxu0 %v1136
    %1931 = vmatpush.bf16.msra.mxu0 %v1132
    %1932 = vmatpush.bf16.msra.mxu0 %v1128
    %1933 = vmatpush.bf16.msra.mxu0 %v1124
    %1934 = vmatmul.bf16.gmra.mxu0 %v48
    %v1935 = vpop.f32.mrf.mxu0
    %v1936 = vadd.f32 %v1923, %v1935
    %v1937 = vpop.f32.mrf.mxu0
    %1938 = vdwg.mxu0
    %1939 = vmatpush.bf16.msra.mxu0 %v1184
    %1940 = vmatpush.bf16.msra.mxu0 %v1180
    %1941 = vmatpush.bf16.msra.mxu0 %v1176
    %1942 = vmatpush.bf16.msra.mxu0 %v1172
    %1943 = vmatpush.bf16.msra.mxu0 %v1168
    %1944 = vmatpush.bf16.msra.mxu0 %v1164
    %1945 = vmatpush.bf16.msra.mxu0 %v1160
    %1946 = vmatpush.bf16.msra.mxu0 %v1156
    %1947 = vmatmul.bf16.gmra.mxu0 %v49
    %v1948 = vpop.f32.mrf.mxu0
    %v1949 = vadd.f32 %v1936, %v1948
    %v1950 = vpop.f32.mrf.mxu0
    %1951 = vdwg.mxu0
    %1952 = vmatpush.bf16.msra.mxu0 %v1216
    %1953 = vmatpush.bf16.msra.mxu0 %v1212
    %1954 = vmatpush.bf16.msra.mxu0 %v1208
    %1955 = vmatpush.bf16.msra.mxu0 %v1204
    %1956 = vmatpush.bf16.msra.mxu0 %v1200
    %1957 = vmatpush.bf16.msra.mxu0 %v1196
    %1958 = vmatpush.bf16.msra.mxu0 %v1192
    %1959 = vmatpush.bf16.msra.mxu0 %v1188
    %1960 = vmatmul.bf16.gmra.mxu0 %v50
    %v1961 = vpop.f32.mrf.mxu0
    %v1962 = vadd.f32 %v1949, %v1961
    %v1963 = vpop.f32.mrf.mxu0
    %1964 = vdwg.mxu0
    %1965 = vmatpush.bf16.msra.mxu0 %v1248
    %1966 = vmatpush.bf16.msra.mxu0 %v1244
    %1967 = vmatpush.bf16.msra.mxu0 %v1240
    %1968 = vmatpush.bf16.msra.mxu0 %v1236
    %1969 = vmatpush.bf16.msra.mxu0 %v1232
    %1970 = vmatpush.bf16.msra.mxu0 %v1228
    %1971 = vmatpush.bf16.msra.mxu0 %v1224
    %1972 = vmatpush.bf16.msra.mxu0 %v1220
    %1973 = vmatmul.bf16.gmra.mxu0 %v51
    %v1974 = vpop.f32.mrf.mxu0
    %v1975 = vadd.f32 %v1962, %v1974
    %v1976 = vpop.f32.mrf.mxu0
    %1977 = vdwg.mxu0
    %1978 = vmatpush.bf16.msra.mxu0 %v1280
    %1979 = vmatpush.bf16.msra.mxu0 %v1276
    %1980 = vmatpush.bf16.msra.mxu0 %v1272
    %1981 = vmatpush.bf16.msra.mxu0 %v1268
    %1982 = vmatpush.bf16.msra.mxu0 %v1264
    %1983 = vmatpush.bf16.msra.mxu0 %v1260
    %1984 = vmatpush.bf16.msra.mxu0 %v1256
    %1985 = vmatpush.bf16.msra.mxu0 %v1252
    %1986 = vmatmul.bf16.gmra.mxu0 %v52
    %v1987 = vpop.f32.mrf.mxu0
    %v1988 = vadd.f32 %v1975, %v1987
    %v1989 = vpop.f32.mrf.mxu0
    %1990 = vdwg.mxu0
    %1991 = vmatpush.bf16.msra.mxu0 %v1312
    %1992 = vmatpush.bf16.msra.mxu0 %v1308
    %1993 = vmatpush.bf16.msra.mxu0 %v1304
    %1994 = vmatpush.bf16.msra.mxu0 %v1300
    %1995 = vmatpush.bf16.msra.mxu0 %v1296
    %1996 = vmatpush.bf16.msra.mxu0 %v1292
    %1997 = vmatpush.bf16.msra.mxu0 %v1288
    %1998 = vmatpush.bf16.msra.mxu0 %v1284
    %1999 = vmatmul.bf16.gmra.mxu0 %v53
    %v2000 = vpop.f32.mrf.mxu0
    %v2001 = vadd.f32 %v1988, %v2000
    %v2002 = vpop.f32.mrf.mxu0
    %2003 = vdwg.mxu0
    %2004 = vmatpush.bf16.msra.mxu0 %v1344
    %2005 = vmatpush.bf16.msra.mxu0 %v1340
    %2006 = vmatpush.bf16.msra.mxu0 %v1336
    %2007 = vmatpush.bf16.msra.mxu0 %v1332
    %2008 = vmatpush.bf16.msra.mxu0 %v1328
    %2009 = vmatpush.bf16.msra.mxu0 %v1324
    %2010 = vmatpush.bf16.msra.mxu0 %v1320
    %2011 = vmatpush.bf16.msra.mxu0 %v1316
    %2012 = vmatmul.bf16.gmra.mxu0 %v54
    %v2013 = vpop.f32.mrf.mxu0
    %v2014 = vadd.f32 %v2001, %v2013
    %v2015 = vpop.f32.mrf.mxu0
    %2016 = vdwg.mxu0
    %v2017 = vsub.f32 0.0, %v1702
    %v2018 = vsub.f32 0.0, %v1806
    %v2019 = vsub.f32 0.0, %v1910
    %v2020 = vsub.f32 0.0, %v2014
    %v2021 = vmul.f32 %v2017, 1.442695
    %v2022 = vpow.pop %v2021
    %v2023 = vmul.f32 %v2018, 1.442695
    %v2024 = vpow.pop %v2023
    %v2025 = vmul.f32 %v2019, 1.442695
    %v2026 = vpow.pop %v2025
    %v2027 = vmul.f32 %v2020, 1.442695
    %v2028 = vpow.pop %v2027
    %v2029 = vadd.f32 %v2022, 1.0
    %v2030 = vadd.f32 %v2024, 1.0
    %v2031 = vadd.f32 %v2026, 1.0
    %v2032 = vadd.f32 %v2028, 1.0
    %v2033 = vrcp.pop %v2029
    %v2034 = vrcp.pop %v2030
    %v2035 = vrcp.pop %v2031
    %v2036 = vrcp.pop %v2032
    %v2041 = vrot.slane %v2034, 6
    %v2042 = vrot.slane %v2035, 4
    %v2043 = vrot.slane %v2036, 2
    %vm2044 = vcmask 1041408
    %v2045 = vsel %vm2044, %v2033, %v2041
    %vm2046 = vcmask 1045508
    %v2047 = vsel %vm2046, %v2042, %v2043
    %vm2048 = vcmask 1043456
    %v2049 = vsel %vm2048, %v2045, %v2047
    %vm2051 = vcmask 1043458
    %vm2052 = vmor %vm2051, %vm2044
    %vm2053 = vmor %vm2046, %vm2052
    %vm2054 = vcmask 949254
    %vm2055 = vmor %vm2054, %vm2053
    %2056 = vst.msk [vmem:[#allocation3] sm:$0xff] %vm2055, %v2049
    %v2057 = vld [vmem:[%s3] sm:$0xf]
    %v2059 = vperm.slane %v2057, 0
    %v2060 = vperm.slane %v2057, 1
    %v2061 = vperm.slane %v2057, 2
    %v2062 = vperm.slane %v2057, 3
    %v2067 = vmul.f32 %v2033, %v2059
    %v2068 = vmul.f32 %v2034, %v2060
    %v2069 = vmul.f32 %v2035, %v2061
    %v2070 = vmul.f32 %v2036, %v2062
    %v2071 = vsel %vm2044, %v2067, 0.0
    %v2072 = vsel %vm2044, %v2068, 0.0
    %v2073 = vadd.f32 %v2071, %v2072
    %v2074 = vsel %vm2044, %v2069, 0.0
    %v2075 = vadd.f32 %v2073, %v2074
    %vm2076 = vcmask 943104
    %v2077 = vsel %vm2076, %v2070, 0.0
    %v2078 = vadd.f32 %v2075, %v2077
    %2079 = vadd.xlane.f32.xlu0 %v2078
    %v2080 = vpop.xlane.xlu0 %2079
    %s2081 = sld [smem:[#allocation2]]
    %v2082 = vstv %s2081
    %v2083 = vadd.f32 %v2080, %v2082
    %v2084 = vsub.f32 0.0, %v2083
    %v2085 = vmul.f32 %v2084, 1.442695
    %v2086 = vpow.pop %v2085
    %v2087 = vadd.f32 %v2086, 1.0
    %v2088 = vrcp.pop %v2087
    %vm2089 = vcmask 1024
    %2090 = vst.msk [vmem:[%s5] sm:$0x3] %vm2089, %v2088
    // Predicated region
    $region22: #{tpu_custom_call.1} parent=1 // pred_check
      _
    $region23: #{tpu_custom_call.1} parent=1 // pred_check_branch
      %2092 = sbr.rel (0) target = $region25
    $region24: #{tpu_custom_call.1} parent=1 // pred_region
      _
    $region25: #{tpu_custom_call.1} parent=1 // pred_fallthru
      _
    // Predicated region
    $region26: #{tpu_custom_call.1} parent=1 // pred_check
      _
    $region27: #{tpu_custom_call.1} parent=1 // pred_check_branch
      %2094 = sbr.rel (0) target = $region29
    $region28: #{tpu_custom_call.1} parent=1 // pred_region
      %2096 = vsyncadd [#allocation4], 0
      %s2098 = sshll.u32 [#allocation3], 4
      %s2099 = int_to_ptr.vmem [resolvable:$true] %s2098
      %s2100 = sshll.u32 %s6, 4
      %s2101 = int_to_ptr.hbm [resolvable:$true] %s2100
      %2103 = dma.vmem_to_hbm [thread:$0]  %s2099, 128, %s2101, [#allocation4]
    $region29: #{tpu_custom_call.1} parent=1 // pred_fallthru
      _
    // Predicated region
    $region30: #{tpu_custom_call.1} parent=1 // pred_check
      _
    $region31: #{tpu_custom_call.1} parent=1 // pred_check_branch
      %2105 = sbr.rel (0) target = $region33
    $region32: #{tpu_custom_call.1} parent=1 // pred_region
      _
    $region33: #{tpu_custom_call.1} parent=1 // pred_fallthru
      _
    // Predicated region
    $region34: #{tpu_custom_call.1} parent=1 // pred_check
      _
    $region35: #{tpu_custom_call.1} parent=1 // pred_check_branch
      %2107 = sbr.rel (0) target = $region37
    $region36: #{tpu_custom_call.1} parent=1 // pred_region
      %2109 = dma.done [#allocation4], 128
    $region37: #{tpu_custom_call.1} parent=1 // pred_fallthru
      _
    %2110 = vsyncpa [#allocation4], 1

// kernel: tpu_custom_call.1
$region0: #{tpu_custom_call.1}
  #allocation0 [shape = 'u32[]', space=smem, size = 0x4, offset = 0x4, fixed_abs, tag = 'smem constant byte address 0x4 - core index']
  #allocation1 [shape = 'u32[72,128]{1,0:T(1,128)}', space=vmem, size = 0x9000, scoped, tag = 'internal scratch']
  #allocation2 [shape = 'f32[1]{0:T(128)S(6)}', space=smem, size = 0x200, scoped, tag = 'scoped memory for tpu_custom_call.1']
  %s0 = inlined_call_operand.vmem [shape: f32[2,1024], index: 0, kind: input, shape index: {}]
  %s1 = inlined_call_operand.vmem [shape: bf16[1024,500], index: 1, kind: input, shape index: {}]
  %s2 = inlined_call_operand.vmem [shape: f32[1,500], index: 2, kind: input, shape index: {}]
  %s3 = inlined_call_operand.vmem [shape: f32[1,500], index: 3, kind: input, shape index: {}]
  %s4 = inlined_call_operand.<no memory space> [shape: f32[1], index: 4, kind: input, shape index: {}]
  %s5 = inlined_call_operand.vmem [shape: f32[2,1], index: 5, kind: output, shape index: {0}]
  %s6 = inlined_call_operand.hbm [shape: f32[2,500], index: 6, kind: output, shape index: {1}]
  %7 = xla_tuple %s5, %s6
  %s8 = sld [smem:[#allocation0]]
  $region38: #{tpu_custom_call.1} parent=0
    _
  %s10 = ssub.s32 1, %s8
  %s11 = scalar_select 0, %s10, %s8
  %12 = sst [smem:[#allocation2]] %s4
  $region1: #{tpu_custom_call.1} parent=0
    #allocation3 [shape = 'u8[4096]{0}', space=vmem, size = 0x1000, scoped, tag = 'output window, operand 1, single buffered']
    #allocation4 [shape = 's32[1]{0}', space=sflag, size = 0x4, scoped, tag = 'scoped memory for tpu_custom_call.1']
    %13 = vsyncpa [#allocation4], 0
    // Predicated region
    $region2: #{tpu_custom_call.1} parent=1 // pred_check
      _
    $region3: #{tpu_custom_call.1} parent=1 // pred_check_branch
      %15 = sbr.rel (0) target = $region5
    $region4: #{tpu_custom_call.1} parent=1 // pred_region
      _
    $region5: #{tpu_custom_call.1} parent=1 // pred_fallthru
      _
    // Predicated region
    $region6: #{tpu_custom_call.1} parent=1 // pred_check
      _
    $region7: #{tpu_custom_call.1} parent=1 // pred_check_branch
      %17 = sbr.rel (0) target = $region9
    $region8: #{tpu_custom_call.1} parent=1 // pred_region
      _
    $region9: #{tpu_custom_call.1} parent=1 // pred_fallthru
      _
    // Predicated region
    $region10: #{tpu_custom_call.1} parent=1 // pred_check
      _
    $region11: #{tpu_custom_call.1} parent=1 // pred_check_branch
      %19 = sbr.rel (0) target = $region13
    $region12: #{tpu_custom_call.1} parent=1 // pred_region
      _
    $region13: #{tpu_custom_call.1} parent=1 // pred_fallthru
      _
    // Predicated region
    $region14: #{tpu_custom_call.1} parent=1 // pred_check
      _
    $region15: #{tpu_custom_call.1} parent=1 // pred_check_branch
      %21 = sbr.rel (0) target = $region17
    $region16: #{tpu_custom_call.1} parent=1 // pred_region
      _
    $region17: #{tpu_custom_call.1} parent=1 // pred_fallthru
      _
    // Predicated region
    $region18: #{tpu_custom_call.1} parent=1 // pred_check
      _
    $region19: #{tpu_custom_call.1} parent=1 // pred_check_branch
      %23 = sbr.rel (0) target = $region21
    $region20: #{tpu_custom_call.1} parent=1 // pred_region
      _
    $region21: #{tpu_custom_call.1} parent=1 // pred_fallthru
      _
    %v24 = vld [vmem:[%s0] sm:$0xff]
    %v25 = vld [vmem:[%s0 + $0x8] sm:$0xff]
    %28 = vst [vmem:[#allocation1] ss:$4 sm:$0xff] %v24
    %s29 = scalar_lea.vmem [#allocation1], 32
    %30 = vst [vmem:[%s29] ss:$4 sm:$0xff] %v25
    %v31 = vld.sshfl [vmem:[#allocation1] sm:$0xff pattern:$0x73625140]
    %v32 = vld.sshfl [vmem:[#allocation1 + $0x8] sm:$0xff pattern:$0x73625140]
    %v33 = vld.sshfl [vmem:[#allocation1 + $0x10] sm:$0xff pattern:$0x73625140]
    %v34 = vld.sshfl [vmem:[#allocation1 + $0x18] sm:$0xff pattern:$0x73625140]
    %v35 = vld.sshfl [vmem:[#allocation1 + $0x20] sm:$0xff pattern:$0x73625140]
    %v36 = vld.sshfl [vmem:[#allocation1 + $0x28] sm:$0xff pattern:$0x73625140]
    %v37 = vld.sshfl [vmem:[#allocation1 + $0x30] sm:$0xff pattern:$0x73625140]
    %v38 = vld.sshfl [vmem:[#allocation1 + $0x38] sm:$0xff pattern:$0x73625140]
    %v47 = vpack.c.bf16 %v31, %v31
    %v48 = vpack.c.bf16 %v32, %v32
    %v49 = vpack.c.bf16 %v33, %v33
    %v50 = vpack.c.bf16 %v34, %v34
    %v51 = vpack.c.bf16 %v35, %v35
    %v52 = vpack.c.bf16 %v36, %v36
    %v53 = vpack.c.bf16 %v37, %v37
    %v54 = vpack.c.bf16 %v38, %v38
    %v55 = vld [vmem:[%s1] sm:$0xff]
    %v56 = vld [vmem:[%s1 + $0x8] sm:$0xff]
    %v57 = vld [vmem:[%s1 + $0x10] sm:$0xff]
    %v58 = vld [vmem:[%s1 + $0x18] sm:$0xff]
    %v59 = vld [vmem:[%s1 + $0x20] sm:$0xff]
    %v60 = vld [vmem:[%s1 + $0x28] sm:$0xff]
    %v61 = vld [vmem:[%s1 + $0x30] sm:$0xff]
    %v62 = vld [vmem:[%s1 + $0x38] sm:$0xff]
    %v63 = vld [vmem:[%s1 + $0x40] sm:$0xff]
    %v64 = vld [vmem:[%s1 + $0x48] sm:$0xff]
    %v65 = vld [vmem:[%s1 + $0x50] sm:$0xff]
    %v66 = vld [vmem:[%s1 + $0x58] sm:$0xff]
    %v67 = vld [vmem:[%s1 + $0x60] sm:$0xff]
    %v68 = vld [vmem:[%s1 + $0x68] sm:$0xff]
    %v69 = vld [vmem:[%s1 + $0x70] sm:$0xff]
    %v70 = vld [vmem:[%s1 + $0x78] sm:$0xff]
    %v71 = vld [vmem:[%s1 + $0x80] sm:$0xff]
    %v72 = vld [vmem:[%s1 + $0x88] sm:$0xff]
    %v73 = vld [vmem:[%s1 + $0x90] sm:$0xff]
    %v74 = vld [vmem:[%s1 + $0x98] sm:$0xff]
    %v75 = vld [vmem:[%s1 + $0xa0] sm:$0xff]
    %v76 = vld [vmem:[%s1 + $0xa8] sm:$0xff]
    %v77 = vld [vmem:[%s1 + $0xb0] sm:$0xff]
    %v78 = vld [vmem:[%s1 + $0xb8] sm:$0xff]
    %v79 = vld [vmem:[%s1 + $0xc0] sm:$0xff]
    %v80 = vld [vmem:[%s1 + $0xc8] sm:$0xff]
    %v81 = vld [vmem:[%s1 + $0xd0] sm:$0xff]
    %v82 = vld [vmem:[%s1 + $0xd8] sm:$0xff]
    %v83 = vld [vmem:[%s1 + $0xe0] sm:$0xff]
    %v84 = vld [vmem:[%s1 + $0xe8] sm:$0xff]
    %v85 = vld [vmem:[%s1 + $0xf0] sm:$0xff]
    %v86 = vld [vmem:[%s1 + $0xf8] sm:$0xff]
    %v87 = vld [vmem:[%s1 + $0x100] sm:$0xff]
    %v88 = vld [vmem:[%s1 + $0x108] sm:$0xff]
    %v89 = vld [vmem:[%s1 + $0x110] sm:$0xff]
    %v90 = vld [vmem:[%s1 + $0x118] sm:$0xff]
    %v91 = vld [vmem:[%s1 + $0x120] sm:$0xff]
    %v92 = vld [vmem:[%s1 + $0x128] sm:$0xff]
    %v93 = vld [vmem:[%s1 + $0x130] sm:$0xff]
    %v94 = vld [vmem:[%s1 + $0x138] sm:$0xff]
    %v95 = vld [vmem:[%s1 + $0x140] sm:$0xff]
    %v96 = vld [vmem:[%s1 + $0x148] sm:$0xff]
    %v97 = vld [vmem:[%s1 + $0x150] sm:$0xff]
    %v98 = vld [vmem:[%s1 + $0x158] sm:$0xff]
    %v99 = vld [vmem:[%s1 + $0x160] sm:$0xff]
    %v100 = vld [vmem:[%s1 + $0x168] sm:$0xff]
    %v101 = vld [vmem:[%s1 + $0x170] sm:$0xff]
    %v102 = vld [vmem:[%s1 + $0x178] sm:$0xff]
    %v103 = vld [vmem:[%s1 + $0x180] sm:$0xff]
    %v104 = vld [vmem:[%s1 + $0x188] sm:$0xff]
    %v105 = vld [vmem:[%s1 + $0x190] sm:$0xff]
    %v106 = vld [vmem:[%s1 + $0x198] sm:$0xff]
    %v107 = vld [vmem:[%s1 + $0x1a0] sm:$0xff]
    %v108 = vld [vmem:[%s1 + $0x1a8] sm:$0xff]
    %v109 = vld [vmem:[%s1 + $0x1b0] sm:$0xff]
    %v110 = vld [vmem:[%s1 + $0x1b8] sm:$0xff]
    %v111 = vld [vmem:[%s1 + $0x1c0] sm:$0xff]
    %v112 = vld [vmem:[%s1 + $0x1c8] sm:$0xff]
    %v113 = vld [vmem:[%s1 + $0x1d0] sm:$0xff]
    %v114 = vld [vmem:[%s1 + $0x1d8] sm:$0xff]
    %v115 = vld [vmem:[%s1 + $0x1e0] sm:$0xff]
    %v116 = vld [vmem:[%s1 + $0x1e8] sm:$0xff]
    %v117 = vld [vmem:[%s1 + $0x1f0] sm:$0xff]
    %v118 = vld [vmem:[%s1 + $0x1f8] sm:$0xff]
    %v119 = vld [vmem:[%s1 + $0x200] sm:$0xff]
    %v120 = vld [vmem:[%s1 + $0x208] sm:$0xff]
    %v121 = vld [vmem:[%s1 + $0x210] sm:$0xff]
    %v122 = vld [vmem:[%s1 + $0x218] sm:$0xff]
    %v123 = vld [vmem:[%s1 + $0x220] sm:$0xff]
    %v124 = vld [vmem:[%s1 + $0x228] sm:$0xff]
    %v125 = vld [vmem:[%s1 + $0x230] sm:$0xff]
    %v126 = vld [vmem:[%s1 + $0x238] sm:$0xff]
    %v127 = vld [vmem:[%s1 + $0x240] sm:$0xff]
    %v128 = vld [vmem:[%s1 + $0x248] sm:$0xff]
    %v129 = vld [vmem:[%s1 + $0x250] sm:$0xff]
    %v130 = vld [vmem:[%s1 + $0x258] sm:$0xff]
    %v131 = vld [vmem:[%s1 + $0x260] sm:$0xff]
    %v132 = vld [vmem:[%s1 + $0x268] sm:$0xff]
    %v133 = vld [vmem:[%s1 + $0x270] sm:$0xff]
    %v134 = vld [vmem:[%s1 + $0x278] sm:$0xff]
    %v135 = vld [vmem:[%s1 + $0x280] sm:$0xff]
    %v136 = vld [vmem:[%s1 + $0x288] sm:$0xff]
    %v137 = vld [vmem:[%s1 + $0x290] sm:$0xff]
    %v138 = vld [vmem:[%s1 + $0x298] sm:$0xff]
    %v139 = vld [vmem:[%s1 + $0x2a0] sm:$0xff]
    %v140 = vld [vmem:[%s1 + $0x2a8] sm:$0xff]
    %v141 = vld [vmem:[%s1 + $0x2b0] sm:$0xff]
    %v142 = vld [vmem:[%s1 + $0x2b8] sm:$0xff]
    %v143 = vld [vmem:[%s1 + $0x2c0] sm:$0xff]
    %v144 = vld [vmem:[%s1 + $0x2c8] sm:$0xff]
    %v145 = vld [vmem:[%s1 + $0x2d0] sm:$0xff]
    %v146 = vld [vmem:[%s1 + $0x2d8] sm:$0xff]
    %v147 = vld [vmem:[%s1 + $0x2e0] sm:$0xff]
    %v148 = vld [vmem:[%s1 + $0x2e8] sm:$0xff]
    %v149 = vld [vmem:[%s1 + $0x2f0] sm:$0xff]
    %v150 = vld [vmem:[%s1 + $0x2f8] sm:$0xff]
    %v151 = vld [vmem:[%s1 + $0x300] sm:$0xff]
    %v152 = vld [vmem:[%s1 + $0x308] sm:$0xff]
    %v153 = vld [vmem:[%s1 + $0x310] sm:$0xff]
    %v154 = vld [vmem:[%s1 + $0x318] sm:$0xff]
    %v155 = vld [vmem:[%s1 + $0x320] sm:$0xff]
    %v156 = vld [vmem:[%s1 + $0x328] sm:$0xff]
    %v157 = vld [vmem:[%s1 + $0x330] sm:$0xff]
    %v158 = vld [vmem:[%s1 + $0x338] sm:$0xff]
    %v159 = vld [vmem:[%s1 + $0x340] sm:$0xff]
    %v160 = vld [vmem:[%s1 + $0x348] sm:$0xff]
    %v161 = vld [vmem:[%s1 + $0x350] sm:$0xff]
    %v162 = vld [vmem:[%s1 + $0x358] sm:$0xff]
    %v163 = vld [vmem:[%s1 + $0x360] sm:$0xff]
    %v164 = vld [vmem:[%s1 + $0x368] sm:$0xff]
    %v165 = vld [vmem:[%s1 + $0x370] sm:$0xff]
    %v166 = vld [vmem:[%s1 + $0x378] sm:$0xff]
    %v167 = vld [vmem:[%s1 + $0x380] sm:$0xff]
    %v168 = vld [vmem:[%s1 + $0x388] sm:$0xff]
    %v169 = vld [vmem:[%s1 + $0x390] sm:$0xff]
    %v170 = vld [vmem:[%s1 + $0x398] sm:$0xff]
    %v171 = vld [vmem:[%s1 + $0x3a0] sm:$0xff]
    %v172 = vld [vmem:[%s1 + $0x3a8] sm:$0xff]
    %v173 = vld [vmem:[%s1 + $0x3b0] sm:$0xff]
    %v174 = vld [vmem:[%s1 + $0x3b8] sm:$0xff]
    %v175 = vld [vmem:[%s1 + $0x3c0] sm:$0xff]
    %v176 = vld [vmem:[%s1 + $0x3c8] sm:$0xff]
    %v177 = vld [vmem:[%s1 + $0x3d0] sm:$0xff]
    %v178 = vld [vmem:[%s1 + $0x3d8] sm:$0xff]
    %v179 = vld [vmem:[%s1 + $0x3e0] sm:$0xff]
    %v180 = vld [vmem:[%s1 + $0x3e8] sm:$0xff]
    %v181 = vld [vmem:[%s1 + $0x3f0] sm:$0xff]
    %v182 = vld [vmem:[%s1 + $0x3f8] sm:$0xff]
    %v183 = vld [vmem:[%s1 + $0x400] sm:$0xff]
    %v184 = vld [vmem:[%s1 + $0x408] sm:$0xff]
    %v185 = vld [vmem:[%s1 + $0x410] sm:$0xff]
    %v186 = vld [vmem:[%s1 + $0x418] sm:$0xff]
    %v187 = vld [vmem:[%s1 + $0x420] sm:$0xff]
    %v188 = vld [vmem:[%s1 + $0x428] sm:$0xff]
    %v189 = vld [vmem:[%s1 + $0x430] sm:$0xff]
    %v190 = vld [vmem:[%s1 + $0x438] sm:$0xff]
    %v191 = vld [vmem:[%s1 + $0x440] sm:$0xff]
    %v192 = vld [vmem:[%s1 + $0x448] sm:$0xff]
    %v193 = vld [vmem:[%s1 + $0x450] sm:$0xff]
    %v194 = vld [vmem:[%s1 + $0x458] sm:$0xff]
    %v195 = vld [vmem:[%s1 + $0x460] sm:$0xff]
    %v196 = vld [vmem:[%s1 + $0x468] sm:$0xff]
    %v197 = vld [vmem:[%s1 + $0x470] sm:$0xff]
    %v198 = vld [vmem:[%s1 + $0x478] sm:$0xff]
    %v199 = vld [vmem:[%s1 + $0x480] sm:$0xff]
    %v200 = vld [vmem:[%s1 + $0x488] sm:$0xff]
    %v201 = vld [vmem:[%s1 + $0x490] sm:$0xff]
    %v202 = vld [vmem:[%s1 + $0x498] sm:$0xff]
    %v203 = vld [vmem:[%s1 + $0x4a0] sm:$0xff]
    %v204 = vld [vmem:[%s1 + $0x4a8] sm:$0xff]
    %v205 = vld [vmem:[%s1 + $0x4b0] sm:$0xff]
    %v206 = vld [vmem:[%s1 + $0x4b8] sm:$0xff]
    %v207 = vld [vmem:[%s1 + $0x4c0] sm:$0xff]
    %v208 = vld [vmem:[%s1 + $0x4c8] sm:$0xff]
    %v209 = vld [vmem:[%s1 + $0x4d0] sm:$0xff]
    %v210 = vld [vmem:[%s1 + $0x4d8] sm:$0xff]
    %v211 = vld [vmem:[%s1 + $0x4e0] sm:$0xff]
    %v212 = vld [vmem:[%s1 + $0x4e8] sm:$0xff]
    %v213 = vld [vmem:[%s1 + $0x4f0] sm:$0xff]
    %v214 = vld [vmem:[%s1 + $0x4f8] sm:$0xff]
    %v215 = vld [vmem:[%s1 + $0x500] sm:$0xff]
    %v216 = vld [vmem:[%s1 + $0x508] sm:$0xff]
    %v217 = vld [vmem:[%s1 + $0x510] sm:$0xff]
    %v218 = vld [vmem:[%s1 + $0x518] sm:$0xff]
    %v219 = vld [vmem:[%s1 + $0x520] sm:$0xff]
    %v220 = vld [vmem:[%s1 + $0x528] sm:$0xff]
    %v221 = vld [vmem:[%s1 + $0x530] sm:$0xff]
    %v222 = vld [vmem:[%s1 + $0x538] sm:$0xff]
    %v223 = vld [vmem:[%s1 + $0x540] sm:$0xff]
    %v224 = vld [vmem:[%s1 + $0x548] sm:$0xff]
    %v225 = vld [vmem:[%s1 + $0x550] sm:$0xff]
    %v226 = vld [vmem:[%s1 + $0x558] sm:$0xff]
    %v227 = vld [vmem:[%s1 + $0x560] sm:$0xff]
    %v228 = vld [vmem:[%s1 + $0x568] sm:$0xff]
    %v229 = vld [vmem:[%s1 + $0x570] sm:$0xff]
    %v230 = vld [vmem:[%s1 + $0x578] sm:$0xff]
    %v231 = vld [vmem:[%s1 + $0x580] sm:$0xff]
    %v232 = vld [vmem:[%s1 + $0x588] sm:$0xff]
    %v233 = vld [vmem:[%s1 + $0x590] sm:$0xff]
    %v234 = vld [vmem:[%s1 + $0x598] sm:$0xff]
    %v235 = vld [vmem:[%s1 + $0x5a0] sm:$0xff]
    %v236 = vld [vmem:[%s1 + $0x5a8] sm:$0xff]
    %v237 = vld [vmem:[%s1 + $0x5b0] sm:$0xff]
    %v238 = vld [vmem:[%s1 + $0x5b8] sm:$0xff]
    %v239 = vld [vmem:[%s1 + $0x5c0] sm:$0xff]
    %v240 = vld [vmem:[%s1 + $0x5c8] sm:$0xff]
    %v241 = vld [vmem:[%s1 + $0x5d0] sm:$0xff]
    %v242 = vld [vmem:[%s1 + $0x5d8] sm:$0xff]
    %v243 = vld [vmem:[%s1 + $0x5e0] sm:$0xff]
    %v244 = vld [vmem:[%s1 + $0x5e8] sm:$0xff]
    %v245 = vld [vmem:[%s1 + $0x5f0] sm:$0xff]
    %v246 = vld [vmem:[%s1 + $0x5f8] sm:$0xff]
    %v247 = vld [vmem:[%s1 + $0x600] sm:$0xff]
    %v248 = vld [vmem:[%s1 + $0x608] sm:$0xff]
    %v249 = vld [vmem:[%s1 + $0x610] sm:$0xff]
    %v250 = vld [vmem:[%s1 + $0x618] sm:$0xff]
    %v251 = vld [vmem:[%s1 + $0x620] sm:$0xff]
    %v252 = vld [vmem:[%s1 + $0x628] sm:$0xff]
    %v253 = vld [vmem:[%s1 + $0x630] sm:$0xff]
    %v254 = vld [vmem:[%s1 + $0x638] sm:$0xff]
    %v255 = vld [vmem:[%s1 + $0x640] sm:$0xff]
    %v256 = vld [vmem:[%s1 + $0x648] sm:$0xff]
    %v257 = vld [vmem:[%s1 + $0x650] sm:$0xff]
    %v258 = vld [vmem:[%s1 + $0x658] sm:$0xff]
    %v259 = vld [vmem:[%s1 + $0x660] sm:$0xff]
    %v260 = vld [vmem:[%s1 + $0x668] sm:$0xff]
    %v261 = vld [vmem:[%s1 + $0x670] sm:$0xff]
    %v262 = vld [vmem:[%s1 + $0x678] sm:$0xff]
    %v263 = vld [vmem:[%s1 + $0x680] sm:$0xff]
    %v264 = vld [vmem:[%s1 + $0x688] sm:$0xff]
    %v265 = vld [vmem:[%s1 + $0x690] sm:$0xff]
    %v266 = vld [vmem:[%s1 + $0x698] sm:$0xff]
    %v267 = vld [vmem:[%s1 + $0x6a0] sm:$0xff]
    %v268 = vld [vmem:[%s1 + $0x6a8] sm:$0xff]
    %v269 = vld [vmem:[%s1 + $0x6b0] sm:$0xff]
    %v270 = vld [vmem:[%s1 + $0x6b8] sm:$0xff]
    %v271 = vld [vmem:[%s1 + $0x6c0] sm:$0xff]
    %v272 = vld [vmem:[%s1 + $0x6c8] sm:$0xff]
    %v273 = vld [vmem:[%s1 + $0x6d0] sm:$0xff]
    %v274 = vld [vmem:[%s1 + $0x6d8] sm:$0xff]
    %v275 = vld [vmem:[%s1 + $0x6e0] sm:$0xff]
    %v276 = vld [vmem:[%s1 + $0x6e8] sm:$0xff]
    %v277 = vld [vmem:[%s1 + $0x6f0] sm:$0xff]
    %v278 = vld [vmem:[%s1 + $0x6f8] sm:$0xff]
    %v279 = vld [vmem:[%s1 + $0x700] sm:$0xff]
    %v280 = vld [vmem:[%s1 + $0x708] sm:$0xff]
    %v281 = vld [vmem:[%s1 + $0x710] sm:$0xff]
    %v282 = vld [vmem:[%s1 + $0x718] sm:$0xff]
    %v283 = vld [vmem:[%s1 + $0x720] sm:$0xff]
    %v284 = vld [vmem:[%s1 + $0x728] sm:$0xff]
    %v285 = vld [vmem:[%s1 + $0x730] sm:$0xff]
    %v286 = vld [vmem:[%s1 + $0x738] sm:$0xff]
    %v287 = vld [vmem:[%s1 + $0x740] sm:$0xff]
    %v288 = vld [vmem:[%s1 + $0x748] sm:$0xff]
    %v289 = vld [vmem:[%s1 + $0x750] sm:$0xff]
    %v290 = vld [vmem:[%s1 + $0x758] sm:$0xff]
    %v291 = vld [vmem:[%s1 + $0x760] sm:$0xff]
    %v292 = vld [vmem:[%s1 + $0x768] sm:$0xff]
    %v293 = vld [vmem:[%s1 + $0x770] sm:$0xff]
    %v294 = vld [vmem:[%s1 + $0x778] sm:$0xff]
    %v295 = vld [vmem:[%s1 + $0x780] sm:$0xff]
    %v296 = vld [vmem:[%s1 + $0x788] sm:$0xff]
    %v297 = vld [vmem:[%s1 + $0x790] sm:$0xff]
    %v298 = vld [vmem:[%s1 + $0x798] sm:$0xff]
    %v299 = vld [vmem:[%s1 + $0x7a0] sm:$0xff]
    %v300 = vld [vmem:[%s1 + $0x7a8] sm:$0xff]
    %v301 = vld [vmem:[%s1 + $0x7b0] sm:$0xff]
    %v302 = vld [vmem:[%s1 + $0x7b8] sm:$0xff]
    %v303 = vld [vmem:[%s1 + $0x7c0] sm:$0xff]
    %v304 = vld [vmem:[%s1 + $0x7c8] sm:$0xff]
    %v305 = vld [vmem:[%s1 + $0x7d0] sm:$0xff]
    %v306 = vld [vmem:[%s1 + $0x7d8] sm:$0xff]
    %v307 = vld [vmem:[%s1 + $0x7e0] sm:$0xff]
    %v308 = vld [vmem:[%s1 + $0x7e8] sm:$0xff]
    %v309 = vld [vmem:[%s1 + $0x7f0] sm:$0xff]
    %v310 = vld [vmem:[%s1 + $0x7f8] sm:$0xff]
    %v311 = vld [vmem:[%s2] sm:$0xf]
    %v313 = vperm.slane %v311, 0
    %v314 = vperm.slane %v311, 1
    %v315 = vperm.slane %v311, 2
    %v316 = vperm.slane %v311, 3
    %v577 = vunpack.c.l.b16 %v55
    %v578 = vunpack.c.h.b16 %v55
    %v579 = vunpack.c.l.b16 %v56
    %v580 = vunpack.c.h.b16 %v56
    %v581 = vunpack.c.l.b16 %v57
    %v582 = vunpack.c.h.b16 %v57
    %v583 = vunpack.c.l.b16 %v58
    %v584 = vunpack.c.h.b16 %v58
    %v585 = vunpack.c.l.b16 %v59
    %v586 = vunpack.c.h.b16 %v59
    %v587 = vunpack.c.l.b16 %v60
    %v588 = vunpack.c.h.b16 %v60
    %v589 = vunpack.c.l.b16 %v61
    %v590 = vunpack.c.h.b16 %v61
    %v591 = vunpack.c.l.b16 %v62
    %v592 = vunpack.c.h.b16 %v62
    %v593 = vunpack.c.l.b16 %v63
    %v594 = vunpack.c.h.b16 %v63
    %v595 = vunpack.c.l.b16 %v64
    %v596 = vunpack.c.h.b16 %v64
    %v597 = vunpack.c.l.b16 %v65
    %v598 = vunpack.c.h.b16 %v65
    %v599 = vunpack.c.l.b16 %v66
    %v600 = vunpack.c.h.b16 %v66
    %v601 = vunpack.c.l.b16 %v67
    %v602 = vunpack.c.h.b16 %v67
    %v603 = vunpack.c.l.b16 %v68
    %v604 = vunpack.c.h.b16 %v68
    %v605 = vunpack.c.l.b16 %v69
    %v606 = vunpack.c.h.b16 %v69
    %v607 = vunpack.c.l.b16 %v70
    %v608 = vunpack.c.h.b16 %v70
    %v609 = vunpack.c.l.b16 %v71
    %v610 = vunpack.c.h.b16 %v71
    %v611 = vunpack.c.l.b16 %v72
    %v612 = vunpack.c.h.b16 %v72
    %v613 = vunpack.c.l.b16 %v73
    %v614 = vunpack.c.h.b16 %v73
    %v615 = vunpack.c.l.b16 %v74
    %v616 = vunpack.c.h.b16 %v74
    %v617 = vunpack.c.l.b16 %v75
    %v618 = vunpack.c.h.b16 %v75
    %v619 = vunpack.c.l.b16 %v76
    %v620 = vunpack.c.h.b16 %v76
    %v621 = vunpack.c.l.b16 %v77
    %v622 = vunpack.c.h.b16 %v77
    %v623 = vunpack.c.l.b16 %v78
    %v624 = vunpack.c.h.b16 %v78
    %v625 = vunpack.c.l.b16 %v79
    %v626 = vunpack.c.h.b16 %v79
    %v627 = vunpack.c.l.b16 %v80
    %v628 = vunpack.c.h.b16 %v80
    %v629 = vunpack.c.l.b16 %v81
    %v630 = vunpack.c.h.b16 %v81
    %v631 = vunpack.c.l.b16 %v82
    %v632 = vunpack.c.h.b16 %v82
    %v633 = vunpack.c.l.b16 %v83
    %v634 = vunpack.c.h.b16 %v83
    %v635 = vunpack.c.l.b16 %v84
    %v636 = vunpack.c.h.b16 %v84
    %v637 = vunpack.c.l.b16 %v85
    %v638 = vunpack.c.h.b16 %v85
    %v639 = vunpack.c.l.b16 %v86
    %v640 = vunpack.c.h.b16 %v86
    %v641 = vunpack.c.l.b16 %v87
    %v642 = vunpack.c.h.b16 %v87
    %v643 = vunpack.c.l.b16 %v88
    %v644 = vunpack.c.h.b16 %v88
    %v645 = vunpack.c.l.b16 %v89
    %v646 = vunpack.c.h.b16 %v89
    %v647 = vunpack.c.l.b16 %v90
    %v648 = vunpack.c.h.b16 %v90
    %v649 = vunpack.c.l.b16 %v91
    %v650 = vunpack.c.h.b16 %v91
    %v651 = vunpack.c.l.b16 %v92
    %v652 = vunpack.c.h.b16 %v92
    %v653 = vunpack.c.l.b16 %v93
    %v654 = vunpack.c.h.b16 %v93
    %v655 = vunpack.c.l.b16 %v94
    %v656 = vunpack.c.h.b16 %v94
    %v657 = vunpack.c.l.b16 %v95
    %v658 = vunpack.c.h.b16 %v95
    %v659 = vunpack.c.l.b16 %v96
    %v660 = vunpack.c.h.b16 %v96
    %v661 = vunpack.c.l.b16 %v97
    %v662 = vunpack.c.h.b16 %v97
    %v663 = vunpack.c.l.b16 %v98
    %v664 = vunpack.c.h.b16 %v98
    %v665 = vunpack.c.l.b16 %v99
    %v666 = vunpack.c.h.b16 %v99
    %v667 = vunpack.c.l.b16 %v100
    %v668 = vunpack.c.h.b16 %v100
    %v669 = vunpack.c.l.b16 %v101
    %v670 = vunpack.c.h.b16 %v101
    %v671 = vunpack.c.l.b16 %v102
    %v672 = vunpack.c.h.b16 %v102
    %v673 = vunpack.c.l.b16 %v103
    %v674 = vunpack.c.h.b16 %v103
    %v675 = vunpack.c.l.b16 %v104
    %v676 = vunpack.c.h.b16 %v104
    %v677 = vunpack.c.l.b16 %v105
    %v678 = vunpack.c.h.b16 %v105
    %v679 = vunpack.c.l.b16 %v106
    %v680 = vunpack.c.h.b16 %v106
    %v681 = vunpack.c.l.b16 %v107
    %v682 = vunpack.c.h.b16 %v107
    %v683 = vunpack.c.l.b16 %v108
    %v684 = vunpack.c.h.b16 %v108
    %v685 = vunpack.c.l.b16 %v109
    %v686 = vunpack.c.h.b16 %v109
    %v687 = vunpack.c.l.b16 %v110
    %v688 = vunpack.c.h.b16 %v110
    %v689 = vunpack.c.l.b16 %v111
    %v690 = vunpack.c.h.b16 %v111
    %v691 = vunpack.c.l.b16 %v112
    %v692 = vunpack.c.h.b16 %v112
    %v693 = vunpack.c.l.b16 %v113
    %v694 = vunpack.c.h.b16 %v113
    %v695 = vunpack.c.l.b16 %v114
    %v696 = vunpack.c.h.b16 %v114
    %v697 = vunpack.c.l.b16 %v115
    %v698 = vunpack.c.h.b16 %v115
    %v699 = vunpack.c.l.b16 %v116
    %v700 = vunpack.c.h.b16 %v116
    %v701 = vunpack.c.l.b16 %v117
    %v702 = vunpack.c.h.b16 %v117
    %v703 = vunpack.c.l.b16 %v118
    %v704 = vunpack.c.h.b16 %v118
    %v705 = vunpack.c.l.b16 %v119
    %v706 = vunpack.c.h.b16 %v119
    %v707 = vunpack.c.l.b16 %v120
    %v708 = vunpack.c.h.b16 %v120
    %v709 = vunpack.c.l.b16 %v121
    %v710 = vunpack.c.h.b16 %v121
    %v711 = vunpack.c.l.b16 %v122
    %v712 = vunpack.c.h.b16 %v122
    %v713 = vunpack.c.l.b16 %v123
    %v714 = vunpack.c.h.b16 %v123
    %v715 = vunpack.c.l.b16 %v124
    %v716 = vunpack.c.h.b16 %v124
    %v717 = vunpack.c.l.b16 %v125
    %v718 = vunpack.c.h.b16 %v125
    %v719 = vunpack.c.l.b16 %v126
    %v720 = vunpack.c.h.b16 %v126
    %v721 = vunpack.c.l.b16 %v127
    %v722 = vunpack.c.h.b16 %v127
    %v723 = vunpack.c.l.b16 %v128
    %v724 = vunpack.c.h.b16 %v128
    %v725 = vunpack.c.l.b16 %v129
    %v726 = vunpack.c.h.b16 %v129
    %v727 = vunpack.c.l.b16 %v130
    %v728 = vunpack.c.h.b16 %v130
    %v729 = vunpack.c.l.b16 %v131
    %v730 = vunpack.c.h.b16 %v131
    %v731 = vunpack.c.l.b16 %v132
    %v732 = vunpack.c.h.b16 %v132
    %v733 = vunpack.c.l.b16 %v133
    %v734 = vunpack.c.h.b16 %v133
    %v735 = vunpack.c.l.b16 %v134
    %v736 = vunpack.c.h.b16 %v134
    %v737 = vunpack.c.l.b16 %v135
    %v738 = vunpack.c.h.b16 %v135
    %v739 = vunpack.c.l.b16 %v136
    %v740 = vunpack.c.h.b16 %v136
    %v741 = vunpack.c.l.b16 %v137
    %v742 = vunpack.c.h.b16 %v137
    %v743 = vunpack.c.l.b16 %v138
    %v744 = vunpack.c.h.b16 %v138
    %v745 = vunpack.c.l.b16 %v139
    %v746 = vunpack.c.h.b16 %v139
    %v747 = vunpack.c.l.b16 %v140
    %v748 = vunpack.c.h.b16 %v140
    %v749 = vunpack.c.l.b16 %v141
    %v750 = vunpack.c.h.b16 %v141
    %v751 = vunpack.c.l.b16 %v142
    %v752 = vunpack.c.h.b16 %v142
    %v753 = vunpack.c.l.b16 %v143
    %v754 = vunpack.c.h.b16 %v143
    %v755 = vunpack.c.l.b16 %v144
    %v756 = vunpack.c.h.b16 %v144
    %v757 = vunpack.c.l.b16 %v145
    %v758 = vunpack.c.h.b16 %v145
    %v759 = vunpack.c.l.b16 %v146
    %v760 = vunpack.c.h.b16 %v146
    %v761 = vunpack.c.l.b16 %v147
    %v762 = vunpack.c.h.b16 %v147
    %v763 = vunpack.c.l.b16 %v148
    %v764 = vunpack.c.h.b16 %v148
    %v765 = vunpack.c.l.b16 %v149
    %v766 = vunpack.c.h.b16 %v149
    %v767 = vunpack.c.l.b16 %v150
    %v768 = vunpack.c.h.b16 %v150
    %v769 = vunpack.c.l.b16 %v151
    %v770 = vunpack.c.h.b16 %v151
    %v771 = vunpack.c.l.b16 %v152
    %v772 = vunpack.c.h.b16 %v152
    %v773 = vunpack.c.l.b16 %v153
    %v774 = vunpack.c.h.b16 %v153
    %v775 = vunpack.c.l.b16 %v154
    %v776 = vunpack.c.h.b16 %v154
    %v777 = vunpack.c.l.b16 %v155
    %v778 = vunpack.c.h.b16 %v155
    %v779 = vunpack.c.l.b16 %v156
    %v780 = vunpack.c.h.b16 %v156
    %v781 = vunpack.c.l.b16 %v157
    %v782 = vunpack.c.h.b16 %v157
    %v783 = vunpack.c.l.b16 %v158
    %v784 = vunpack.c.h.b16 %v158
    %v785 = vunpack.c.l.b16 %v159
    %v786 = vunpack.c.h.b16 %v159
    %v787 = vunpack.c.l.b16 %v160
    %v788 = vunpack.c.h.b16 %v160
    %v789 = vunpack.c.l.b16 %v161
    %v790 = vunpack.c.h.b16 %v161
    %v791 = vunpack.c.l.b16 %v162
    %v792 = vunpack.c.h.b16 %v162
    %v793 = vunpack.c.l.b16 %v163
    %v794 = vunpack.c.h.b16 %v163
    %v795 = vunpack.c.l.b16 %v164
    %v796 = vunpack.c.h.b16 %v164
    %v797 = vunpack.c.l.b16 %v165
    %v798 = vunpack.c.h.b16 %v165
    %v799 = vunpack.c.l.b16 %v166
    %v800 = vunpack.c.h.b16 %v166
    %v801 = vunpack.c.l.b16 %v167
    %v802 = vunpack.c.h.b16 %v167
    %v803 = vunpack.c.l.b16 %v168
    %v804 = vunpack.c.h.b16 %v168
    %v805 = vunpack.c.l.b16 %v169
    %v806 = vunpack.c.h.b16 %v169
    %v807 = vunpack.c.l.b16 %v170
    %v808 = vunpack.c.h.b16 %v170
    %v809 = vunpack.c.l.b16 %v171
    %v810 = vunpack.c.h.b16 %v171
    %v811 = vunpack.c.l.b16 %v172
    %v812 = vunpack.c.h.b16 %v172
    %v813 = vunpack.c.l.b16 %v173
    %v814 = vunpack.c.h.b16 %v173
    %v815 = vunpack.c.l.b16 %v174
    %v816 = vunpack.c.h.b16 %v174
    %v817 = vunpack.c.l.b16 %v175
    %v818 = vunpack.c.h.b16 %v175
    %v819 = vunpack.c.l.b16 %v176
    %v820 = vunpack.c.h.b16 %v176
    %v821 = vunpack.c.l.b16 %v177
    %v822 = vunpack.c.h.b16 %v177
    %v823 = vunpack.c.l.b16 %v178
    %v824 = vunpack.c.h.b16 %v178
    %v825 = vunpack.c.l.b16 %v179
    %v826 = vunpack.c.h.b16 %v179
    %v827 = vunpack.c.l.b16 %v180
    %v828 = vunpack.c.h.b16 %v180
    %v829 = vunpack.c.l.b16 %v181
    %v830 = vunpack.c.h.b16 %v181
    %v831 = vunpack.c.l.b16 %v182
    %v832 = vunpack.c.h.b16 %v182
    %v833 = vunpack.c.l.b16 %v183
    %v834 = vunpack.c.h.b16 %v183
    %v835 = vunpack.c.l.b16 %v184
    %v836 = vunpack.c.h.b16 %v184
    %v837 = vunpack.c.l.b16 %v185
    %v838 = vunpack.c.h.b16 %v185
    %v839 = vunpack.c.l.b16 %v186
    %v840 = vunpack.c.h.b16 %v186
    %v841 = vunpack.c.l.b16 %v187
    %v842 = vunpack.c.h.b16 %v187
    %v843 = vunpack.c.l.b16 %v188
    %v844 = vunpack.c.h.b16 %v188
    %v845 = vunpack.c.l.b16 %v189
    %v846 = vunpack.c.h.b16 %v189
    %v847 = vunpack.c.l.b16 %v190
    %v848 = vunpack.c.h.b16 %v190
    %v849 = vunpack.c.l.b16 %v191
    %v850 = vunpack.c.h.b16 %v191
    %v851 = vunpack.c.l.b16 %v192
    %v852 = vunpack.c.h.b16 %v192
    %v853 = vunpack.c.l.b16 %v193
    %v854 = vunpack.c.h.b16 %v193
    %v855 = vunpack.c.l.b16 %v194
    %v856 = vunpack.c.h.b16 %v194
    %v857 = vunpack.c.l.b16 %v195
    %v858 = vunpack.c.h.b16 %v195
    %v859 = vunpack.c.l.b16 %v196
    %v860 = vunpack.c.h.b16 %v196
    %v861 = vunpack.c.l.b16 %v197
    %v862 = vunpack.c.h.b16 %v197
    %v863 = vunpack.c.l.b16 %v198
    %v864 = vunpack.c.h.b16 %v198
    %v865 = vunpack.c.l.b16 %v199
    %v866 = vunpack.c.h.b16 %v199
    %v867 = vunpack.c.l.b16 %v200
    %v868 = vunpack.c.h.b16 %v200
    %v869 = vunpack.c.l.b16 %v201
    %v870 = vunpack.c.h.b16 %v201
    %v871 = vunpack.c.l.b16 %v202
    %v872 = vunpack.c.h.b16 %v202
    %v873 = vunpack.c.l.b16 %v203
    %v874 = vunpack.c.h.b16 %v203
    %v875 = vunpack.c.l.b16 %v204
    %v876 = vunpack.c.h.b16 %v204
    %v877 = vunpack.c.l.b16 %v205
    %v878 = vunpack.c.h.b16 %v205
    %v879 = vunpack.c.l.b16 %v206
    %v880 = vunpack.c.h.b16 %v206
    %v881 = vunpack.c.l.b16 %v207
    %v882 = vunpack.c.h.b16 %v207
    %v883 = vunpack.c.l.b16 %v208
    %v884 = vunpack.c.h.b16 %v208
    %v885 = vunpack.c.l.b16 %v209
    %v886 = vunpack.c.h.b16 %v209
    %v887 = vunpack.c.l.b16 %v210
    %v888 = vunpack.c.h.b16 %v210
    %v889 = vunpack.c.l.b16 %v211
    %v890 = vunpack.c.h.b16 %v211
    %v891 = vunpack.c.l.b16 %v212
    %v892 = vunpack.c.h.b16 %v212
    %v893 = vunpack.c.l.b16 %v213
    %v894 = vunpack.c.h.b16 %v213
    %v895 = vunpack.c.l.b16 %v214
    %v896 = vunpack.c.h.b16 %v214
    %v897 = vunpack.c.l.b16 %v215
    %v898 = vunpack.c.h.b16 %v215
    %v899 = vunpack.c.l.b16 %v216
    %v900 = vunpack.c.h.b16 %v216
    %v901 = vunpack.c.l.b16 %v217
    %v902 = vunpack.c.h.b16 %v217
    %v903 = vunpack.c.l.b16 %v218
    %v904 = vunpack.c.h.b16 %v218
    %v905 = vunpack.c.l.b16 %v219
    %v906 = vunpack.c.h.b16 %v219
    %v907 = vunpack.c.l.b16 %v220
    %v908 = vunpack.c.h.b16 %v220
    %v909 = vunpack.c.l.b16 %v221
    %v910 = vunpack.c.h.b16 %v221
    %v911 = vunpack.c.l.b16 %v222
    %v912 = vunpack.c.h.b16 %v222
    %v913 = vunpack.c.l.b16 %v223
    %v914 = vunpack.c.h.b16 %v223
    %v915 = vunpack.c.l.b16 %v224
    %v916 = vunpack.c.h.b16 %v224
    %v917 = vunpack.c.l.b16 %v225
    %v918 = vunpack.c.h.b16 %v225
    %v919 = vunpack.c.l.b16 %v226
    %v920 = vunpack.c.h.b16 %v226
    %v921 = vunpack.c.l.b16 %v227
    %v922 = vunpack.c.h.b16 %v227
    %v923 = vunpack.c.l.b16 %v228
    %v924 = vunpack.c.h.b16 %v228
    %v925 = vunpack.c.l.b16 %v229
    %v926 = vunpack.c.h.b16 %v229
    %v927 = vunpack.c.l.b16 %v230
    %v928 = vunpack.c.h.b16 %v230
    %v929 = vunpack.c.l.b16 %v231
    %v930 = vunpack.c.h.b16 %v231
    %v931 = vunpack.c.l.b16 %v232
    %v932 = vunpack.c.h.b16 %v232
    %v933 = vunpack.c.l.b16 %v233
    %v934 = vunpack.c.h.b16 %v233
    %v935 = vunpack.c.l.b16 %v234
    %v936 = vunpack.c.h.b16 %v234
    %v937 = vunpack.c.l.b16 %v235
    %v938 = vunpack.c.h.b16 %v235
    %v939 = vunpack.c.l.b16 %v236
    %v940 = vunpack.c.h.b16 %v236
    %v941 = vunpack.c.l.b16 %v237
    %v942 = vunpack.c.h.b16 %v237
    %v943 = vunpack.c.l.b16 %v238
    %v944 = vunpack.c.h.b16 %v238
    %v945 = vunpack.c.l.b16 %v239
    %v946 = vunpack.c.h.b16 %v239
    %v947 = vunpack.c.l.b16 %v240
    %v948 = vunpack.c.h.b16 %v240
    %v949 = vunpack.c.l.b16 %v241
    %v950 = vunpack.c.h.b16 %v241
    %v951 = vunpack.c.l.b16 %v242
    %v952 = vunpack.c.h.b16 %v242
    %v953 = vunpack.c.l.b16 %v243
    %v954 = vunpack.c.h.b16 %v243
    %v955 = vunpack.c.l.b16 %v244
    %v956 = vunpack.c.h.b16 %v244
    %v957 = vunpack.c.l.b16 %v245
    %v958 = vunpack.c.h.b16 %v245
    %v959 = vunpack.c.l.b16 %v246
    %v960 = vunpack.c.h.b16 %v246
    %v961 = vunpack.c.l.b16 %v247
    %v962 = vunpack.c.h.b16 %v247
    %v963 = vunpack.c.l.b16 %v248
    %v964 = vunpack.c.h.b16 %v248
    %v965 = vunpack.c.l.b16 %v249
    %v966 = vunpack.c.h.b16 %v249
    %v967 = vunpack.c.l.b16 %v250
    %v968 = vunpack.c.h.b16 %v250
    %v969 = vunpack.c.l.b16 %v251
    %v970 = vunpack.c.h.b16 %v251
    %v971 = vunpack.c.l.b16 %v252
    %v972 = vunpack.c.h.b16 %v252
    %v973 = vunpack.c.l.b16 %v253
    %v974 = vunpack.c.h.b16 %v253
    %v975 = vunpack.c.l.b16 %v254
    %v976 = vunpack.c.h.b16 %v254
    %v977 = vunpack.c.l.b16 %v255
    %v978 = vunpack.c.h.b16 %v255
    %v979 = vunpack.c.l.b16 %v256
    %v980 = vunpack.c.h.b16 %v256
    %v981 = vunpack.c.l.b16 %v257
    %v982 = vunpack.c.h.b16 %v257
    %v983 = vunpack.c.l.b16 %v258
    %v984 = vunpack.c.h.b16 %v258
    %v985 = vunpack.c.l.b16 %v259
    %v986 = vunpack.c.h.b16 %v259
    %v987 = vunpack.c.l.b16 %v260
    %v988 = vunpack.c.h.b16 %v260
    %v989 = vunpack.c.l.b16 %v261
    %v990 = vunpack.c.h.b16 %v261
    %v991 = vunpack.c.l.b16 %v262
    %v992 = vunpack.c.h.b16 %v262
    %v993 = vunpack.c.l.b16 %v263
    %v994 = vunpack.c.h.b16 %v263
    %v995 = vunpack.c.l.b16 %v264
    %v996 = vunpack.c.h.b16 %v264
    %v997 = vunpack.c.l.b16 %v265
    %v998 = vunpack.c.h.b16 %v265
    %v999 = vunpack.c.l.b16 %v266
    %v1000 = vunpack.c.h.b16 %v266
    %v1001 = vunpack.c.l.b16 %v267
    %v1002 = vunpack.c.h.b16 %v267
    %v1003 = vunpack.c.l.b16 %v268
    %v1004 = vunpack.c.h.b16 %v268
    %v1005 = vunpack.c.l.b16 %v269
    %v1006 = vunpack.c.h.b16 %v269
    %v1007 = vunpack.c.l.b16 %v270
    %v1008 = vunpack.c.h.b16 %v270
    %v1009 = vunpack.c.l.b16 %v271
    %v1010 = vunpack.c.h.b16 %v271
    %v1011 = vunpack.c.l.b16 %v272
    %v1012 = vunpack.c.h.b16 %v272
    %v1013 = vunpack.c.l.b16 %v273
    %v1014 = vunpack.c.h.b16 %v273
    %v1015 = vunpack.c.l.b16 %v274
    %v1016 = vunpack.c.h.b16 %v274
    %v1017 = vunpack.c.l.b16 %v275
    %v1018 = vunpack.c.h.b16 %v275
    %v1019 = vunpack.c.l.b16 %v276
    %v1020 = vunpack.c.h.b16 %v276
    %v1021 = vunpack.c.l.b16 %v277
    %v1022 = vunpack.c.h.b16 %v277
    %v1023 = vunpack.c.l.b16 %v278
    %v1024 = vunpack.c.h.b16 %v278
    %v1025 = vunpack.c.l.b16 %v279
    %v1026 = vunpack.c.h.b16 %v279
    %v1027 = vunpack.c.l.b16 %v280
    %v1028 = vunpack.c.h.b16 %v280
    %v1029 = vunpack.c.l.b16 %v281
    %v1030 = vunpack.c.h.b16 %v281
    %v1031 = vunpack.c.l.b16 %v282
    %v1032 = vunpack.c.h.b16 %v282
    %v1033 = vunpack.c.l.b16 %v283
    %v1034 = vunpack.c.h.b16 %v283
    %v1035 = vunpack.c.l.b16 %v284
    %v1036 = vunpack.c.h.b16 %v284
    %v1037 = vunpack.c.l.b16 %v285
    %v1038 = vunpack.c.h.b16 %v285
    %v1039 = vunpack.c.l.b16 %v286
    %v1040 = vunpack.c.h.b16 %v286
    %v1041 = vunpack.c.l.b16 %v287
    %v1042 = vunpack.c.h.b16 %v287
    %v1043 = vunpack.c.l.b16 %v288
    %v1044 = vunpack.c.h.b16 %v288
    %v1045 = vunpack.c.l.b16 %v289
    %v1046 = vunpack.c.h.b16 %v289
    %v1047 = vunpack.c.l.b16 %v290
    %v1048 = vunpack.c.h.b16 %v290
    %v1049 = vunpack.c.l.b16 %v291
    %v1050 = vunpack.c.h.b16 %v291
    %v1051 = vunpack.c.l.b16 %v292
    %v1052 = vunpack.c.h.b16 %v292
    %v1053 = vunpack.c.l.b16 %v293
    %v1054 = vunpack.c.h.b16 %v293
    %v1055 = vunpack.c.l.b16 %v294
    %v1056 = vunpack.c.h.b16 %v294
    %v1057 = vunpack.c.l.b16 %v295
    %v1058 = vunpack.c.h.b16 %v295
    %v1059 = vunpack.c.l.b16 %v296
    %v1060 = vunpack.c.h.b16 %v296
    %v1061 = vunpack.c.l.b16 %v297
    %v1062 = vunpack.c.h.b16 %v297
    %v1063 = vunpack.c.l.b16 %v298
    %v1064 = vunpack.c.h.b16 %v298
    %v1065 = vunpack.c.l.b16 %v299
    %v1066 = vunpack.c.h.b16 %v299
    %v1067 = vunpack.c.l.b16 %v300
    %v1068 = vunpack.c.h.b16 %v300
    %v1069 = vunpack.c.l.b16 %v301
    %v1070 = vunpack.c.h.b16 %v301
    %v1071 = vunpack.c.l.b16 %v302
    %v1072 = vunpack.c.h.b16 %v302
    %v1073 = vunpack.c.l.b16 %v303
    %v1074 = vunpack.c.h.b16 %v303
    %v1075 = vunpack.c.l.b16 %v304
    %v1076 = vunpack.c.h.b16 %v304
    %v1077 = vunpack.c.l.b16 %v305
    %v1078 = vunpack.c.h.b16 %v305
    %v1079 = vunpack.c.l.b16 %v306
    %v1080 = vunpack.c.h.b16 %v306
    %v1081 = vunpack.c.l.b16 %v307
    %v1082 = vunpack.c.h.b16 %v307
    %v1083 = vunpack.c.l.b16 %v308
    %v1084 = vunpack.c.h.b16 %v308
    %v1085 = vunpack.c.l.b16 %v309
    %v1086 = vunpack.c.h.b16 %v309
    %v1087 = vunpack.c.l.b16 %v310
    %v1088 = vunpack.c.h.b16 %v310
    %v1089 = vpack.c.b16 %v581, %v577
    %v1090 = vpack.c.b16 %v582, %v578
    %v1091 = vpack.c.b16 %v583, %v579
    %v1092 = vpack.c.b16 %v584, %v580
    %v1093 = vpack.c.b16 %v589, %v585
    %v1094 = vpack.c.b16 %v590, %v586
    %v1095 = vpack.c.b16 %v591, %v587
    %v1096 = vpack.c.b16 %v592, %v588
    %v1097 = vpack.c.b16 %v597, %v593
    %v1098 = vpack.c.b16 %v598, %v594
    %v1099 = vpack.c.b16 %v599, %v595
    %v1100 = vpack.c.b16 %v600, %v596
    %v1101 = vpack.c.b16 %v605, %v601
    %v1102 = vpack.c.b16 %v606, %v602
    %v1103 = vpack.c.b16 %v607, %v603
    %v1104 = vpack.c.b16 %v608, %v604
    %v1105 = vpack.c.b16 %v613, %v609
    %v1106 = vpack.c.b16 %v614, %v610
    %v1107 = vpack.c.b16 %v615, %v611
    %v1108 = vpack.c.b16 %v616, %v612
    %v1109 = vpack.c.b16 %v621, %v617
    %v1110 = vpack.c.b16 %v622, %v618
    %v1111 = vpack.c.b16 %v623, %v619
    %v1112 = vpack.c.b16 %v624, %v620
    %v1113 = vpack.c.b16 %v629, %v625
    %v1114 = vpack.c.b16 %v630, %v626
    %v1115 = vpack.c.b16 %v631, %v627
    %v1116 = vpack.c.b16 %v632, %v628
    %v1117 = vpack.c.b16 %v637, %v633
    %v1118 = vpack.c.b16 %v638, %v634
    %v1119 = vpack.c.b16 %v639, %v635
    %v1120 = vpack.c.b16 %v640, %v636
    %v1121 = vpack.c.b16 %v645, %v641
    %v1122 = vpack.c.b16 %v646, %v642
    %v1123 = vpack.c.b16 %v647, %v643
    %v1124 = vpack.c.b16 %v648, %v644
    %v1125 = vpack.c.b16 %v653, %v649
    %v1126 = vpack.c.b16 %v654, %v650
    %v1127 = vpack.c.b16 %v655, %v651
    %v1128 = vpack.c.b16 %v656, %v652
    %v1129 = vpack.c.b16 %v661, %v657
    %v1130 = vpack.c.b16 %v662, %v658
    %v1131 = vpack.c.b16 %v663, %v659
    %v1132 = vpack.c.b16 %v664, %v660
    %v1133 = vpack.c.b16 %v669, %v665
    %v1134 = vpack.c.b16 %v670, %v666
    %v1135 = vpack.c.b16 %v671, %v667
    %v1136 = vpack.c.b16 %v672, %v668
    %v1137 = vpack.c.b16 %v677, %v673
    %v1138 = vpack.c.b16 %v678, %v674
    %v1139 = vpack.c.b16 %v679, %v675
    %v1140 = vpack.c.b16 %v680, %v676
    %v1141 = vpack.c.b16 %v685, %v681
    %v1142 = vpack.c.b16 %v686, %v682
    %v1143 = vpack.c.b16 %v687, %v683
    %v1144 = vpack.c.b16 %v688, %v684
    %v1145 = vpack.c.b16 %v693, %v689
    %v1146 = vpack.c.b16 %v694, %v690
    %v1147 = vpack.c.b16 %v695, %v691
    %v1148 = vpack.c.b16 %v696, %v692
    %v1149 = vpack.c.b16 %v701, %v697
    %v1150 = vpack.c.b16 %v702, %v698
    %v1151 = vpack.c.b16 %v703, %v699
    %v1152 = vpack.c.b16 %v704, %v700
    %v1153 = vpack.c.b16 %v709, %v705
    %v1154 = vpack.c.b16 %v710, %v706
    %v1155 = vpack.c.b16 %v711, %v707
    %v1156 = vpack.c.b16 %v712, %v708
    %v1157 = vpack.c.b16 %v717, %v713
    %v1158 = vpack.c.b16 %v718, %v714
    %v1159 = vpack.c.b16 %v719, %v715
    %v1160 = vpack.c.b16 %v720, %v716
    %v1161 = vpack.c.b16 %v725, %v721
    %v1162 = vpack.c.b16 %v726, %v722
    %v1163 = vpack.c.b16 %v727, %v723
    %v1164 = vpack.c.b16 %v728, %v724
    %v1165 = vpack.c.b16 %v733, %v729
    %v1166 = vpack.c.b16 %v734, %v730
    %v1167 = vpack.c.b16 %v735, %v731
    %v1168 = vpack.c.b16 %v736, %v732
    %v1169 = vpack.c.b16 %v741, %v737
    %v1170 = vpack.c.b16 %v742, %v738
    %v1171 = vpack.c.b16 %v743, %v739
    %v1172 = vpack.c.b16 %v744, %v740
    %v1173 = vpack.c.b16 %v749, %v745
    %v1174 = vpack.c.b16 %v750, %v746
    %v1175 = vpack.c.b16 %v751, %v747
    %v1176 = vpack.c.b16 %v752, %v748
    %v1177 = vpack.c.b16 %v757, %v753
    %v1178 = vpack.c.b16 %v758, %v754
    %v1179 = vpack.c.b16 %v759, %v755
    %v1180 = vpack.c.b16 %v760, %v756
    %v1181 = vpack.c.b16 %v765, %v761
    %v1182 = vpack.c.b16 %v766, %v762
    %v1183 = vpack.c.b16 %v767, %v763
    %v1184 = vpack.c.b16 %v768, %v764
    %v1185 = vpack.c.b16 %v773, %v769
    %v1186 = vpack.c.b16 %v774, %v770
    %v1187 = vpack.c.b16 %v775, %v771
    %v1188 = vpack.c.b16 %v776, %v772
    %v1189 = vpack.c.b16 %v781, %v777
    %v1190 = vpack.c.b16 %v782, %v778
    %v1191 = vpack.c.b16 %v783, %v779
    %v1192 = vpack.c.b16 %v784, %v780
    %v1193 = vpack.c.b16 %v789, %v785
    %v1194 = vpack.c.b16 %v790, %v786
    %v1195 = vpack.c.b16 %v791, %v787
    %v1196 = vpack.c.b16 %v792, %v788
    %v1197 = vpack.c.b16 %v797, %v793
    %v1198 = vpack.c.b16 %v798, %v794
    %v1199 = vpack.c.b16 %v799, %v795
    %v1200 = vpack.c.b16 %v800, %v796
    %v1201 = vpack.c.b16 %v805, %v801
    %v1202 = vpack.c.b16 %v806, %v802
    %v1203 = vpack.c.b16 %v807, %v803
    %v1204 = vpack.c.b16 %v808, %v804
    %v1205 = vpack.c.b16 %v813, %v809
    %v1206 = vpack.c.b16 %v814, %v810
    %v1207 = vpack.c.b16 %v815, %v811
    %v1208 = vpack.c.b16 %v816, %v812
    %v1209 = vpack.c.b16 %v821, %v817
    %v1210 = vpack.c.b16 %v822, %v818
    %v1211 = vpack.c.b16 %v823, %v819
    %v1212 = vpack.c.b16 %v824, %v820
    %v1213 = vpack.c.b16 %v829, %v825
    %v1214 = vpack.c.b16 %v830, %v826
    %v1215 = vpack.c.b16 %v831, %v827
    %v1216 = vpack.c.b16 %v832, %v828
    %v1217 = vpack.c.b16 %v837, %v833
    %v1218 = vpack.c.b16 %v838, %v834
    %v1219 = vpack.c.b16 %v839, %v835
    %v1220 = vpack.c.b16 %v840, %v836
    %v1221 = vpack.c.b16 %v845, %v841
    %v1222 = vpack.c.b16 %v846, %v842
    %v1223 = vpack.c.b16 %v847, %v843
    %v1224 = vpack.c.b16 %v848, %v844
    %v1225 = vpack.c.b16 %v853, %v849
    %v1226 = vpack.c.b16 %v854, %v850
    %v1227 = vpack.c.b16 %v855, %v851
    %v1228 = vpack.c.b16 %v856, %v852
    %v1229 = vpack.c.b16 %v861, %v857
    %v1230 = vpack.c.b16 %v862, %v858
    %v1231 = vpack.c.b16 %v863, %v859
    %v1232 = vpack.c.b16 %v864, %v860
    %v1233 = vpack.c.b16 %v869, %v865
    %v1234 = vpack.c.b16 %v870, %v866
    %v1235 = vpack.c.b16 %v871, %v867
    %v1236 = vpack.c.b16 %v872, %v868
    %v1237 = vpack.c.b16 %v877, %v873
    %v1238 = vpack.c.b16 %v878, %v874
    %v1239 = vpack.c.b16 %v879, %v875
    %v1240 = vpack.c.b16 %v880, %v876
    %v1241 = vpack.c.b16 %v885, %v881
    %v1242 = vpack.c.b16 %v886, %v882
    %v1243 = vpack.c.b16 %v887, %v883
    %v1244 = vpack.c.b16 %v888, %v884
    %v1245 = vpack.c.b16 %v893, %v889
    %v1246 = vpack.c.b16 %v894, %v890
    %v1247 = vpack.c.b16 %v895, %v891
    %v1248 = vpack.c.b16 %v896, %v892
    %v1249 = vpack.c.b16 %v901, %v897
    %v1250 = vpack.c.b16 %v902, %v898
    %v1251 = vpack.c.b16 %v903, %v899
    %v1252 = vpack.c.b16 %v904, %v900
    %v1253 = vpack.c.b16 %v909, %v905
    %v1254 = vpack.c.b16 %v910, %v906
    %v1255 = vpack.c.b16 %v911, %v907
    %v1256 = vpack.c.b16 %v912, %v908
    %v1257 = vpack.c.b16 %v917, %v913
    %v1258 = vpack.c.b16 %v918, %v914
    %v1259 = vpack.c.b16 %v919, %v915
    %v1260 = vpack.c.b16 %v920, %v916
    %v1261 = vpack.c.b16 %v925, %v921
    %v1262 = vpack.c.b16 %v926, %v922
    %v1263 = vpack.c.b16 %v927, %v923
    %v1264 = vpack.c.b16 %v928, %v924
    %v1265 = vpack.c.b16 %v933, %v929
    %v1266 = vpack.c.b16 %v934, %v930
    %v1267 = vpack.c.b16 %v935, %v931
    %v1268 = vpack.c.b16 %v936, %v932
    %v1269 = vpack.c.b16 %v941, %v937
    %v1270 = vpack.c.b16 %v942, %v938
    %v1271 = vpack.c.b16 %v943, %v939
    %v1272 = vpack.c.b16 %v944, %v940
    %v1273 = vpack.c.b16 %v949, %v945
    %v1274 = vpack.c.b16 %v950, %v946
    %v1275 = vpack.c.b16 %v951, %v947
    %v1276 = vpack.c.b16 %v952, %v948
    %v1277 = vpack.c.b16 %v957, %v953
    %v1278 = vpack.c.b16 %v958, %v954
    %v1279 = vpack.c.b16 %v959, %v955
    %v1280 = vpack.c.b16 %v960, %v956
    %v1281 = vpack.c.b16 %v965, %v961
    %v1282 = vpack.c.b16 %v966, %v962
    %v1283 = vpack.c.b16 %v967, %v963
    %v1284 = vpack.c.b16 %v968, %v964
    %v1285 = vpack.c.b16 %v973, %v969
    %v1286 = vpack.c.b16 %v974, %v970
    %v1287 = vpack.c.b16 %v975, %v971
    %v1288 = vpack.c.b16 %v976, %v972
    %v1289 = vpack.c.b16 %v981, %v977
    %v1290 = vpack.c.b16 %v982, %v978
    %v1291 = vpack.c.b16 %v983, %v979
    %v1292 = vpack.c.b16 %v984, %v980
    %v1293 = vpack.c.b16 %v989, %v985
    %v1294 = vpack.c.b16 %v990, %v986
    %v1295 = vpack.c.b16 %v991, %v987
    %v1296 = vpack.c.b16 %v992, %v988
    %v1297 = vpack.c.b16 %v997, %v993
    %v1298 = vpack.c.b16 %v998, %v994
    %v1299 = vpack.c.b16 %v999, %v995
    %v1300 = vpack.c.b16 %v1000, %v996
    %v1301 = vpack.c.b16 %v1005, %v1001
    %v1302 = vpack.c.b16 %v1006, %v1002
    %v1303 = vpack.c.b16 %v1007, %v1003
    %v1304 = vpack.c.b16 %v1008, %v1004
    %v1305 = vpack.c.b16 %v1013, %v1009
    %v1306 = vpack.c.b16 %v1014, %v1010
    %v1307 = vpack.c.b16 %v1015, %v1011
    %v1308 = vpack.c.b16 %v1016, %v1012
    %v1309 = vpack.c.b16 %v1021, %v1017
    %v1310 = vpack.c.b16 %v1022, %v1018
    %v1311 = vpack.c.b16 %v1023, %v1019
    %v1312 = vpack.c.b16 %v1024, %v1020
    %v1313 = vpack.c.b16 %v1029, %v1025
    %v1314 = vpack.c.b16 %v1030, %v1026
    %v1315 = vpack.c.b16 %v1031, %v1027
    %v1316 = vpack.c.b16 %v1032, %v1028
    %v1317 = vpack.c.b16 %v1037, %v1033
    %v1318 = vpack.c.b16 %v1038, %v1034
    %v1319 = vpack.c.b16 %v1039, %v1035
    %v1320 = vpack.c.b16 %v1040, %v1036
    %v1321 = vpack.c.b16 %v1045, %v1041
    %v1322 = vpack.c.b16 %v1046, %v1042
    %v1323 = vpack.c.b16 %v1047, %v1043
    %v1324 = vpack.c.b16 %v1048, %v1044
    %v1325 = vpack.c.b16 %v1053, %v1049
    %v1326 = vpack.c.b16 %v1054, %v1050
    %v1327 = vpack.c.b16 %v1055, %v1051
    %v1328 = vpack.c.b16 %v1056, %v1052
    %v1329 = vpack.c.b16 %v1061, %v1057
    %v1330 = vpack.c.b16 %v1062, %v1058
    %v1331 = vpack.c.b16 %v1063, %v1059
    %v1332 = vpack.c.b16 %v1064, %v1060
    %v1333 = vpack.c.b16 %v1069, %v1065
    %v1334 = vpack.c.b16 %v1070, %v1066
    %v1335 = vpack.c.b16 %v1071, %v1067
    %v1336 = vpack.c.b16 %v1072, %v1068
    %v1337 = vpack.c.b16 %v1077, %v1073
    %v1338 = vpack.c.b16 %v1078, %v1074
    %v1339 = vpack.c.b16 %v1079, %v1075
    %v1340 = vpack.c.b16 %v1080, %v1076
    %v1341 = vpack.c.b16 %v1085, %v1081
    %v1342 = vpack.c.b16 %v1086, %v1082
    %v1343 = vpack.c.b16 %v1087, %v1083
    %v1344 = vpack.c.b16 %v1088, %v1084
    %1601 = vmatpush.bf16.msra.mxu0 %v1117
    %1602 = vmatpush.bf16.msra.mxu0 %v1113
    %1603 = vmatpush.bf16.msra.mxu0 %v1109
    %1604 = vmatpush.bf16.msra.mxu0 %v1105
    %1605 = vmatpush.bf16.msra.mxu0 %v1101
    %1606 = vmatpush.bf16.msra.mxu0 %v1097
    %1607 = vmatpush.bf16.msra.mxu0 %v1093
    %1608 = vmatpush.bf16.msra.mxu0 %v1089
    %1609 = vmatmul.bf16.gmra.mxu0 %v47
    %v1610 = vpop.f32.mrf.mxu0
    %v1611 = vadd.f32 %v313, %v1610
    %v1612 = vpop.f32.mrf.mxu0
    %1613 = vdwg.mxu0
    %1614 = vmatpush.bf16.msra.mxu0 %v1149
    %1615 = vmatpush.bf16.msra.mxu0 %v1145
    %1616 = vmatpush.bf16.msra.mxu0 %v1141
    %1617 = vmatpush.bf16.msra.mxu0 %v1137
    %1618 = vmatpush.bf16.msra.mxu0 %v1133
    %1619 = vmatpush.bf16.msra.mxu0 %v1129
    %1620 = vmatpush.bf16.msra.mxu0 %v1125
    %1621 = vmatpush.bf16.msra.mxu0 %v1121
    %1622 = vmatmul.bf16.gmra.mxu0 %v48
    %v1623 = vpop.f32.mrf.mxu0
    %v1624 = vadd.f32 %v1611, %v1623
    %v1625 = vpop.f32.mrf.mxu0
    %1626 = vdwg.mxu0
    %1627 = vmatpush.bf16.msra.mxu0 %v1181
    %1628 = vmatpush.bf16.msra.mxu0 %v1177
    %1629 = vmatpush.bf16.msra.mxu0 %v1173
    %1630 = vmatpush.bf16.msra.mxu0 %v1169
    %1631 = vmatpush.bf16.msra.mxu0 %v1165
    %1632 = vmatpush.bf16.msra.mxu0 %v1161
    %1633 = vmatpush.bf16.msra.mxu0 %v1157
    %1634 = vmatpush.bf16.msra.mxu0 %v1153
    %1635 = vmatmul.bf16.gmra.mxu0 %v49
    %v1636 = vpop.f32.mrf.mxu0
    %v1637 = vadd.f32 %v1624, %v1636
    %v1638 = vpop.f32.mrf.mxu0
    %1639 = vdwg.mxu0
    %1640 = vmatpush.bf16.msra.mxu0 %v1213
    %1641 = vmatpush.bf16.msra.mxu0 %v1209
    %1642 = vmatpush.bf16.msra.mxu0 %v1205
    %1643 = vmatpush.bf16.msra.mxu0 %v1201
    %1644 = vmatpush.bf16.msra.mxu0 %v1197
    %1645 = vmatpush.bf16.msra.mxu0 %v1193
    %1646 = vmatpush.bf16.msra.mxu0 %v1189
    %1647 = vmatpush.bf16.msra.mxu0 %v1185
    %1648 = vmatmul.bf16.gmra.mxu0 %v50
    %v1649 = vpop.f32.mrf.mxu0
    %v1650 = vadd.f32 %v1637, %v1649
    %v1651 = vpop.f32.mrf.mxu0
    %1652 = vdwg.mxu0
    %1653 = vmatpush.bf16.msra.mxu0 %v1245
    %1654 = vmatpush.bf16.msra.mxu0 %v1241
    %1655 = vmatpush.bf16.msra.mxu0 %v1237
    %1656 = vmatpush.bf16.msra.mxu0 %v1233
    %1657 = vmatpush.bf16.msra.mxu0 %v1229
    %1658 = vmatpush.bf16.msra.mxu0 %v1225
    %1659 = vmatpush.bf16.msra.mxu0 %v1221
    %1660 = vmatpush.bf16.msra.mxu0 %v1217
    %1661 = vmatmul.bf16.gmra.mxu0 %v51
    %v1662 = vpop.f32.mrf.mxu0
    %v1663 = vadd.f32 %v1650, %v1662
    %v1664 = vpop.f32.mrf.mxu0
    %1665 = vdwg.mxu0
    %1666 = vmatpush.bf16.msra.mxu0 %v1277
    %1667 = vmatpush.bf16.msra.mxu0 %v1273
    %1668 = vmatpush.bf16.msra.mxu0 %v1269
    %1669 = vmatpush.bf16.msra.mxu0 %v1265
    %1670 = vmatpush.bf16.msra.mxu0 %v1261
    %1671 = vmatpush.bf16.msra.mxu0 %v1257
    %1672 = vmatpush.bf16.msra.mxu0 %v1253
    %1673 = vmatpush.bf16.msra.mxu0 %v1249
    %1674 = vmatmul.bf16.gmra.mxu0 %v52
    %v1675 = vpop.f32.mrf.mxu0
    %v1676 = vadd.f32 %v1663, %v1675
    %v1677 = vpop.f32.mrf.mxu0
    %1678 = vdwg.mxu0
    %1679 = vmatpush.bf16.msra.mxu0 %v1309
    %1680 = vmatpush.bf16.msra.mxu0 %v1305
    %1681 = vmatpush.bf16.msra.mxu0 %v1301
    %1682 = vmatpush.bf16.msra.mxu0 %v1297
    %1683 = vmatpush.bf16.msra.mxu0 %v1293
    %1684 = vmatpush.bf16.msra.mxu0 %v1289
    %1685 = vmatpush.bf16.msra.mxu0 %v1285
    %1686 = vmatpush.bf16.msra.mxu0 %v1281
    %1687 = vmatmul.bf16.gmra.mxu0 %v53
    %v1688 = vpop.f32.mrf.mxu0
    %v1689 = vadd.f32 %v1676, %v1688
    %v1690 = vpop.f32.mrf.mxu0
    %1691 = vdwg.mxu0
    %1692 = vmatpush.bf16.msra.mxu0 %v1341
    %1693 = vmatpush.bf16.msra.mxu0 %v1337
    %1694 = vmatpush.bf16.msra.mxu0 %v1333
    %1695 = vmatpush.bf16.msra.mxu0 %v1329
    %1696 = vmatpush.bf16.msra.mxu0 %v1325
    %1697 = vmatpush.bf16.msra.mxu0 %v1321
    %1698 = vmatpush.bf16.msra.mxu0 %v1317
    %1699 = vmatpush.bf16.msra.mxu0 %v1313
    %1700 = vmatmul.bf16.gmra.mxu0 %v54
    %v1701 = vpop.f32.mrf.mxu0
    %v1702 = vadd.f32 %v1689, %v1701
    %v1703 = vpop.f32.mrf.mxu0
    %1704 = vdwg.mxu0
    %1705 = vmatpush.bf16.msra.mxu0 %v1118
    %1706 = vmatpush.bf16.msra.mxu0 %v1114
    %1707 = vmatpush.bf16.msra.mxu0 %v1110
    %1708 = vmatpush.bf16.msra.mxu0 %v1106
    %1709 = vmatpush.bf16.msra.mxu0 %v1102
    %1710 = vmatpush.bf16.msra.mxu0 %v1098
    %1711 = vmatpush.bf16.msra.mxu0 %v1094
    %1712 = vmatpush.bf16.msra.mxu0 %v1090
    %1713 = vmatmul.bf16.gmra.mxu0 %v47
    %v1714 = vpop.f32.mrf.mxu0
    %v1715 = vadd.f32 %v314, %v1714
    %v1716 = vpop.f32.mrf.mxu0
    %1717 = vdwg.mxu0
    %1718 = vmatpush.bf16.msra.mxu0 %v1150
    %1719 = vmatpush.bf16.msra.mxu0 %v1146
    %1720 = vmatpush.bf16.msra.mxu0 %v1142
    %1721 = vmatpush.bf16.msra.mxu0 %v1138
    %1722 = vmatpush.bf16.msra.mxu0 %v1134
    %1723 = vmatpush.bf16.msra.mxu0 %v1130
    %1724 = vmatpush.bf16.msra.mxu0 %v1126
    %1725 = vmatpush.bf16.msra.mxu0 %v1122
    %1726 = vmatmul.bf16.gmra.mxu0 %v48
    %v1727 = vpop.f32.mrf.mxu0
    %v1728 = vadd.f32 %v1715, %v1727
    %v1729 = vpop.f32.mrf.mxu0
    %1730 = vdwg.mxu0
    %1731 = vmatpush.bf16.msra.mxu0 %v1182
    %1732 = vmatpush.bf16.msra.mxu0 %v1178
    %1733 = vmatpush.bf16.msra.mxu0 %v1174
    %1734 = vmatpush.bf16.msra.mxu0 %v1170
    %1735 = vmatpush.bf16.msra.mxu0 %v1166
    %1736 = vmatpush.bf16.msra.mxu0 %v1162
    %1737 = vmatpush.bf16.msra.mxu0 %v1158
    %1738 = vmatpush.bf16.msra.mxu0 %v1154
    %1739 = vmatmul.bf16.gmra.mxu0 %v49
    %v1740 = vpop.f32.mrf.mxu0
    %v1741 = vadd.f32 %v1728, %v1740
    %v1742 = vpop.f32.mrf.mxu0
    %1743 = vdwg.mxu0
    %1744 = vmatpush.bf16.msra.mxu0 %v1214
    %1745 = vmatpush.bf16.msra.mxu0 %v1210
    %1746 = vmatpush.bf16.msra.mxu0 %v1206
    %1747 = vmatpush.bf16.msra.mxu0 %v1202
    %1748 = vmatpush.bf16.msra.mxu0 %v1198
    %1749 = vmatpush.bf16.msra.mxu0 %v1194
    %1750 = vmatpush.bf16.msra.mxu0 %v1190
    %1751 = vmatpush.bf16.msra.mxu0 %v1186
    %1752 = vmatmul.bf16.gmra.mxu0 %v50
    %v1753 = vpop.f32.mrf.mxu0
    %v1754 = vadd.f32 %v1741, %v1753
    %v1755 = vpop.f32.mrf.mxu0
    %1756 = vdwg.mxu0
    %1757 = vmatpush.bf16.msra.mxu0 %v1246
    %1758 = vmatpush.bf16.msra.mxu0 %v1242
    %1759 = vmatpush.bf16.msra.mxu0 %v1238
    %1760 = vmatpush.bf16.msra.mxu0 %v1234
    %1761 = vmatpush.bf16.msra.mxu0 %v1230
    %1762 = vmatpush.bf16.msra.mxu0 %v1226
    %1763 = vmatpush.bf16.msra.mxu0 %v1222
    %1764 = vmatpush.bf16.msra.mxu0 %v1218
    %1765 = vmatmul.bf16.gmra.mxu0 %v51
    %v1766 = vpop.f32.mrf.mxu0
    %v1767 = vadd.f32 %v1754, %v1766
    %v1768 = vpop.f32.mrf.mxu0
    %1769 = vdwg.mxu0
    %1770 = vmatpush.bf16.msra.mxu0 %v1278
    %1771 = vmatpush.bf16.msra.mxu0 %v1274
    %1772 = vmatpush.bf16.msra.mxu0 %v1270
    %1773 = vmatpush.bf16.msra.mxu0 %v1266
    %1774 = vmatpush.bf16.msra.mxu0 %v1262
    %1775 = vmatpush.bf16.msra.mxu0 %v1258
    %1776 = vmatpush.bf16.msra.mxu0 %v1254
    %1777 = vmatpush.bf16.msra.mxu0 %v1250
    %1778 = vmatmul.bf16.gmra.mxu0 %v52
    %v1779 = vpop.f32.mrf.mxu0
    %v1780 = vadd.f32 %v1767, %v1779
    %v1781 = vpop.f32.mrf.mxu0
    %1782 = vdwg.mxu0
    %1783 = vmatpush.bf16.msra.mxu0 %v1310
    %1784 = vmatpush.bf16.msra.mxu0 %v1306
    %1785 = vmatpush.bf16.msra.mxu0 %v1302
    %1786 = vmatpush.bf16.msra.mxu0 %v1298
    %1787 = vmatpush.bf16.msra.mxu0 %v1294
    %1788 = vmatpush.bf16.msra.mxu0 %v1290
    %1789 = vmatpush.bf16.msra.mxu0 %v1286
    %1790 = vmatpush.bf16.msra.mxu0 %v1282
    %1791 = vmatmul.bf16.gmra.mxu0 %v53
    %v1792 = vpop.f32.mrf.mxu0
    %v1793 = vadd.f32 %v1780, %v1792
    %v1794 = vpop.f32.mrf.mxu0
    %1795 = vdwg.mxu0
    %1796 = vmatpush.bf16.msra.mxu0 %v1342
    %1797 = vmatpush.bf16.msra.mxu0 %v1338
    %1798 = vmatpush.bf16.msra.mxu0 %v1334
    %1799 = vmatpush.bf16.msra.mxu0 %v1330
    %1800 = vmatpush.bf16.msra.mxu0 %v1326
    %1801 = vmatpush.bf16.msra.mxu0 %v1322
    %1802 = vmatpush.bf16.msra.mxu0 %v1318
    %1803 = vmatpush.bf16.msra.mxu0 %v1314
    %1804 = vmatmul.bf16.gmra.mxu0 %v54
    %v1805 = vpop.f32.mrf.mxu0
    %v1806 = vadd.f32 %v1793, %v1805
    %v1807 = vpop.f32.mrf.mxu0
    %1808 = vdwg.mxu0
    %1809 = vmatpush.bf16.msra.mxu0 %v1119
    %1810 = vmatpush.bf16.msra.mxu0 %v1115
    %1811 = vmatpush.bf16.msra.mxu0 %v1111
    %1812 = vmatpush.bf16.msra.mxu0 %v1107
    %1813 = vmatpush.bf16.msra.mxu0 %v1103
    %1814 = vmatpush.bf16.msra.mxu0 %v1099
    %1815 = vmatpush.bf16.msra.mxu0 %v1095
    %1816 = vmatpush.bf16.msra.mxu0 %v1091
    %1817 = vmatmul.bf16.gmra.mxu0 %v47
    %v1818 = vpop.f32.mrf.mxu0
    %v1819 = vadd.f32 %v315, %v1818
    %v1820 = vpop.f32.mrf.mxu0
    %1821 = vdwg.mxu0
    %1822 = vmatpush.bf16.msra.mxu0 %v1151
    %1823 = vmatpush.bf16.msra.mxu0 %v1147
    %1824 = vmatpush.bf16.msra.mxu0 %v1143
    %1825 = vmatpush.bf16.msra.mxu0 %v1139
    %1826 = vmatpush.bf16.msra.mxu0 %v1135
    %1827 = vmatpush.bf16.msra.mxu0 %v1131
    %1828 = vmatpush.bf16.msra.mxu0 %v1127
    %1829 = vmatpush.bf16.msra.mxu0 %v1123
    %1830 = vmatmul.bf16.gmra.mxu0 %v48
    %v1831 = vpop.f32.mrf.mxu0
    %v1832 = vadd.f32 %v1819, %v1831
    %v1833 = vpop.f32.mrf.mxu0
    %1834 = vdwg.mxu0
    %1835 = vmatpush.bf16.msra.mxu0 %v1183
    %1836 = vmatpush.bf16.msra.mxu0 %v1179
    %1837 = vmatpush.bf16.msra.mxu0 %v1175
    %1838 = vmatpush.bf16.msra.mxu0 %v1171
    %1839 = vmatpush.bf16.msra.mxu0 %v1167
    %1840 = vmatpush.bf16.msra.mxu0 %v1163
    %1841 = vmatpush.bf16.msra.mxu0 %v1159
    %1842 = vmatpush.bf16.msra.mxu0 %v1155
    %1843 = vmatmul.bf16.gmra.mxu0 %v49
    %v1844 = vpop.f32.mrf.mxu0
    %v1845 = vadd.f32 %v1832, %v1844
    %v1846 = vpop.f32.mrf.mxu0
    %1847 = vdwg.mxu0
    %1848 = vmatpush.bf16.msra.mxu0 %v1215
    %1849 = vmatpush.bf16.msra.mxu0 %v1211
    %1850 = vmatpush.bf16.msra.mxu0 %v1207
    %1851 = vmatpush.bf16.msra.mxu0 %v1203
    %1852 = vmatpush.bf16.msra.mxu0 %v1199
    %1853 = vmatpush.bf16.msra.mxu0 %v1195
    %1854 = vmatpush.bf16.msra.mxu0 %v1191
    %1855 = vmatpush.bf16.msra.mxu0 %v1187
    %1856 = vmatmul.bf16.gmra.mxu0 %v50
    %v1857 = vpop.f32.mrf.mxu0
    %v1858 = vadd.f32 %v1845, %v1857
    %v1859 = vpop.f32.mrf.mxu0
    %1860 = vdwg.mxu0
    %1861 = vmatpush.bf16.msra.mxu0 %v1247
    %1862 = vmatpush.bf16.msra.mxu0 %v1243
    %1863 = vmatpush.bf16.msra.mxu0 %v1239
    %1864 = vmatpush.bf16.msra.mxu0 %v1235
    %1865 = vmatpush.bf16.msra.mxu0 %v1231
    %1866 = vmatpush.bf16.msra.mxu0 %v1227
    %1867 = vmatpush.bf16.msra.mxu0 %v1223
    %1868 = vmatpush.bf16.msra.mxu0 %v1219
    %1869 = vmatmul.bf16.gmra.mxu0 %v51
    %v1870 = vpop.f32.mrf.mxu0
    %v1871 = vadd.f32 %v1858, %v1870
    %v1872 = vpop.f32.mrf.mxu0
    %1873 = vdwg.mxu0
    %1874 = vmatpush.bf16.msra.mxu0 %v1279
    %1875 = vmatpush.bf16.msra.mxu0 %v1275
    %1876 = vmatpush.bf16.msra.mxu0 %v1271
    %1877 = vmatpush.bf16.msra.mxu0 %v1267
    %1878 = vmatpush.bf16.msra.mxu0 %v1263
    %1879 = vmatpush.bf16.msra.mxu0 %v1259
    %1880 = vmatpush.bf16.msra.mxu0 %v1255
    %1881 = vmatpush.bf16.msra.mxu0 %v1251
    %1882 = vmatmul.bf16.gmra.mxu0 %v52
    %v1883 = vpop.f32.mrf.mxu0
    %v1884 = vadd.f32 %v1871, %v1883
    %v1885 = vpop.f32.mrf.mxu0
    %1886 = vdwg.mxu0
    %1887 = vmatpush.bf16.msra.mxu0 %v1311
    %1888 = vmatpush.bf16.msra.mxu0 %v1307
    %1889 = vmatpush.bf16.msra.mxu0 %v1303
    %1890 = vmatpush.bf16.msra.mxu0 %v1299
    %1891 = vmatpush.bf16.msra.mxu0 %v1295
    %1892 = vmatpush.bf16.msra.mxu0 %v1291
    %1893 = vmatpush.bf16.msra.mxu0 %v1287
    %1894 = vmatpush.bf16.msra.mxu0 %v1283
    %1895 = vmatmul.bf16.gmra.mxu0 %v53
    %v1896 = vpop.f32.mrf.mxu0
    %v1897 = vadd.f32 %v1884, %v1896
    %v1898 = vpop.f32.mrf.mxu0
    %1899 = vdwg.mxu0
    %1900 = vmatpush.bf16.msra.mxu0 %v1343
    %1901 = vmatpush.bf16.msra.mxu0 %v1339
    %1902 = vmatpush.bf16.msra.mxu0 %v1335
    %1903 = vmatpush.bf16.msra.mxu0 %v1331
    %1904 = vmatpush.bf16.msra.mxu0 %v1327
    %1905 = vmatpush.bf16.msra.mxu0 %v1323
    %1906 = vmatpush.bf16.msra.mxu0 %v1319
    %1907 = vmatpush.bf16.msra.mxu0 %v1315
    %1908 = vmatmul.bf16.gmra.mxu0 %v54
    %v1909 = vpop.f32.mrf.mxu0
    %v1910 = vadd.f32 %v1897, %v1909
    %v1911 = vpop.f32.mrf.mxu0
    %1912 = vdwg.mxu0
    %1913 = vmatpush.bf16.msra.mxu0 %v1120
    %1914 = vmatpush.bf16.msra.mxu0 %v1116
    %1915 = vmatpush.bf16.msra.mxu0 %v1112
    %1916 = vmatpush.bf16.msra.mxu0 %v1108
    %1917 = vmatpush.bf16.msra.mxu0 %v1104
    %1918 = vmatpush.bf16.msra.mxu0 %v1100
    %1919 = vmatpush.bf16.msra.mxu0 %v1096
    %1920 = vmatpush.bf16.msra.mxu0 %v1092
    %1921 = vmatmul.bf16.gmra.mxu0 %v47
    %v1922 = vpop.f32.mrf.mxu0
    %v1923 = vadd.f32 %v316, %v1922
    %v1924 = vpop.f32.mrf.mxu0
    %1925 = vdwg.mxu0
    %1926 = vmatpush.bf16.msra.mxu0 %v1152
    %1927 = vmatpush.bf16.msra.mxu0 %v1148
    %1928 = vmatpush.bf16.msra.mxu0 %v1144
    %1929 = vmatpush.bf16.msra.mxu0 %v1140
    %1930 = vmatpush.bf16.msra.mxu0 %v1136
    %1931 = vmatpush.bf16.msra.mxu0 %v1132
    %1932 = vmatpush.bf16.msra.mxu0 %v1128
    %1933 = vmatpush.bf16.msra.mxu0 %v1124
    %1934 = vmatmul.bf16.gmra.mxu0 %v48
    %v1935 = vpop.f32.mrf.mxu0
    %v1936 = vadd.f32 %v1923, %v1935
    %v1937 = vpop.f32.mrf.mxu0
    %1938 = vdwg.mxu0
    %1939 = vmatpush.bf16.msra.mxu0 %v1184
    %1940 = vmatpush.bf16.msra.mxu0 %v1180
    %1941 = vmatpush.bf16.msra.mxu0 %v1176
    %1942 = vmatpush.bf16.msra.mxu0 %v1172
    %1943 = vmatpush.bf16.msra.mxu0 %v1168
    %1944 = vmatpush.bf16.msra.mxu0 %v1164
    %1945 = vmatpush.bf16.msra.mxu0 %v1160
    %1946 = vmatpush.bf16.msra.mxu0 %v1156
    %1947 = vmatmul.bf16.gmra.mxu0 %v49
    %v1948 = vpop.f32.mrf.mxu0
    %v1949 = vadd.f32 %v1936, %v1948
    %v1950 = vpop.f32.mrf.mxu0
    %1951 = vdwg.mxu0
    %1952 = vmatpush.bf16.msra.mxu0 %v1216
    %1953 = vmatpush.bf16.msra.mxu0 %v1212
    %1954 = vmatpush.bf16.msra.mxu0 %v1208
    %1955 = vmatpush.bf16.msra.mxu0 %v1204
    %1956 = vmatpush.bf16.msra.mxu0 %v1200
    %1957 = vmatpush.bf16.msra.mxu0 %v1196
    %1958 = vmatpush.bf16.msra.mxu0 %v1192
    %1959 = vmatpush.bf16.msra.mxu0 %v1188
    %1960 = vmatmul.bf16.gmra.mxu0 %v50
    %v1961 = vpop.f32.mrf.mxu0
    %v1962 = vadd.f32 %v1949, %v1961
    %v1963 = vpop.f32.mrf.mxu0
    %1964 = vdwg.mxu0
    %1965 = vmatpush.bf16.msra.mxu0 %v1248
    %1966 = vmatpush.bf16.msra.mxu0 %v1244
    %1967 = vmatpush.bf16.msra.mxu0 %v1240
    %1968 = vmatpush.bf16.msra.mxu0 %v1236
    %1969 = vmatpush.bf16.msra.mxu0 %v1232
    %1970 = vmatpush.bf16.msra.mxu0 %v1228
    %1971 = vmatpush.bf16.msra.mxu0 %v1224
    %1972 = vmatpush.bf16.msra.mxu0 %v1220
    %1973 = vmatmul.bf16.gmra.mxu0 %v51
    %v1974 = vpop.f32.mrf.mxu0
    %v1975 = vadd.f32 %v1962, %v1974
    %v1976 = vpop.f32.mrf.mxu0
    %1977 = vdwg.mxu0
    %1978 = vmatpush.bf16.msra.mxu0 %v1280
    %1979 = vmatpush.bf16.msra.mxu0 %v1276
    %1980 = vmatpush.bf16.msra.mxu0 %v1272
    %1981 = vmatpush.bf16.msra.mxu0 %v1268
    %1982 = vmatpush.bf16.msra.mxu0 %v1264
    %1983 = vmatpush.bf16.msra.mxu0 %v1260
    %1984 = vmatpush.bf16.msra.mxu0 %v1256
    %1985 = vmatpush.bf16.msra.mxu0 %v1252
    %1986 = vmatmul.bf16.gmra.mxu0 %v52
    %v1987 = vpop.f32.mrf.mxu0
    %v1988 = vadd.f32 %v1975, %v1987
    %v1989 = vpop.f32.mrf.mxu0
    %1990 = vdwg.mxu0
    %1991 = vmatpush.bf16.msra.mxu0 %v1312
    %1992 = vmatpush.bf16.msra.mxu0 %v1308
    %1993 = vmatpush.bf16.msra.mxu0 %v1304
    %1994 = vmatpush.bf16.msra.mxu0 %v1300
    %1995 = vmatpush.bf16.msra.mxu0 %v1296
    %1996 = vmatpush.bf16.msra.mxu0 %v1292
    %1997 = vmatpush.bf16.msra.mxu0 %v1288
    %1998 = vmatpush.bf16.msra.mxu0 %v1284
    %1999 = vmatmul.bf16.gmra.mxu0 %v53
    %v2000 = vpop.f32.mrf.mxu0
    %v2001 = vadd.f32 %v1988, %v2000
    %v2002 = vpop.f32.mrf.mxu0
    %2003 = vdwg.mxu0
    %2004 = vmatpush.bf16.msra.mxu0 %v1344
    %2005 = vmatpush.bf16.msra.mxu0 %v1340
    %2006 = vmatpush.bf16.msra.mxu0 %v1336
    %2007 = vmatpush.bf16.msra.mxu0 %v1332
    %2008 = vmatpush.bf16.msra.mxu0 %v1328
    %2009 = vmatpush.bf16.msra.mxu0 %v1324
    %2010 = vmatpush.bf16.msra.mxu0 %v1320
    %2011 = vmatpush.bf16.msra.mxu0 %v1316
    %2012 = vmatmul.bf16.gmra.mxu0 %v54
    %v2013 = vpop.f32.mrf.mxu0
    %v2014 = vadd.f32 %v2001, %v2013
    %v2015 = vpop.f32.mrf.mxu0
    %2016 = vdwg.mxu0
    %v2017 = vsub.f32 0.0, %v1702
    %v2018 = vsub.f32 0.0, %v1806
    %v2019 = vsub.f32 0.0, %v1910
    %v2020 = vsub.f32 0.0, %v2014
    %v2021 = vmul.f32 %v2017, 1.442695
    %v2022 = vpow.pop %v2021
    %v2023 = vmul.f32 %v2018, 1.442695
    %v2024 = vpow.pop %v2023
    %v2025 = vmul.f32 %v2019, 1.442695
    %v2026 = vpow.pop %v2025
    %v2027 = vmul.f32 %v2020, 1.442695
    %v2028 = vpow.pop %v2027
    %v2029 = vadd.f32 %v2022, 1.0
    %v2030 = vadd.f32 %v2024, 1.0
    %v2031 = vadd.f32 %v2026, 1.0
    %v2032 = vadd.f32 %v2028, 1.0
    %v2033 = vrcp.pop %v2029
    %v2034 = vrcp.pop %v2030
    %v2035 = vrcp.pop %v2031
    %v2036 = vrcp.pop %v2032
    %v2041 = vrot.slane %v2034, 6
    %v2042 = vrot.slane %v2035, 4
    %v2043 = vrot.slane %v2036, 2
    %vm2044 = vcmask 1041408
    %v2045 = vsel %vm2044, %v2033, %v2041
    %vm2046 = vcmask 1045508
    %v2047 = vsel %vm2046, %v2042, %v2043
    %vm2048 = vcmask 1043456
    %v2049 = vsel %vm2048, %v2045, %v2047
    %vm2051 = vcmask 1043458
    %vm2052 = vmor %vm2051, %vm2044
    %vm2053 = vmor %vm2046, %vm2052
    %vm2054 = vcmask 949254
    %vm2055 = vmor %vm2054, %vm2053
    %2056 = vst.msk [vmem:[#allocation3] sm:$0xff] %vm2055, %v2049
    %v2057 = vld [vmem:[%s3] sm:$0xf]
    %v2059 = vperm.slane %v2057, 0
    %v2060 = vperm.slane %v2057, 1
    %v2061 = vperm.slane %v2057, 2
    %v2062 = vperm.slane %v2057, 3
    %v2067 = vmul.f32 %v2033, %v2059
    %v2068 = vmul.f32 %v2034, %v2060
    %v2069 = vmul.f32 %v2035, %v2061
    %v2070 = vmul.f32 %v2036, %v2062
    %v2071 = vsel %vm2044, %v2067, 0.0
    %v2072 = vsel %vm2044, %v2068, 0.0
    %v2073 = vadd.f32 %v2071, %v2072
    %v2074 = vsel %vm2044, %v2069, 0.0
    %v2075 = vadd.f32 %v2073, %v2074
    %vm2076 = vcmask 943104
    %v2077 = vsel %vm2076, %v2070, 0.0
    %v2078 = vadd.f32 %v2075, %v2077
    %2079 = vadd.xlane.f32.xlu0 %v2078
    %v2080 = vpop.xlane.xlu0 %2079
    %s2081 = sld [smem:[#allocation2]]
    %v2082 = vstv %s2081
    %v2083 = vadd.f32 %v2080, %v2082
    %v2084 = vsub.f32 0.0, %v2083
    %v2085 = vmul.f32 %v2084, 1.442695
    %v2086 = vpow.pop %v2085
    %v2087 = vadd.f32 %v2086, 1.0
    %v2088 = vrcp.pop %v2087
    %vm2089 = vcmask 1024
    %2090 = vst.msk [vmem:[%s5] sm:$0x3] %vm2089, %v2088
    // Predicated region
    $region22: #{tpu_custom_call.1} parent=1 // pred_check
      _
    $region23: #{tpu_custom_call.1} parent=1 // pred_check_branch
      %2092 = sbr.rel (0) target = $region25
    $region24: #{tpu_custom_call.1} parent=1 // pred_region
      _
    $region25: #{tpu_custom_call.1} parent=1 // pred_fallthru
      _
    // Predicated region
    $region26: #{tpu_custom_call.1} parent=1 // pred_check
      _
    $region27: #{tpu_custom_call.1} parent=1 // pred_check_branch
      %2094 = sbr.rel (0) target = $region29
    $region28: #{tpu_custom_call.1} parent=1 // pred_region
      %2096 = vsyncadd [#allocation4], 0
      %s2098 = sshll.u32 [#allocation3], 4
      %s2099 = int_to_ptr.vmem [resolvable:$true] %s2098
      %s2100 = sshll.u32 %s6, 4
      %s2101 = int_to_ptr.hbm [resolvable:$true] %s2100
      %2103 = dma.vmem_to_hbm [thread:$0]  %s2099, 128, %s2101, [#allocation4]
    $region29: #{tpu_custom_call.1} parent=1 // pred_fallthru
      _
    // Predicated region
    $region30: #{tpu_custom_call.1} parent=1 // pred_check
      _
    $region31: #{tpu_custom_call.1} parent=1 // pred_check_branch
      %2105 = sbr.rel (0) target = $region33
    $region32: #{tpu_custom_call.1} parent=1 // pred_region
      _
    $region33: #{tpu_custom_call.1} parent=1 // pred_fallthru
      _
    // Predicated region
    $region34: #{tpu_custom_call.1} parent=1 // pred_check
      _
    $region35: #{tpu_custom_call.1} parent=1 // pred_check_branch
      %2107 = sbr.rel (0) target = $region37
    $region36: #{tpu_custom_call.1} parent=1 // pred_region
      %2109 = dma.done [#allocation4], 128
    $region37: #{tpu_custom_call.1} parent=1 // pred_fallthru
      _
    %2110 = vsyncpa [#allocation4], 1

</llo_original>
